<compile_context>
chip_gen: v7x
topology: tpu7x:2x2x1
jax: 0.10.0
libtpu: 0.0.40
codegen_flags: <defaults>
</compile_context>

<pallas_src>
import functools

import jax
import jax.numpy as jnp
from jax import lax
from jax.experimental import pallas as pl
from jax.experimental.pallas import tpu as pltpu


def _round_up(x, m):
    return ((x + m - 1) // m) * m


def _cdiv(a, b):
    return (a + b - 1) // b


# Output gate-block order [i | f | o | g], built from torch's [i, f, g, o] rows.
_GATE_SRC = (0, 1, 3, 2)


def _lstm_layer_kernel(x_ref, wih_ref, whh_ref, b_ref, *refs,
                       Tt, BB, Hpad, T_valid, needs_mask, is_last, unroll):
    """One LSTM layer, one (batch-tile, time-chunk) grid step.

    x_ref   : (Tt, BB, Din)    chunk of the layer input sequence (time-major)
    wih_ref : (Din, 4*Hpad)    input->gates weight, gate blocks lane-aligned
    whh_ref : (Hpad, 4*Hpad)   hidden->gates weight
    b_ref   : (1, 4*Hpad)      fused f32 bias (b_ih + b_hh)
    outputs : out_ref (Tt, BB, Hpad) for non-last layers,
              hrelu_ref (BB, Hpad) f32 for the last layer only
    scratch : h_sc, c_sc (BB, Hpad) f32 carried across time chunks,
              xg_sc (Tt, BB, 4*Hpad) f32 chunk-level precomputed input gates
    Gate column layout is [i | f | o | g], each gate Hpad lanes wide.
    """
    if is_last:
        hrelu_ref, h_sc, c_sc, xg_sc = refs
        out_ref = None
    else:
        out_ref, h_sc, c_sc, xg_sc = refs

    chunk = pl.program_id(1)

    @pl.when(chunk == 0)
    def _():
        h_sc[...] = jnp.zeros_like(h_sc)
        c_sc[...] = jnp.zeros_like(c_sc)

    # Hoisted input projection + bias: one large MXU matmul per chunk (bf16 LHS
    # x bf16 weights -> f32 accumulation), instead of one tiny matmul per step.
    din = x_ref.shape[2]
    x2d = x_ref[...].reshape(Tt * BB, din)
    xg = jnp.dot(x2d, wih_ref[...], preferred_element_type=jnp.float32) + b_ref[...]
    xg_sc[...] = xg.reshape(Tt, BB, 4 * Hpad)

    w_hh = whh_ref[...]
    t_base = chunk * Tt
    h3 = 3 * Hpad

    def step(t, carry):
        h_prev = h_sc[...]
        c_prev = c_sc[...]
        gates = xg_sc[t] + jnp.dot(h_prev.astype(w_hh.dtype), w_hh,
                                   preferred_element_type=jnp.float32)
        # One sigmoid over the contiguous [i | f | o] lanes, one tanh for g:
        # fewer EUP pushes per serial timestep.  Slices are lane-aligned.
        sig = jax.nn.sigmoid(gates[:, :h3])
        i_g = sig[:, 0 * Hpad:1 * Hpad]
        f_g = sig[:, 1 * Hpad:2 * Hpad]
        o_g = sig[:, 2 * Hpad:3 * Hpad]
        g_g = jnp.tanh(gates[:, h3:])
        c_new = f_g * c_prev + i_g * g_g
        h_new = o_g * jnp.tanh(c_new)
        if needs_mask:
            valid = (t_base + t) < T_valid
            h_new = jnp.where(valid, h_new, h_prev)
            c_new = jnp.where(valid, c_new, c_prev)
        h_sc[...] = h_new
        c_sc[...] = c_new
        if not is_last:
            out_ref[t] = h_new.astype(out_ref.dtype)
        return carry

    lax.fori_loop(0, Tt, step, 0, unroll=unroll)

    if is_last:
        @pl.when(chunk == pl.num_programs(1) - 1)
        def _():
            hrelu_ref[...] = jnp.maximum(h_sc[...], 0.0).astype(hrelu_ref.dtype)


def _run_lstm_layer(seq, w_ih_p, w_hh_p, b_p, *, T, Tt, BB, is_last,
                    unroll, vmem_limit):
    """seq: (Tpad, Bp, Din) time-major padded sequence.  Returns the next-layer
    sequence (non-last, same dtype as seq) or relu(final h) in f32 (last)."""
    Tpad, Bp, Din = seq.shape
    Hpad = w_hh_p.shape[0]
    nb = Bp // BB
    nc = Tpad // Tt

    kernel = functools.partial(
        _lstm_layer_kernel, Tt=Tt, BB=BB, Hpad=Hpad, T_valid=T,
        needs_mask=(Tpad != T), is_last=is_last, unroll=unroll)

    in_specs = [
        pl.BlockSpec((Tt, BB, Din), lambda b, c: (c, b, 0)),
        pl.BlockSpec((Din, 4 * Hpad), lambda b, c: (0, 0)),
        pl.BlockSpec((Hpad, 4 * Hpad), lambda b, c: (0, 0)),
        pl.BlockSpec((1, 4 * Hpad), lambda b, c: (0, 0)),
    ]
    if is_last:
        out_shape = jax.ShapeDtypeStruct((Bp, Hpad), jnp.float32)
        out_specs = pl.BlockSpec((BB, Hpad), lambda b, c: (b, 0))
    else:
        out_shape = jax.ShapeDtypeStruct((Tpad, Bp, Hpad), seq.dtype)
        out_specs = pl.BlockSpec((Tt, BB, Hpad), lambda b, c: (c, b, 0))

    return pl.pallas_call(
        kernel,
        out_shape=out_shape,
        grid_spec=pltpu.PrefetchScalarGridSpec(
            num_scalar_prefetch=0,
            grid=(nb, nc),
            in_specs=in_specs,
            out_specs=out_specs,
            scratch_shapes=[
                pltpu.VMEM((BB, Hpad), jnp.float32),            # h state
                pltpu.VMEM((BB, Hpad), jnp.float32),            # c state
                pltpu.VMEM((Tt, BB, 4 * Hpad), jnp.float32),    # chunk gates
            ]),
        compiler_params=pltpu.CompilerParams(
            dimension_semantics=("parallel", "arbitrary"),
            vmem_limit_bytes=vmem_limit),
    )(seq, w_ih_p, w_hh_p, b_p)


def make_encoder_params(key, input_size, n_hidden_lstm, n_lstm_layers):
    """Deterministic init mirroring torch.nn.LSTM's U(-1/sqrt(H), 1/sqrt(H))."""
    H = n_hidden_lstm
    bound = 1.0 / (H ** 0.5)
    params = []
    for layer in range(n_lstm_layers):
        d_in = input_size if layer == 0 else H
        key, k1, k2, k3, k4 = jax.random.split(key, 5)
        w_ih = jax.random.uniform(k1, (4 * H, d_in), jnp.float32, -bound, bound)
        w_hh = jax.random.uniform(k2, (4 * H, H), jnp.float32, -bound, bound)
        b_ih = jax.random.uniform(k3, (4 * H,), jnp.float32, -bound, bound)
        b_hh = jax.random.uniform(k4, (4 * H,), jnp.float32, -bound, bound)
        params.append((w_ih, w_hh, b_ih, b_hh))
    return params


def pack_encoder_params(params, n_hidden_lstm, dtype=jnp.bfloat16):
    """One-time repack: transpose, fuse biases, pad H -> Hpad (x128) with
    lane-aligned per-gate blocks in [i|f|o|g] order, pad input features to a
    multiple of 128, cast weights to `dtype` (bf16 = MXU-native). Bias stays f32."""
    H = n_hidden_lstm
    Hpad = _round_up(H, 128)
    packed = []
    for (w_ih, w_hh, b_ih, b_hh) in params:
        d_in = w_ih.shape[1]
        Dpad = _round_up(d_in, 128)
        w_ih_p = jnp.zeros((Dpad, 4 * Hpad), dtype)
        w_hh_p = jnp.zeros((Hpad, 4 * Hpad), dtype)
        b_p = jnp.zeros((1, 4 * Hpad), jnp.float32)
        b_sum = (b_ih + b_hh).astype(jnp.float32)
        for g_out, g_src in enumerate(_GATE_SRC):
            rows = slice(g_src * H, (g_src + 1) * H)
            cols = slice(g_out * Hpad, g_out * Hpad + H)
            w_ih_p = w_ih_p.at[:d_in, cols].set(w_ih[rows, :].T.astype(dtype))
            w_hh_p = w_hh_p.at[:H, cols].set(w_hh[rows, :].T.astype(dtype))
            b_p = b_p.at[0, cols].set(b_sum[rows])
        packed.append((w_ih_p, w_hh_p, b_p))
    return packed


@functools.partial(jax.jit, static_argnames=("n_hidden_lstm",))
def encoder_forward(x, packed_params, n_hidden_lstm):
    """x: (B, T, input_size) -> (B, n_hidden_lstm) == relu(h[-1])."""
    B, T, D = x.shape
    H = n_hidden_lstm
    w_dtype = packed_params[0][0].dtype
    Hpad = packed_params[0][1].shape[0]
    Dpad0 = packed_params[0][0].shape[0]
    elt = jnp.dtype(w_dtype).itemsize

    # ---- batch tiling -------------------------------------------------------
    B8 = _round_up(B, 8)
    if B8 >= 16:
        # At least 2 batch tiles so the "parallel" grid axis can feed both v7x
        # TensorCores / megacore; tile capped at the 256-wide v6e/v7x MXU.
        BB = min(_round_up(_cdiv(B8, 2), 8), 256)
    else:
        BB = B8
    Bp = _round_up(B8, BB)

    # ---- time chunking / VMEM budget (per batch-tile footprint, real dtypes) --
    max_Dpad = max(Dpad0, Hpad)
    bytes_per_t = BB * (2 * max_Dpad * elt       # double-buffered input chunk
                        + 2 * Hpad * elt         # double-buffered output chunk
                        + 4 * Hpad * 4)          # f32 xg scratch
    weight_bytes = 2 * (max_Dpad * 4 * Hpad + Hpad * 4 * Hpad + 4 * Hpad) * elt
    state_bytes = 2 * BB * Hpad * 4 + 2 * BB * Hpad * 4   # h/c + last-layer out
    chunk_budget = (20 << 20) - weight_bytes - state_bytes
    tt_cap = max(8, min(128, (chunk_budget // max(bytes_per_t, 1)) // 8 * 8))
    # Balanced chunks: never pay for up to tt_cap-1 fully-masked timesteps.
    n_chunks = _cdiv(T, tt_cap)
    Tt = _round_up(_cdiv(T, n_chunks), 8)
    Tpad = Tt * n_chunks

    vmem_limit = int(min(
        32 << 20,
        max(16 << 20, weight_bytes + state_bytes + Tt * bytes_per_t + (4 << 20))))

    # Larger batch tiles -> less unroll to avoid vreg spills in the step loop.
    unroll = min(Tt, 8 if BB <= 32 else (4 if BB <= 64 else 2))

    seq = jnp.transpose(x, (1, 0, 2)).astype(w_dtype)            # (T, B, D)
    seq = jnp.pad(seq, ((0, Tpad - T), (0, Bp - B), (0, Dpad0 - D)))

    n_layers = len(packed_params)
    h_relu = None
    for li, (w_ih_p, w_hh_p, b_p) in enumerate(packed_params):
        is_last = (li == n_layers - 1)
        res = _run_lstm_layer(seq, w_ih_p, w_hh_p, b_p,
                              T=T, Tt=Tt, BB=BB, is_last=is_last,
                              unroll=unroll, vmem_limit=vmem_limit)
        if is_last:
            h_relu = res                                         # (Bp, Hpad) f32
        else:
            seq = res                                            # (Tpad, Bp, Hpad)

    # h[-1].reshape(-1, H) followed by relu == h_relu; strip padding.
    return h_relu[:B, :H]


def _reference_forward(x, params):
    """Pure-JAX f32 reference of the same LSTM stack, for the correctness check."""
    seq = jnp.transpose(x, (1, 0, 2)).astype(jnp.float32)  # (T, B, D)
    h_last = None
    for (w_ih, w_hh, b_ih, b_hh) in params:
        H = w_hh.shape[1]
        B = seq.shape[1]
        h = jnp.zeros((B, H), jnp.float32)
        c = jnp.zeros((B, H), jnp.float32)
        outs = []
        for t in range(seq.shape[0]):
            gates = seq[t] @ w_ih.T + h @ w_hh.T + b_ih + b_hh
            i_g = jax.nn.sigmoid(gates[:, 0 * H:1 * H])
            f_g = jax.nn.sigmoid(gates[:, 1 * H:2 * H])
            g_g = jnp.tanh(gates[:, 2 * H:3 * H])
            o_g = jax.nn.sigmoid(gates[:, 3 * H:4 * H])
            c = f_g * c + i_g * g_g
            h = o_g * jnp.tanh(c)
            outs.append(h)
        seq = jnp.stack(outs, axis=0)
        h_last = h
    return jnp.maximum(h_last, 0.0)


if __name__ == "__main__":
    # Small shapes consistent with the module's forward.
    B, T = 2, 8
    input_size = 16
    n_hidden_lstm = 32
    n_lstm_layers = 2

    key = jax.random.PRNGKey(0)
    key, kx = jax.random.split(key)
    x = jax.random.normal(kx, (B, T, input_size), dtype=jnp.float32)

    params = make_encoder_params(key, input_size, n_hidden_lstm, n_lstm_layers)
    ref = _reference_forward(x, params)

    # Exact-precision path (f32 packed weights): tight check vs the reference.
    packed_f32 = pack_encoder_params(params, n_hidden_lstm, dtype=jnp.float32)
    out_f32 = jax.block_until_ready(encoder_forward(x, packed_f32, n_hidden_lstm))
    assert out_f32.shape == (B, n_hidden_lstm), out_f32.shape
    assert jnp.allclose(out_f32, ref, atol=1e-5, rtol=1e-5), "f32 mismatch vs reference"

    # Performance path (bf16 weights + bf16 intermediate sequences): loose check.
    packed_bf16 = pack_encoder_params(params, n_hidden_lstm, dtype=jnp.bfloat16)
    out_bf16 = jax.block_until_ready(encoder_forward(x, packed_bf16, n_hidden_lstm))
    assert out_bf16.shape == (B, n_hidden_lstm), out_bf16.shape
    assert jnp.allclose(out_bf16, ref, atol=5e-2, rtol=5e-2), "bf16 mismatch vs reference"

    print("KERNEL_OK")
</pallas_src>

<mosaic_0001>
module attributes {stable_mosaic.version = 11 : i64} {
  func.func @_lstm_layer_kernel(%arg0: i32, %arg1: i32, %arg2: memref<8x8x128xf32, #tpu.memory_space<vmem>>, %arg3: memref<128x512xf32, #tpu.memory_space<vmem>>, %arg4: memref<128x512xf32, #tpu.memory_space<vmem>>, %arg5: memref<1x512xf32, #tpu.memory_space<vmem>>, %arg6: memref<8x128xf32, #tpu.memory_space<vmem>>, %arg7: memref<8x128xf32, #tpu.memory_space<vmem>>, %arg8: memref<8x128xf32, #tpu.memory_space<vmem>>, %arg9: memref<8x8x512xf32, #tpu.memory_space<vmem>>) attributes {dimension_semantics = [#tpu.dimension_semantics<parallel>, #tpu.dimension_semantics<arbitrary>], iteration_bounds = array<i64: 1, 1>, scalar_prefetch = 0 : i64, scratch_operands = 3 : i64, tpu.core_type = #tpu.core_type<tc>, window_params = [{transform_indices = @transform_0, window_bounds = array<i64: 8, 8, 128>}, {pipeline_mode = #tpu.pipeline_mode<synchronous>, transform_indices = @transform_1, window_bounds = array<i64: 128, 512>}, {pipeline_mode = #tpu.pipeline_mode<synchronous>, transform_indices = @transform_2, window_bounds = array<i64: 128, 512>}, {pipeline_mode = #tpu.pipeline_mode<synchronous>, transform_indices = @transform_3, window_bounds = array<i64: 1, 512>}, {transform_indices = @transform_4, window_bounds = array<i64: 8, 128>}]} {
    %c0_i32 = arith.constant 0 : i32
    %0 = arith.cmpi eq, %arg1, %c0_i32 : i32
    %1 = arith.extui %0 : i1 to i32
    %c0_i32_0 = arith.constant 0 : i32
    %2 = arith.cmpi ne, %1, %c0_i32_0 : i32
    scf.if %2 {
      %cst_111 = arith.constant 0.000000e+00 : f32
      %216 = vector.broadcast %cst_111 : f32 to vector<8x128xf32>
      %c0_112 = arith.constant 0 : index
      %c0_113 = arith.constant 0 : index
      %217 = vector.load %arg7[%c0_112, %c0_113] : memref<8x128xf32, #tpu.memory_space<vmem>>, vector<8x128xf32>
      tpu.vector_store %arg7[%c0_112, %c0_113], %216 {strides = array<i32>} : memref<8x128xf32, #tpu.memory_space<vmem>>, vector<8x128xf32>,
      %cst_114 = arith.constant 0.000000e+00 : f32
      %218 = vector.broadcast %cst_114 : f32 to vector<8x128xf32>
      %c0_115 = arith.constant 0 : index
      %c0_116 = arith.constant 0 : index
      %219 = vector.load %arg8[%c0_115, %c0_116] : memref<8x128xf32, #tpu.memory_space<vmem>>, vector<8x128xf32>
      tpu.vector_store %arg8[%c0_115, %c0_116], %218 {strides = array<i32>} : memref<8x128xf32, #tpu.memory_space<vmem>>, vector<8x128xf32>,
    } else {
    }
    %c0 = arith.constant 0 : index
    %c0_1 = arith.constant 0 : index
    %c0_2 = arith.constant 0 : index
    %3 = vector.load %arg2[%c0, %c0_1, %c0_2] : memref<8x8x128xf32, #tpu.memory_space<vmem>>, vector<8x8x128xf32>
    %4 = vector.shape_cast %3 : vector<8x8x128xf32> to vector<64x128xf32>
    %c0_3 = arith.constant 0 : index
    %c0_4 = arith.constant 0 : index
    %5 = vector.load %arg3[%c0_3, %c0_4] : memref<128x512xf32, #tpu.memory_space<vmem>>, vector<128x512xf32>
    %cst = arith.constant dense<0.000000e+00> : vector<64x512xf32>
    %6 = tpu.matmul %4, %5, %cst {dimension_numbers = #tpu.dot_dimension_numbers<[1], [0], [0], [1], [0, 0, 1, 1], [], []>} : vector<64x128xf32>, vector<128x512xf32>, vector<64x512xf32> -> vector<64x512xf32>
    %c0_5 = arith.constant 0 : index
    %c0_6 = arith.constant 0 : index
    %7 = vector.load %arg5[%c0_5, %c0_6] : memref<1x512xf32, #tpu.memory_space<vmem>>, vector<1x512xf32>
    %8 = vector.broadcast %7 : vector<1x512xf32> to vector<64x512xf32>
    %9 = arith.addf %6, %8 : vector<64x512xf32>
    %10 = vector.shape_cast %9 : vector<64x512xf32> to vector<8x8x512xf32>
    %c0_7 = arith.constant 0 : index
    %c0_8 = arith.constant 0 : index
    %c0_9 = arith.constant 0 : index
    %11 = vector.load %arg9[%c0_7, %c0_8, %c0_9] : memref<8x8x512xf32, #tpu.memory_space<vmem>>, vector<8x8x512xf32>
    tpu.vector_store %arg9[%c0_7, %c0_8, %c0_9], %10 {strides = array<i32>} : memref<8x8x512xf32, #tpu.memory_space<vmem>>, vector<8x8x512xf32>,
    %c0_10 = arith.constant 0 : index
    %c0_11 = arith.constant 0 : index
    %12 = vector.load %arg4[%c0_10, %c0_11] : memref<128x512xf32, #tpu.memory_space<vmem>>, vector<128x512xf32>
    %c0_i32_12 = arith.constant 0 : i32
    %c0_13 = arith.constant 0 : index
    %c0_14 = arith.constant 0 : index
    %13 = vector.load %arg7[%c0_13, %c0_14] : memref<8x128xf32, #tpu.memory_space<vmem>>, vector<8x128xf32>
    %c0_15 = arith.constant 0 : index
    %c0_16 = arith.constant 0 : index
    %14 = vector.load %arg8[%c0_15, %c0_16] : memref<8x128xf32, #tpu.memory_space<vmem>>, vector<8x128xf32>
    %15 = arith.index_cast %c0_i32_12 : i32 to index
    %c0_17 = arith.constant 0 : index
    %c0_18 = arith.constant 0 : index
    %16 = vector.load %arg9[%15, %c0_17, %c0_18] : memref<8x8x512xf32, #tpu.memory_space<vmem>>, vector<1x8x512xf32>
    %17 = vector.shape_cast %16 : vector<1x8x512xf32> to vector<8x512xf32>
    %cst_19 = arith.constant dense<0.000000e+00> : vector<8x512xf32>
    %18 = tpu.matmul %13, %12, %cst_19 {dimension_numbers = #tpu.dot_dimension_numbers<[1], [0], [0], [1], [0, 0, 1, 1], [], []>} : vector<8x128xf32>, vector<128x512xf32>, vector<8x512xf32> -> vector<8x512xf32>
    %19 = arith.addf %17, %18 : vector<8x512xf32>
    %20 = vector.extract_strided_slice %19 {offsets = [0, 0], sizes = [8, 384], strides = [1, 1]} : vector<8x512xf32> to vector<8x384xf32>
    %21 = arith.negf %20 : vector<8x384xf32>
    %22 = math.exp %21 : vector<8x384xf32>
    %cst_20 = arith.constant 1.000000e+00 : f32
    %23 = vector.broadcast %cst_20 : f32 to vector<8x384xf32>
    %24 = arith.addf %23, %22 : vector<8x384xf32>
    %25 = arith.divf %23, %24 : vector<8x384xf32>
    %26 = vector.extract_strided_slice %25 {offsets = [0, 0], sizes = [8, 128], strides = [1, 1]} : vector<8x384xf32> to vector<8x128xf32>
    %27 = vector.extract_strided_slice %25 {offsets = [0, 128], sizes = [8, 128], strides = [1, 1]} : vector<8x384xf32> to vector<8x128xf32>
    %28 = vector.extract_strided_slice %25 {offsets = [0, 256], sizes = [8, 128], strides = [1, 1]} : vector<8x384xf32> to vector<8x128xf32>
    %29 = vector.extract_strided_slice %19 {offsets = [0, 384], sizes = [8, 128], strides = [1, 1]} : vector<8x512xf32> to vector<8x128xf32>
    %30 = math.tanh %29 : vector<8x128xf32>
    %31 = arith.mulf %27, %14 : vector<8x128xf32>
    %32 = arith.mulf %26, %30 : vector<8x128xf32>
    %33 = arith.addf %31, %32 : vector<8x128xf32>
    %34 = math.tanh %33 : vector<8x128xf32>
    %35 = arith.mulf %28, %34 : vector<8x128xf32>
    %c0_21 = arith.constant 0 : index
    %c0_22 = arith.constant 0 : index
    %36 = vector.load %arg7[%c0_21, %c0_22] : memref<8x128xf32, #tpu.memory_space<vmem>>, vector<8x128xf32>
    tpu.vector_store %arg7[%c0_21, %c0_22], %35 {strides = array<i32>} : memref<8x128xf32, #tpu.memory_space<vmem>>, vector<8x128xf32>,
    %c0_23 = arith.constant 0 : index
    %c0_24 = arith.constant 0 : index
    %37 = vector.load %arg8[%c0_23, %c0_24] : memref<8x128xf32, #tpu.memory_space<vmem>>, vector<8x128xf32>
    tpu.vector_store %arg8[%c0_23, %c0_24], %33 {strides = array<i32>} : memref<8x128xf32, #tpu.memory_space<vmem>>, vector<8x128xf32>,
    %c1_i32 = arith.constant 1 : i32
    %c0_25 = arith.constant 0 : index
    %c0_26 = arith.constant 0 : index
    %38 = vector.load %arg7[%c0_25, %c0_26] : memref<8x128xf32, #tpu.memory_space<vmem>>, vector<8x128xf32>
    %c0_27 = arith.constant 0 : index
    %c0_28 = arith.constant 0 : index
    %39 = vector.load %arg8[%c0_27, %c0_28] : memref<8x128xf32, #tpu.memory_space<vmem>>, vector<8x128xf32>
    %40 = arith.index_cast %c1_i32 : i32 to index
    %c0_29 = arith.constant 0 : index
    %c0_30 = arith.constant 0 : index
    %41 = vector.load %arg9[%40, %c0_29, %c0_30] : memref<8x8x512xf32, #tpu.memory_space<vmem>>, vector<1x8x512xf32>
    %42 = vector.shape_cast %41 : vector<1x8x512xf32> to vector<8x512xf32>
    %cst_31 = arith.constant dense<0.000000e+00> : vector<8x512xf32>
    %43 = tpu.matmul %38, %12, %cst_31 {dimension_numbers = #tpu.dot_dimension_numbers<[1], [0], [0], [1], [0, 0, 1, 1], [], []>} : vector<8x128xf32>, vector<128x512xf32>, vector<8x512xf32> -> vector<8x512xf32>
    %44 = arith.addf %42, %43 : vector<8x512xf32>
    %45 = vector.extract_strided_slice %44 {offsets = [0, 0], sizes = [8, 384], strides = [1, 1]} : vector<8x512xf32> to vector<8x384xf32>
    %46 = arith.negf %45 : vector<8x384xf32>
    %47 = math.exp %46 : vector<8x384xf32>
    %cst_32 = arith.constant 1.000000e+00 : f32
    %48 = vector.broadcast %cst_32 : f32 to vector<8x384xf32>
    %49 = arith.addf %48, %47 : vector<8x384xf32>
    %50 = arith.divf %48, %49 : vector<8x384xf32>
    %51 = vector.extract_strided_slice %50 {offsets = [0, 0], sizes = [8, 128], strides = [1, 1]} : vector<8x384xf32> to vector<8x128xf32>
    %52 = vector.extract_strided_slice %50 {offsets = [0, 128], sizes = [8, 128], strides = [1, 1]} : vector<8x384xf32> to vector<8x128xf32>
    %53 = vector.extract_strided_slice %50 {offsets = [0, 256], sizes = [8, 128], strides = [1, 1]} : vector<8x384xf32> to vector<8x128xf32>
    %54 = vector.extract_strided_slice %44 {offsets = [0, 384], sizes = [8, 128], strides = [1, 1]} : vector<8x512xf32> to vector<8x128xf32>
    %55 = math.tanh %54 : vector<8x128xf32>
    %56 = arith.mulf %52, %39 : vector<8x128xf32>
    %57 = arith.mulf %51, %55 : vector<8x128xf32>
    %58 = arith.addf %56, %57 : vector<8x128xf32>
    %59 = math.tanh %58 : vector<8x128xf32>
    %60 = arith.mulf %53, %59 : vector<8x128xf32>
    %c0_33 = arith.constant 0 : index
    %c0_34 = arith.constant 0 : index
    %61 = vector.load %arg7[%c0_33, %c0_34] : memref<8x128xf32, #tpu.memory_space<vmem>>, vector<8x128xf32>
    tpu.vector_store %arg7[%c0_33, %c0_34], %60 {strides = array<i32>} : memref<8x128xf32, #tpu.memory_space<vmem>>, vector<8x128xf32>,
    %c0_35 = arith.constant 0 : index
    %c0_36 = arith.constant 0 : index
    %62 = vector.load %arg8[%c0_35, %c0_36] : memref<8x128xf32, #tpu.memory_space<vmem>>, vector<8x128xf32>
    tpu.vector_store %arg8[%c0_35, %c0_36], %58 {strides = array<i32>} : memref<8x128xf32, #tpu.memory_space<vmem>>, vector<8x128xf32>,
    %c2_i32 = arith.constant 2 : i32
    %c0_37 = arith.constant 0 : index
    %c0_38 = arith.constant 0 : index
    %63 = vector.load %arg7[%c0_37, %c0_38] : memref<8x128xf32, #tpu.memory_space<vmem>>, vector<8x128xf32>
    %c0_39 = arith.constant 0 : index
    %c0_40 = arith.constant 0 : index
    %64 = vector.load %arg8[%c0_39, %c0_40] : memref<8x128xf32, #tpu.memory_space<vmem>>, vector<8x128xf32>
    %65 = arith.index_cast %c2_i32 : i32 to index
    %c0_41 = arith.constant 0 : index
    %c0_42 = arith.constant 0 : index
    %66 = vector.load %arg9[%65, %c0_41, %c0_42] : memref<8x8x512xf32, #tpu.memory_space<vmem>>, vector<1x8x512xf32>
    %67 = vector.shape_cast %66 : vector<1x8x512xf32> to vector<8x512xf32>
    %cst_43 = arith.constant dense<0.000000e+00> : vector<8x512xf32>
    %68 = tpu.matmul %63, %12, %cst_43 {dimension_numbers = #tpu.dot_dimension_numbers<[1], [0], [0], [1], [0, 0, 1, 1], [], []>} : vector<8x128xf32>, vector<128x512xf32>, vector<8x512xf32> -> vector<8x512xf32>
    %69 = arith.addf %67, %68 : vector<8x512xf32>
    %70 = vector.extract_strided_slice %69 {offsets = [0, 0], sizes = [8, 384], strides = [1, 1]} : vector<8x512xf32> to vector<8x384xf32>
    %71 = arith.negf %70 : vector<8x384xf32>
    %72 = math.exp %71 : vector<8x384xf32>
    %cst_44 = arith.constant 1.000000e+00 : f32
    %73 = vector.broadcast %cst_44 : f32 to vector<8x384xf32>
    %74 = arith.addf %73, %72 : vector<8x384xf32>
    %75 = arith.divf %73, %74 : vector<8x384xf32>
    %76 = vector.extract_strided_slice %75 {offsets = [0, 0], sizes = [8, 128], strides = [1, 1]} : vector<8x384xf32> to vector<8x128xf32>
    %77 = vector.extract_strided_slice %75 {offsets = [0, 128], sizes = [8, 128], strides = [1, 1]} : vector<8x384xf32> to vector<8x128xf32>
    %78 = vector.extract_strided_slice %75 {offsets = [0, 256], sizes = [8, 128], strides = [1, 1]} : vector<8x384xf32> to vector<8x128xf32>
    %79 = vector.extract_strided_slice %69 {offsets = [0, 384], sizes = [8, 128], strides = [1, 1]} : vector<8x512xf32> to vector<8x128xf32>
    %80 = math.tanh %79 : vector<8x128xf32>
    %81 = arith.mulf %77, %64 : vector<8x128xf32>
    %82 = arith.mulf %76, %80 : vector<8x128xf32>
    %83 = arith.addf %81, %82 : vector<8x128xf32>
    %84 = math.tanh %83 : vector<8x128xf32>
    %85 = arith.mulf %78, %84 : vector<8x128xf32>
    %c0_45 = arith.constant 0 : index
    %c0_46 = arith.constant 0 : index
    %86 = vector.load %arg7[%c0_45, %c0_46] : memref<8x128xf32, #tpu.memory_space<vmem>>, vector<8x128xf32>
    tpu.vector_store %arg7[%c0_45, %c0_46], %85 {strides = array<i32>} : memref<8x128xf32, #tpu.memory_space<vmem>>, vector<8x128xf32>,
    %c0_47 = arith.constant 0 : index
    %c0_48 = arith.constant 0 : index
    %87 = vector.load %arg8[%c0_47, %c0_48] : memref<8x128xf32, #tpu.memory_space<vmem>>, vector<8x128xf32>
    tpu.vector_store %arg8[%c0_47, %c0_48], %83 {strides = array<i32>} : memref<8x128xf32, #tpu.memory_space<vmem>>, vector<8x128xf32>,
    %c3_i32 = arith.constant 3 : i32
    %c0_49 = arith.constant 0 : index
    %c0_50 = arith.constant 0 : index
    %88 = vector.load %arg7[%c0_49, %c0_50] : memref<8x128xf32, #tpu.memory_space<vmem>>, vector<8x128xf32>
    %c0_51 = arith.constant 0 : index
    %c0_52 = arith.constant 0 : index
    %89 = vector.load %arg8[%c0_51, %c0_52] : memref<8x128xf32, #tpu.memory_space<vmem>>, vector<8x128xf32>
    %90 = arith.index_cast %c3_i32 : i32 to index
    %c0_53 = arith.constant 0 : index
    %c0_54 = arith.constant 0 : index
    %91 = vector.load %arg9[%90, %c0_53, %c0_54] : memref<8x8x512xf32, #tpu.memory_space<vmem>>, vector<1x8x512xf32>
    %92 = vector.shape_cast %91 : vector<1x8x512xf32> to vector<8x512xf32>
    %cst_55 = arith.constant dense<0.000000e+00> : vector<8x512xf32>
    %93 = tpu.matmul %88, %12, %cst_55 {dimension_numbers = #tpu.dot_dimension_numbers<[1], [0], [0], [1], [0, 0, 1, 1], [], []>} : vector<8x128xf32>, vector<128x512xf32>, vector<8x512xf32> -> vector<8x512xf32>
    %94 = arith.addf %92, %93 : vector<8x512xf32>
    %95 = vector.extract_strided_slice %94 {offsets = [0, 0], sizes = [8, 384], strides = [1, 1]} : vector<8x512xf32> to vector<8x384xf32>
    %96 = arith.negf %95 : vector<8x384xf32>
    %97 = math.exp %96 : vector<8x384xf32>
    %cst_56 = arith.constant 1.000000e+00 : f32
    %98 = vector.broadcast %cst_56 : f32 to vector<8x384xf32>
    %99 = arith.addf %98, %97 : vector<8x384xf32>
    %100 = arith.divf %98, %99 : vector<8x384xf32>
    %101 = vector.extract_strided_slice %100 {offsets = [0, 0], sizes = [8, 128], strides = [1, 1]} : vector<8x384xf32> to vector<8x128xf32>
    %102 = vector.extract_strided_slice %100 {offsets = [0, 128], sizes = [8, 128], strides = [1, 1]} : vector<8x384xf32> to vector<8x128xf32>
    %103 = vector.extract_strided_slice %100 {offsets = [0, 256], sizes = [8, 128], strides = [1, 1]} : vector<8x384xf32> to vector<8x128xf32>
    %104 = vector.extract_strided_slice %94 {offsets = [0, 384], sizes = [8, 128], strides = [1, 1]} : vector<8x512xf32> to vector<8x128xf32>
    %105 = math.tanh %104 : vector<8x128xf32>
    %106 = arith.mulf %102, %89 : vector<8x128xf32>
    %107 = arith.mulf %101, %105 : vector<8x128xf32>
    %108 = arith.addf %106, %107 : vector<8x128xf32>
    %109 = math.tanh %108 : vector<8x128xf32>
    %110 = arith.mulf %103, %109 : vector<8x128xf32>
    %c0_57 = arith.constant 0 : index
    %c0_58 = arith.constant 0 : index
    %111 = vector.load %arg7[%c0_57, %c0_58] : memref<8x128xf32, #tpu.memory_space<vmem>>, vector<8x128xf32>
    tpu.vector_store %arg7[%c0_57, %c0_58], %110 {strides = array<i32>} : memref<8x128xf32, #tpu.memory_space<vmem>>, vector<8x128xf32>,
    %c0_59 = arith.constant 0 : index
    %c0_60 = arith.constant 0 : index
    %112 = vector.load %arg8[%c0_59, %c0_60] : memref<8x128xf32, #tpu.memory_space<vmem>>, vector<8x128xf32>
    tpu.vector_store %arg8[%c0_59, %c0_60], %108 {strides = array<i32>} : memref<8x128xf32, #tpu.memory_space<vmem>>, vector<8x128xf32>,
    %c4_i32 = arith.constant 4 : i32
    %c0_61 = arith.constant 0 : index
    %c0_62 = arith.constant 0 : index
    %113 = vector.load %arg7[%c0_61, %c0_62] : memref<8x128xf32, #tpu.memory_space<vmem>>, vector<8x128xf32>
    %c0_63 = arith.constant 0 : index
    %c0_64 = arith.constant 0 : index
    %114 = vector.load %arg8[%c0_63, %c0_64] : memref<8x128xf32, #tpu.memory_space<vmem>>, vector<8x128xf32>
    %115 = arith.index_cast %c4_i32 : i32 to index
    %c0_65 = arith.constant 0 : index
    %c0_66 = arith.constant 0 : index
    %116 = vector.load %arg9[%115, %c0_65, %c0_66] : memref<8x8x512xf32, #tpu.memory_space<vmem>>, vector<1x8x512xf32>
    %117 = vector.shape_cast %116 : vector<1x8x512xf32> to vector<8x512xf32>
    %cst_67 = arith.constant dense<0.000000e+00> : vector<8x512xf32>
    %118 = tpu.matmul %113, %12, %cst_67 {dimension_numbers = #tpu.dot_dimension_numbers<[1], [0], [0], [1], [0, 0, 1, 1], [], []>} : vector<8x128xf32>, vector<128x512xf32>, vector<8x512xf32> -> vector<8x512xf32>
    %119 = arith.addf %117, %118 : vector<8x512xf32>
    %120 = vector.extract_strided_slice %119 {offsets = [0, 0], sizes = [8, 384], strides = [1, 1]} : vector<8x512xf32> to vector<8x384xf32>
    %121 = arith.negf %120 : vector<8x384xf32>
    %122 = math.exp %121 : vector<8x384xf32>
    %cst_68 = arith.constant 1.000000e+00 : f32
    %123 = vector.broadcast %cst_68 : f32 to vector<8x384xf32>
    %124 = arith.addf %123, %122 : vector<8x384xf32>
    %125 = arith.divf %123, %124 : vector<8x384xf32>
    %126 = vector.extract_strided_slice %125 {offsets = [0, 0], sizes = [8, 128], strides = [1, 1]} : vector<8x384xf32> to vector<8x128xf32>
    %127 = vector.extract_strided_slice %125 {offsets = [0, 128], sizes = [8, 128], strides = [1, 1]} : vector<8x384xf32> to vector<8x128xf32>
    %128 = vector.extract_strided_slice %125 {offsets = [0, 256], sizes = [8, 128], strides = [1, 1]} : vector<8x384xf32> to vector<8x128xf32>
    %129 = vector.extract_strided_slice %119 {offsets = [0, 384], sizes = [8, 128], strides = [1, 1]} : vector<8x512xf32> to vector<8x128xf32>
    %130 = math.tanh %129 : vector<8x128xf32>
    %131 = arith.mulf %127, %114 : vector<8x128xf32>
    %132 = arith.mulf %126, %130 : vector<8x128xf32>
    %133 = arith.addf %131, %132 : vector<8x128xf32>
    %134 = math.tanh %133 : vector<8x128xf32>
    %135 = arith.mulf %128, %134 : vector<8x128xf32>
    %c0_69 = arith.constant 0 : index
    %c0_70 = arith.constant 0 : index
    %136 = vector.load %arg7[%c0_69, %c0_70] : memref<8x128xf32, #tpu.memory_space<vmem>>, vector<8x128xf32>
    tpu.vector_store %arg7[%c0_69, %c0_70], %135 {strides = array<i32>} : memref<8x128xf32, #tpu.memory_space<vmem>>, vector<8x128xf32>,
    %c0_71 = arith.constant 0 : index
    %c0_72 = arith.constant 0 : index
    %137 = vector.load %arg8[%c0_71, %c0_72] : memref<8x128xf32, #tpu.memory_space<vmem>>, vector<8x128xf32>
    tpu.vector_store %arg8[%c0_71, %c0_72], %133 {strides = array<i32>} : memref<8x128xf32, #tpu.memory_space<vmem>>, vector<8x128xf32>,
    %c5_i32 = arith.constant 5 : i32
    %c0_73 = arith.constant 0 : index
    %c0_74 = arith.constant 0 : index
    %138 = vector.load %arg7[%c0_73, %c0_74] : memref<8x128xf32, #tpu.memory_space<vmem>>, vector<8x128xf32>
    %c0_75 = arith.constant 0 : index
    %c0_76 = arith.constant 0 : index
    %139 = vector.load %arg8[%c0_75, %c0_76] : memref<8x128xf32, #tpu.memory_space<vmem>>, vector<8x128xf32>
    %140 = arith.index_cast %c5_i32 : i32 to index
    %c0_77 = arith.constant 0 : index
    %c0_78 = arith.constant 0 : index
    %141 = vector.load %arg9[%140, %c0_77, %c0_78] : memref<8x8x512xf32, #tpu.memory_space<vmem>>, vector<1x8x512xf32>
    %142 = vector.shape_cast %141 : vector<1x8x512xf32> to vector<8x512xf32>
    %cst_79 = arith.constant dense<0.000000e+00> : vector<8x512xf32>
    %143 = tpu.matmul %138, %12, %cst_79 {dimension_numbers = #tpu.dot_dimension_numbers<[1], [0], [0], [1], [0, 0, 1, 1], [], []>} : vector<8x128xf32>, vector<128x512xf32>, vector<8x512xf32> -> vector<8x512xf32>
    %144 = arith.addf %142, %143 : vector<8x512xf32>
    %145 = vector.extract_strided_slice %144 {offsets = [0, 0], sizes = [8, 384], strides = [1, 1]} : vector<8x512xf32> to vector<8x384xf32>
    %146 = arith.negf %145 : vector<8x384xf32>
    %147 = math.exp %146 : vector<8x384xf32>
    %cst_80 = arith.constant 1.000000e+00 : f32
    %148 = vector.broadcast %cst_80 : f32 to vector<8x384xf32>
    %149 = arith.addf %148, %147 : vector<8x384xf32>
    %150 = arith.divf %148, %149 : vector<8x384xf32>
    %151 = vector.extract_strided_slice %150 {offsets = [0, 0], sizes = [8, 128], strides = [1, 1]} : vector<8x384xf32> to vector<8x128xf32>
    %152 = vector.extract_strided_slice %150 {offsets = [0, 128], sizes = [8, 128], strides = [1, 1]} : vector<8x384xf32> to vector<8x128xf32>
    %153 = vector.extract_strided_slice %150 {offsets = [0, 256], sizes = [8, 128], strides = [1, 1]} : vector<8x384xf32> to vector<8x128xf32>
    %154 = vector.extract_strided_slice %144 {offsets = [0, 384], sizes = [8, 128], strides = [1, 1]} : vector<8x512xf32> to vector<8x128xf32>
    %155 = math.tanh %154 : vector<8x128xf32>
    %156 = arith.mulf %152, %139 : vector<8x128xf32>
    %157 = arith.mulf %151, %155 : vector<8x128xf32>
    %158 = arith.addf %156, %157 : vector<8x128xf32>
    %159 = math.tanh %158 : vector<8x128xf32>
    %160 = arith.mulf %153, %159 : vector<8x128xf32>
    %c0_81 = arith.constant 0 : index
    %c0_82 = arith.constant 0 : index
    %161 = vector.load %arg7[%c0_81, %c0_82] : memref<8x128xf32, #tpu.memory_space<vmem>>, vector<8x128xf32>
    tpu.vector_store %arg7[%c0_81, %c0_82], %160 {strides = array<i32>} : memref<8x128xf32, #tpu.memory_space<vmem>>, vector<8x128xf32>,
    %c0_83 = arith.constant 0 : index
    %c0_84 = arith.constant 0 : index
    %162 = vector.load %arg8[%c0_83, %c0_84] : memref<8x128xf32, #tpu.memory_space<vmem>>, vector<8x128xf32>
    tpu.vector_store %arg8[%c0_83, %c0_84], %158 {strides = array<i32>} : memref<8x128xf32, #tpu.memory_space<vmem>>, vector<8x128xf32>,
    %c6_i32 = arith.constant 6 : i32
    %c0_85 = arith.constant 0 : index
    %c0_86 = arith.constant 0 : index
    %163 = vector.load %arg7[%c0_85, %c0_86] : memref<8x128xf32, #tpu.memory_space<vmem>>, vector<8x128xf32>
    %c0_87 = arith.constant 0 : index
    %c0_88 = arith.constant 0 : index
    %164 = vector.load %arg8[%c0_87, %c0_88] : memref<8x128xf32, #tpu.memory_space<vmem>>, vector<8x128xf32>
    %165 = arith.index_cast %c6_i32 : i32 to index
    %c0_89 = arith.constant 0 : index
    %c0_90 = arith.constant 0 : index
    %166 = vector.load %arg9[%165, %c0_89, %c0_90] : memref<8x8x512xf32, #tpu.memory_space<vmem>>, vector<1x8x512xf32>
    %167 = vector.shape_cast %166 : vector<1x8x512xf32> to vector<8x512xf32>
    %cst_91 = arith.constant dense<0.000000e+00> : vector<8x512xf32>
    %168 = tpu.matmul %163, %12, %cst_91 {dimension_numbers = #tpu.dot_dimension_numbers<[1], [0], [0], [1], [0, 0, 1, 1], [], []>} : vector<8x128xf32>, vector<128x512xf32>, vector<8x512xf32> -> vector<8x512xf32>
    %169 = arith.addf %167, %168 : vector<8x512xf32>
    %170 = vector.extract_strided_slice %169 {offsets = [0, 0], sizes = [8, 384], strides = [1, 1]} : vector<8x512xf32> to vector<8x384xf32>
    %171 = arith.negf %170 : vector<8x384xf32>
    %172 = math.exp %171 : vector<8x384xf32>
    %cst_92 = arith.constant 1.000000e+00 : f32
    %173 = vector.broadcast %cst_92 : f32 to vector<8x384xf32>
    %174 = arith.addf %173, %172 : vector<8x384xf32>
    %175 = arith.divf %173, %174 : vector<8x384xf32>
    %176 = vector.extract_strided_slice %175 {offsets = [0, 0], sizes = [8, 128], strides = [1, 1]} : vector<8x384xf32> to vector<8x128xf32>
    %177 = vector.extract_strided_slice %175 {offsets = [0, 128], sizes = [8, 128], strides = [1, 1]} : vector<8x384xf32> to vector<8x128xf32>
    %178 = vector.extract_strided_slice %175 {offsets = [0, 256], sizes = [8, 128], strides = [1, 1]} : vector<8x384xf32> to vector<8x128xf32>
    %179 = vector.extract_strided_slice %169 {offsets = [0, 384], sizes = [8, 128], strides = [1, 1]} : vector<8x512xf32> to vector<8x128xf32>
    %180 = math.tanh %179 : vector<8x128xf32>
    %181 = arith.mulf %177, %164 : vector<8x128xf32>
    %182 = arith.mulf %176, %180 : vector<8x128xf32>
    %183 = arith.addf %181, %182 : vector<8x128xf32>
    %184 = math.tanh %183 : vector<8x128xf32>
    %185 = arith.mulf %178, %184 : vector<8x128xf32>
    %c0_93 = arith.constant 0 : index
    %c0_94 = arith.constant 0 : index
    %186 = vector.load %arg7[%c0_93, %c0_94] : memref<8x128xf32, #tpu.memory_space<vmem>>, vector<8x128xf32>
    tpu.vector_store %arg7[%c0_93, %c0_94], %185 {strides = array<i32>} : memref<8x128xf32, #tpu.memory_space<vmem>>, vector<8x128xf32>,
    %c0_95 = arith.constant 0 : index
    %c0_96 = arith.constant 0 : index
    %187 = vector.load %arg8[%c0_95, %c0_96] : memref<8x128xf32, #tpu.memory_space<vmem>>, vector<8x128xf32>
    tpu.vector_store %arg8[%c0_95, %c0_96], %183 {strides = array<i32>} : memref<8x128xf32, #tpu.memory_space<vmem>>, vector<8x128xf32>,
    %c7_i32 = arith.constant 7 : i32
    %c0_97 = arith.constant 0 : index
    %c0_98 = arith.constant 0 : index
    %188 = vector.load %arg7[%c0_97, %c0_98] : memref<8x128xf32, #tpu.memory_space<vmem>>, vector<8x128xf32>
    %c0_99 = arith.constant 0 : index
    %c0_100 = arith.constant 0 : index
    %189 = vector.load %arg8[%c0_99, %c0_100] : memref<8x128xf32, #tpu.memory_space<vmem>>, vector<8x128xf32>
    %190 = arith.index_cast %c7_i32 : i32 to index
    %c0_101 = arith.constant 0 : index
    %c0_102 = arith.constant 0 : index
    %191 = vector.load %arg9[%190, %c0_101, %c0_102] : memref<8x8x512xf32, #tpu.memory_space<vmem>>, vector<1x8x512xf32>
    %192 = vector.shape_cast %191 : vector<1x8x512xf32> to vector<8x512xf32>
    %cst_103 = arith.constant dense<0.000000e+00> : vector<8x512xf32>
    %193 = tpu.matmul %188, %12, %cst_103 {dimension_numbers = #tpu.dot_dimension_numbers<[1], [0], [0], [1], [0, 0, 1, 1], [], []>} : vector<8x128xf32>, vector<128x512xf32>, vector<8x512xf32> -> vector<8x512xf32>
    %194 = arith.addf %192, %193 : vector<8x512xf32>
    %195 = vector.extract_strided_slice %194 {offsets = [0, 0], sizes = [8, 384], strides = [1, 1]} : vector<8x512xf32> to vector<8x384xf32>
    %196 = arith.negf %195 : vector<8x384xf32>
    %197 = math.exp %196 : vector<8x384xf32>
    %cst_104 = arith.constant 1.000000e+00 : f32
    %198 = vector.broadcast %cst_104 : f32 to vector<8x384xf32>
    %199 = arith.addf %198, %197 : vector<8x384xf32>
    %200 = arith.divf %198, %199 : vector<8x384xf32>
    %201 = vector.extract_strided_slice %200 {offsets = [0, 0], sizes = [8, 128], strides = [1, 1]} : vector<8x384xf32> to vector<8x128xf32>
    %202 = vector.extract_strided_slice %200 {offsets = [0, 128], sizes = [8, 128], strides = [1, 1]} : vector<8x384xf32> to vector<8x128xf32>
    %203 = vector.extract_strided_slice %200 {offsets = [0, 256], sizes = [8, 128], strides = [1, 1]} : vector<8x384xf32> to vector<8x128xf32>
    %204 = vector.extract_strided_slice %194 {offsets = [0, 384], sizes = [8, 128], strides = [1, 1]} : vector<8x512xf32> to vector<8x128xf32>
    %205 = math.tanh %204 : vector<8x128xf32>
    %206 = arith.mulf %202, %189 : vector<8x128xf32>
    %207 = arith.mulf %201, %205 : vector<8x128xf32>
    %208 = arith.addf %206, %207 : vector<8x128xf32>
    %209 = math.tanh %208 : vector<8x128xf32>
    %210 = arith.mulf %203, %209 : vector<8x128xf32>
    %c0_105 = arith.constant 0 : index
    %c0_106 = arith.constant 0 : index
    %211 = vector.load %arg7[%c0_105, %c0_106] : memref<8x128xf32, #tpu.memory_space<vmem>>, vector<8x128xf32>
    tpu.vector_store %arg7[%c0_105, %c0_106], %210 {strides = array<i32>} : memref<8x128xf32, #tpu.memory_space<vmem>>, vector<8x128xf32>,
    %c0_107 = arith.constant 0 : index
    %c0_108 = arith.constant 0 : index
    %212 = vector.load %arg8[%c0_107, %c0_108] : memref<8x128xf32, #tpu.memory_space<vmem>>, vector<8x128xf32>
    tpu.vector_store %arg8[%c0_107, %c0_108], %208 {strides = array<i32>} : memref<8x128xf32, #tpu.memory_space<vmem>>, vector<8x128xf32>,
    %c8_i32 = arith.constant 8 : i32
    %c0_i32_109 = arith.constant 0 : i32
    %213 = arith.cmpi eq, %arg1, %c0_i32_109 : i32
    %214 = arith.extui %213 : i1 to i32
    %c0_i32_110 = arith.constant 0 : i32
    %215 = arith.cmpi ne, %214, %c0_i32_110 : i32
    scf.if %215 {
      %c0_111 = arith.constant 0 : index
      %c0_112 = arith.constant 0 : index
      %216 = vector.load %arg7[%c0_111, %c0_112] : memref<8x128xf32, #tpu.memory_space<vmem>>, vector<8x128xf32>
      %cst_113 = arith.constant 0.000000e+00 : f32
      %217 = vector.broadcast %cst_113 : f32 to vector<8x128xf32>
      %218 = arith.maximumf %216, %217 : vector<8x128xf32>
      %c0_114 = arith.constant 0 : index
      %c0_115 = arith.constant 0 : index
      %219 = vector.load %arg6[%c0_114, %c0_115] : memref<8x128xf32, #tpu.memory_space<vmem>>, vector<8x128xf32>
      tpu.vector_store %arg6[%c0_114, %c0_115], %218 {strides = array<i32>} : memref<8x128xf32, #tpu.memory_space<vmem>>, vector<8x128xf32>,
    } else {
    }
    return
  }
  func.func @transform_0(%arg0: i32, %arg1: i32) -> (i32, i32, i32) {
    %c0_i32 = arith.constant 0 : i32
    %c0_i32_0 = arith.constant 0 : i32
    return %arg1, %arg0, %c0_i32 : i32, i32, i32
  }
  func.func @transform_1(%arg0: i32, %arg1: i32) -> (i32, i32) {
    %c0_i32 = arith.constant 0 : i32
    %c0_i32_0 = arith.constant 0 : i32
    %c0_i32_1 = arith.constant 0 : i32
    return %c0_i32, %c0_i32_0 : i32, i32
  }
  func.func @transform_2(%arg0: i32, %arg1: i32) -> (i32, i32) {
    %c0_i32 = arith.constant 0 : i32
    %c0_i32_0 = arith.constant 0 : i32
    %c0_i32_1 = arith.constant 0 : i32
    return %c0_i32, %c0_i32_0 : i32, i32
  }
  func.func @transform_3(%arg0: i32, %arg1: i32) -> (i32, i32) {
    %c0_i32 = arith.constant 0 : i32
    %c0_i32_0 = arith.constant 0 : i32
    %c0_i32_1 = arith.constant 0 : i32
    return %c0_i32, %c0_i32_0 : i32, i32
  }
  func.func @transform_4(%arg0: i32, %arg1: i32) -> (i32, i32) {
    %c0_i32 = arith.constant 0 : i32
    %c0_i32_0 = arith.constant 0 : i32
    return %arg0, %c0_i32 : i32, i32
  }
}

module attributes {stable_mosaic.version = 11 : i64} {
  func.func @_lstm_layer_kernel(%arg0: i32, %arg1: i32, %arg2: memref<8x8x128xf32, #tpu.memory_space<vmem>>, %arg3: memref<128x512xf32, #tpu.memory_space<vmem>>, %arg4: memref<128x512xf32, #tpu.memory_space<vmem>>, %arg5: memref<1x512xf32, #tpu.memory_space<vmem>>, %arg6: memref<8x8x128xf32, #tpu.memory_space<vmem>>, %arg7: memref<8x128xf32, #tpu.memory_space<vmem>>, %arg8: memref<8x128xf32, #tpu.memory_space<vmem>>, %arg9: memref<8x8x512xf32, #tpu.memory_space<vmem>>) attributes {dimension_semantics = [#tpu.dimension_semantics<parallel>, #tpu.dimension_semantics<arbitrary>], iteration_bounds = array<i64: 1, 1>, scalar_prefetch = 0 : i64, scratch_operands = 3 : i64, tpu.core_type = #tpu.core_type<tc>, window_params = [{transform_indices = @transform_0, window_bounds = array<i64: 8, 8, 128>}, {pipeline_mode = #tpu.pipeline_mode<synchronous>, transform_indices = @transform_1, window_bounds = array<i64: 128, 512>}, {pipeline_mode = #tpu.pipeline_mode<synchronous>, transform_indices = @transform_2, window_bounds = array<i64: 128, 512>}, {pipeline_mode = #tpu.pipeline_mode<synchronous>, transform_indices = @transform_3, window_bounds = array<i64: 1, 512>}, {transform_indices = @transform_4, window_bounds = array<i64: 8, 8, 128>}]} {
    %c0_i32 = arith.constant 0 : i32
    %0 = arith.cmpi eq, %arg1, %c0_i32 : i32
    %1 = arith.extui %0 : i1 to i32
    %c0_i32_0 = arith.constant 0 : i32
    %2 = arith.cmpi ne, %1, %c0_i32_0 : i32
    scf.if %2 {
      %cst_125 = arith.constant 0.000000e+00 : f32
      %245 = vector.broadcast %cst_125 : f32 to vector<8x128xf32>
      %c0_126 = arith.constant 0 : index
      %c0_127 = arith.constant 0 : index
      %246 = vector.load %arg7[%c0_126, %c0_127] : memref<8x128xf32, #tpu.memory_space<vmem>>, vector<8x128xf32>
      tpu.vector_store %arg7[%c0_126, %c0_127], %245 {strides = array<i32>} : memref<8x128xf32, #tpu.memory_space<vmem>>, vector<8x128xf32>,
      %cst_128 = arith.constant 0.000000e+00 : f32
      %247 = vector.broadcast %cst_128 : f32 to vector<8x128xf32>
      %c0_129 = arith.constant 0 : index
      %c0_130 = arith.constant 0 : index
      %248 = vector.load %arg8[%c0_129, %c0_130] : memref<8x128xf32, #tpu.memory_space<vmem>>, vector<8x128xf32>
      tpu.vector_store %arg8[%c0_129, %c0_130], %247 {strides = array<i32>} : memref<8x128xf32, #tpu.memory_space<vmem>>, vector<8x128xf32>,
    } else {
    }
    %c0 = arith.constant 0 : index
    %c0_1 = arith.constant 0 : index
    %c0_2 = arith.constant 0 : index
    %3 = vector.load %arg2[%c0, %c0_1, %c0_2] : memref<8x8x128xf32, #tpu.memory_space<vmem>>, vector<8x8x128xf32>
    %4 = vector.shape_cast %3 : vector<8x8x128xf32> to vector<64x128xf32>
    %c0_3 = arith.constant 0 : index
    %c0_4 = arith.constant 0 : index
    %5 = vector.load %arg3[%c0_3, %c0_4] : memref<128x512xf32, #tpu.memory_space<vmem>>, vector<128x512xf32>
    %cst = arith.constant dense<0.000000e+00> : vector<64x512xf32>
    %6 = tpu.matmul %4, %5, %cst {dimension_numbers = #tpu.dot_dimension_numbers<[1], [0], [0], [1], [0, 0, 1, 1], [], []>} : vector<64x128xf32>, vector<128x512xf32>, vector<64x512xf32> -> vector<64x512xf32>
    %c0_5 = arith.constant 0 : index
    %c0_6 = arith.constant 0 : index
    %7 = vector.load %arg5[%c0_5, %c0_6] : memref<1x512xf32, #tpu.memory_space<vmem>>, vector<1x512xf32>
    %8 = vector.broadcast %7 : vector<1x512xf32> to vector<64x512xf32>
    %9 = arith.addf %6, %8 : vector<64x512xf32>
    %10 = vector.shape_cast %9 : vector<64x512xf32> to vector<8x8x512xf32>
    %c0_7 = arith.constant 0 : index
    %c0_8 = arith.constant 0 : index
    %c0_9 = arith.constant 0 : index
    %11 = vector.load %arg9[%c0_7, %c0_8, %c0_9] : memref<8x8x512xf32, #tpu.memory_space<vmem>>, vector<8x8x512xf32>
    tpu.vector_store %arg9[%c0_7, %c0_8, %c0_9], %10 {strides = array<i32>} : memref<8x8x512xf32, #tpu.memory_space<vmem>>, vector<8x8x512xf32>,
    %c0_10 = arith.constant 0 : index
    %c0_11 = arith.constant 0 : index
    %12 = vector.load %arg4[%c0_10, %c0_11] : memref<128x512xf32, #tpu.memory_space<vmem>>, vector<128x512xf32>
    %c0_i32_12 = arith.constant 0 : i32
    %c0_13 = arith.constant 0 : index
    %c0_14 = arith.constant 0 : index
    %13 = vector.load %arg7[%c0_13, %c0_14] : memref<8x128xf32, #tpu.memory_space<vmem>>, vector<8x128xf32>
    %c0_15 = arith.constant 0 : index
    %c0_16 = arith.constant 0 : index
    %14 = vector.load %arg8[%c0_15, %c0_16] : memref<8x128xf32, #tpu.memory_space<vmem>>, vector<8x128xf32>
    %15 = arith.index_cast %c0_i32_12 : i32 to index
    %c0_17 = arith.constant 0 : index
    %c0_18 = arith.constant 0 : index
    %16 = vector.load %arg9[%15, %c0_17, %c0_18] : memref<8x8x512xf32, #tpu.memory_space<vmem>>, vector<1x8x512xf32>
    %17 = vector.shape_cast %16 : vector<1x8x512xf32> to vector<8x512xf32>
    %cst_19 = arith.constant dense<0.000000e+00> : vector<8x512xf32>
    %18 = tpu.matmul %13, %12, %cst_19 {dimension_numbers = #tpu.dot_dimension_numbers<[1], [0], [0], [1], [0, 0, 1, 1], [], []>} : vector<8x128xf32>, vector<128x512xf32>, vector<8x512xf32> -> vector<8x512xf32>
    %19 = arith.addf %17, %18 : vector<8x512xf32>
    %20 = vector.extract_strided_slice %19 {offsets = [0, 0], sizes = [8, 384], strides = [1, 1]} : vector<8x512xf32> to vector<8x384xf32>
    %21 = arith.negf %20 : vector<8x384xf32>
    %22 = math.exp %21 : vector<8x384xf32>
    %cst_20 = arith.constant 1.000000e+00 : f32
    %23 = vector.broadcast %cst_20 : f32 to vector<8x384xf32>
    %24 = arith.addf %23, %22 : vector<8x384xf32>
    %25 = arith.divf %23, %24 : vector<8x384xf32>
    %26 = vector.extract_strided_slice %25 {offsets = [0, 0], sizes = [8, 128], strides = [1, 1]} : vector<8x384xf32> to vector<8x128xf32>
    %27 = vector.extract_strided_slice %25 {offsets = [0, 128], sizes = [8, 128], strides = [1, 1]} : vector<8x384xf32> to vector<8x128xf32>
    %28 = vector.extract_strided_slice %25 {offsets = [0, 256], sizes = [8, 128], strides = [1, 1]} : vector<8x384xf32> to vector<8x128xf32>
    %29 = vector.extract_strided_slice %19 {offsets = [0, 384], sizes = [8, 128], strides = [1, 1]} : vector<8x512xf32> to vector<8x128xf32>
    %30 = math.tanh %29 : vector<8x128xf32>
    %31 = arith.mulf %27, %14 : vector<8x128xf32>
    %32 = arith.mulf %26, %30 : vector<8x128xf32>
    %33 = arith.addf %31, %32 : vector<8x128xf32>
    %34 = math.tanh %33 : vector<8x128xf32>
    %35 = arith.mulf %28, %34 : vector<8x128xf32>
    %c0_21 = arith.constant 0 : index
    %c0_22 = arith.constant 0 : index
    %36 = vector.load %arg7[%c0_21, %c0_22] : memref<8x128xf32, #tpu.memory_space<vmem>>, vector<8x128xf32>
    tpu.vector_store %arg7[%c0_21, %c0_22], %35 {strides = array<i32>} : memref<8x128xf32, #tpu.memory_space<vmem>>, vector<8x128xf32>,
    %c0_23 = arith.constant 0 : index
    %c0_24 = arith.constant 0 : index
    %37 = vector.load %arg8[%c0_23, %c0_24] : memref<8x128xf32, #tpu.memory_space<vmem>>, vector<8x128xf32>
    tpu.vector_store %arg8[%c0_23, %c0_24], %33 {strides = array<i32>} : memref<8x128xf32, #tpu.memory_space<vmem>>, vector<8x128xf32>,
    %38 = arith.index_cast %c0_i32_12 : i32 to index
    %c0_25 = arith.constant 0 : index
    %c0_26 = arith.constant 0 : index
    %39 = vector.load %arg6[%38, %c0_25, %c0_26] : memref<8x8x128xf32, #tpu.memory_space<vmem>>, vector<1x8x128xf32>
    %40 = vector.shape_cast %39 : vector<1x8x128xf32> to vector<8x128xf32>
    %41 = vector.shape_cast %35 : vector<8x128xf32> to vector<1x8x128xf32>
    tpu.vector_store %arg6[%38, %c0_25, %c0_26], %41 {strides = array<i32>} : memref<8x8x128xf32, #tpu.memory_space<vmem>>, vector<1x8x128xf32>,
    %c1_i32 = arith.constant 1 : i32
    %c0_27 = arith.constant 0 : index
    %c0_28 = arith.constant 0 : index
    %42 = vector.load %arg7[%c0_27, %c0_28] : memref<8x128xf32, #tpu.memory_space<vmem>>, vector<8x128xf32>
    %c0_29 = arith.constant 0 : index
    %c0_30 = arith.constant 0 : index
    %43 = vector.load %arg8[%c0_29, %c0_30] : memref<8x128xf32, #tpu.memory_space<vmem>>, vector<8x128xf32>
    %44 = arith.index_cast %c1_i32 : i32 to index
    %c0_31 = arith.constant 0 : index
    %c0_32 = arith.constant 0 : index
    %45 = vector.load %arg9[%44, %c0_31, %c0_32] : memref<8x8x512xf32, #tpu.memory_space<vmem>>, vector<1x8x512xf32>
    %46 = vector.shape_cast %45 : vector<1x8x512xf32> to vector<8x512xf32>
    %cst_33 = arith.constant dense<0.000000e+00> : vector<8x512xf32>
    %47 = tpu.matmul %42, %12, %cst_33 {dimension_numbers = #tpu.dot_dimension_numbers<[1], [0], [0], [1], [0, 0, 1, 1], [], []>} : vector<8x128xf32>, vector<128x512xf32>, vector<8x512xf32> -> vector<8x512xf32>
    %48 = arith.addf %46, %47 : vector<8x512xf32>
    %49 = vector.extract_strided_slice %48 {offsets = [0, 0], sizes = [8, 384], strides = [1, 1]} : vector<8x512xf32> to vector<8x384xf32>
    %50 = arith.negf %49 : vector<8x384xf32>
    %51 = math.exp %50 : vector<8x384xf32>
    %cst_34 = arith.constant 1.000000e+00 : f32
    %52 = vector.broadcast %cst_34 : f32 to vector<8x384xf32>
    %53 = arith.addf %52, %51 : vector<8x384xf32>
    %54 = arith.divf %52, %53 : vector<8x384xf32>
    %55 = vector.extract_strided_slice %54 {offsets = [0, 0], sizes = [8, 128], strides = [1, 1]} : vector<8x384xf32> to vector<8x128xf32>
    %56 = vector.extract_strided_slice %54 {offsets = [0, 128], sizes = [8, 128], strides = [1, 1]} : vector<8x384xf32> to vector<8x128xf32>
    %57 = vector.extract_strided_slice %54 {offsets = [0, 256], sizes = [8, 128], strides = [1, 1]} : vector<8x384xf32> to vector<8x128xf32>
    %58 = vector.extract_strided_slice %48 {offsets = [0, 384], sizes = [8, 128], strides = [1, 1]} : vector<8x512xf32> to vector<8x128xf32>
    %59 = math.tanh %58 : vector<8x128xf32>
    %60 = arith.mulf %56, %43 : vector<8x128xf32>
    %61 = arith.mulf %55, %59 : vector<8x128xf32>
    %62 = arith.addf %60, %61 : vector<8x128xf32>
    %63 = math.tanh %62 : vector<8x128xf32>
    %64 = arith.mulf %57, %63 : vector<8x128xf32>
    %c0_35 = arith.constant 0 : index
    %c0_36 = arith.constant 0 : index
    %65 = vector.load %arg7[%c0_35, %c0_36] : memref<8x128xf32, #tpu.memory_space<vmem>>, vector<8x128xf32>
    tpu.vector_store %arg7[%c0_35, %c0_36], %64 {strides = array<i32>} : memref<8x128xf32, #tpu.memory_space<vmem>>, vector<8x128xf32>,
    %c0_37 = arith.constant 0 : index
    %c0_38 = arith.constant 0 : index
    %66 = vector.load %arg8[%c0_37, %c0_38] : memref<8x128xf32, #tpu.memory_space<vmem>>, vector<8x128xf32>
    tpu.vector_store %arg8[%c0_37, %c0_38], %62 {strides = array<i32>} : memref<8x128xf32, #tpu.memory_space<vmem>>, vector<8x128xf32>,
    %67 = arith.index_cast %c1_i32 : i32 to index
    %c0_39 = arith.constant 0 : index
    %c0_40 = arith.constant 0 : index
    %68 = vector.load %arg6[%67, %c0_39, %c0_40] : memref<8x8x128xf32, #tpu.memory_space<vmem>>, vector<1x8x128xf32>
    %69 = vector.shape_cast %68 : vector<1x8x128xf32> to vector<8x128xf32>
    %70 = vector.shape_cast %64 : vector<8x128xf32> to vector<1x8x128xf32>
    tpu.vector_store %arg6[%67, %c0_39, %c0_40], %70 {strides = array<i32>} : memref<8x8x128xf32, #tpu.memory_space<vmem>>, vector<1x8x128xf32>,
    %c2_i32 = arith.constant 2 : i32
    %c0_41 = arith.constant 0 : index
    %c0_42 = arith.constant 0 : index
    %71 = vector.load %arg7[%c0_41, %c0_42] : memref<8x128xf32, #tpu.memory_space<vmem>>, vector<8x128xf32>
    %c0_43 = arith.constant 0 : index
    %c0_44 = arith.constant 0 : index
    %72 = vector.load %arg8[%c0_43, %c0_44] : memref<8x128xf32, #tpu.memory_space<vmem>>, vector<8x128xf32>
    %73 = arith.index_cast %c2_i32 : i32 to index
    %c0_45 = arith.constant 0 : index
    %c0_46 = arith.constant 0 : index
    %74 = vector.load %arg9[%73, %c0_45, %c0_46] : memref<8x8x512xf32, #tpu.memory_space<vmem>>, vector<1x8x512xf32>
    %75 = vector.shape_cast %74 : vector<1x8x512xf32> to vector<8x512xf32>
    %cst_47 = arith.constant dense<0.000000e+00> : vector<8x512xf32>
    %76 = tpu.matmul %71, %12, %cst_47 {dimension_numbers = #tpu.dot_dimension_numbers<[1], [0], [0], [1], [0, 0, 1, 1], [], []>} : vector<8x128xf32>, vector<128x512xf32>, vector<8x512xf32> -> vector<8x512xf32>
    %77 = arith.addf %75, %76 : vector<8x512xf32>
    %78 = vector.extract_strided_slice %77 {offsets = [0, 0], sizes = [8, 384], strides = [1, 1]} : vector<8x512xf32> to vector<8x384xf32>
    %79 = arith.negf %78 : vector<8x384xf32>
    %80 = math.exp %79 : vector<8x384xf32>
    %cst_48 = arith.constant 1.000000e+00 : f32
    %81 = vector.broadcast %cst_48 : f32 to vector<8x384xf32>
    %82 = arith.addf %81, %80 : vector<8x384xf32>
    %83 = arith.divf %81, %82 : vector<8x384xf32>
    %84 = vector.extract_strided_slice %83 {offsets = [0, 0], sizes = [8, 128], strides = [1, 1]} : vector<8x384xf32> to vector<8x128xf32>
    %85 = vector.extract_strided_slice %83 {offsets = [0, 128], sizes = [8, 128], strides = [1, 1]} : vector<8x384xf32> to vector<8x128xf32>
    %86 = vector.extract_strided_slice %83 {offsets = [0, 256], sizes = [8, 128], strides = [1, 1]} : vector<8x384xf32> to vector<8x128xf32>
    %87 = vector.extract_strided_slice %77 {offsets = [0, 384], sizes = [8, 128], strides = [1, 1]} : vector<8x512xf32> to vector<8x128xf32>
    %88 = math.tanh %87 : vector<8x128xf32>
    %89 = arith.mulf %85, %72 : vector<8x128xf32>
    %90 = arith.mulf %84, %88 : vector<8x128xf32>
    %91 = arith.addf %89, %90 : vector<8x128xf32>
    %92 = math.tanh %91 : vector<8x128xf32>
    %93 = arith.mulf %86, %92 : vector<8x128xf32>
    %c0_49 = arith.constant 0 : index
    %c0_50 = arith.constant 0 : index
    %94 = vector.load %arg7[%c0_49, %c0_50] : memref<8x128xf32, #tpu.memory_space<vmem>>, vector<8x128xf32>
    tpu.vector_store %arg7[%c0_49, %c0_50], %93 {strides = array<i32>} : memref<8x128xf32, #tpu.memory_space<vmem>>, vector<8x128xf32>,
    %c0_51 = arith.constant 0 : index
    %c0_52 = arith.constant 0 : index
    %95 = vector.load %arg8[%c0_51, %c0_52] : memref<8x128xf32, #tpu.memory_space<vmem>>, vector<8x128xf32>
    tpu.vector_store %arg8[%c0_51, %c0_52], %91 {strides = array<i32>} : memref<8x128xf32, #tpu.memory_space<vmem>>, vector<8x128xf32>,
    %96 = arith.index_cast %c2_i32 : i32 to index
    %c0_53 = arith.constant 0 : index
    %c0_54 = arith.constant 0 : index
    %97 = vector.load %arg6[%96, %c0_53, %c0_54] : memref<8x8x128xf32, #tpu.memory_space<vmem>>, vector<1x8x128xf32>
    %98 = vector.shape_cast %97 : vector<1x8x128xf32> to vector<8x128xf32>
    %99 = vector.shape_cast %93 : vector<8x128xf32> to vector<1x8x128xf32>
    tpu.vector_store %arg6[%96, %c0_53, %c0_54], %99 {strides = array<i32>} : memref<8x8x128xf32, #tpu.memory_space<vmem>>, vector<1x8x128xf32>,
    %c3_i32 = arith.constant 3 : i32
    %c0_55 = arith.constant 0 : index
    %c0_56 = arith.constant 0 : index
    %100 = vector.load %arg7[%c0_55, %c0_56] : memref<8x128xf32, #tpu.memory_space<vmem>>, vector<8x128xf32>
    %c0_57 = arith.constant 0 : index
    %c0_58 = arith.constant 0 : index
    %101 = vector.load %arg8[%c0_57, %c0_58] : memref<8x128xf32, #tpu.memory_space<vmem>>, vector<8x128xf32>
    %102 = arith.index_cast %c3_i32 : i32 to index
    %c0_59 = arith.constant 0 : index
    %c0_60 = arith.constant 0 : index
    %103 = vector.load %arg9[%102, %c0_59, %c0_60] : memref<8x8x512xf32, #tpu.memory_space<vmem>>, vector<1x8x512xf32>
    %104 = vector.shape_cast %103 : vector<1x8x512xf32> to vector<8x512xf32>
    %cst_61 = arith.constant dense<0.000000e+00> : vector<8x512xf32>
    %105 = tpu.matmul %100, %12, %cst_61 {dimension_numbers = #tpu.dot_dimension_numbers<[1], [0], [0], [1], [0, 0, 1, 1], [], []>} : vector<8x128xf32>, vector<128x512xf32>, vector<8x512xf32> -> vector<8x512xf32>
    %106 = arith.addf %104, %105 : vector<8x512xf32>
    %107 = vector.extract_strided_slice %106 {offsets = [0, 0], sizes = [8, 384], strides = [1, 1]} : vector<8x512xf32> to vector<8x384xf32>
    %108 = arith.negf %107 : vector<8x384xf32>
    %109 = math.exp %108 : vector<8x384xf32>
    %cst_62 = arith.constant 1.000000e+00 : f32
    %110 = vector.broadcast %cst_62 : f32 to vector<8x384xf32>
    %111 = arith.addf %110, %109 : vector<8x384xf32>
    %112 = arith.divf %110, %111 : vector<8x384xf32>
    %113 = vector.extract_strided_slice %112 {offsets = [0, 0], sizes = [8, 128], strides = [1, 1]} : vector<8x384xf32> to vector<8x128xf32>
    %114 = vector.extract_strided_slice %112 {offsets = [0, 128], sizes = [8, 128], strides = [1, 1]} : vector<8x384xf32> to vector<8x128xf32>
    %115 = vector.extract_strided_slice %112 {offsets = [0, 256], sizes = [8, 128], strides = [1, 1]} : vector<8x384xf32> to vector<8x128xf32>
    %116 = vector.extract_strided_slice %106 {offsets = [0, 384], sizes = [8, 128], strides = [1, 1]} : vector<8x512xf32> to vector<8x128xf32>
    %117 = math.tanh %116 : vector<8x128xf32>
    %118 = arith.mulf %114, %101 : vector<8x128xf32>
    %119 = arith.mulf %113, %117 : vector<8x128xf32>
    %120 = arith.addf %118, %119 : vector<8x128xf32>
    %121 = math.tanh %120 : vector<8x128xf32>
    %122 = arith.mulf %115, %121 : vector<8x128xf32>
    %c0_63 = arith.constant 0 : index
    %c0_64 = arith.constant 0 : index
    %123 = vector.load %arg7[%c0_63, %c0_64] : memref<8x128xf32, #tpu.memory_space<vmem>>, vector<8x128xf32>
    tpu.vector_store %arg7[%c0_63, %c0_64], %122 {strides = array<i32>} : memref<8x128xf32, #tpu.memory_space<vmem>>, vector<8x128xf32>,
    %c0_65 = arith.constant 0 : index
    %c0_66 = arith.constant 0 : index
    %124 = vector.load %arg8[%c0_65, %c0_66] : memref<8x128xf32, #tpu.memory_space<vmem>>, vector<8x128xf32>
    tpu.vector_store %arg8[%c0_65, %c0_66], %120 {strides = array<i32>} : memref<8x128xf32, #tpu.memory_space<vmem>>, vector<8x128xf32>,
    %125 = arith.index_cast %c3_i32 : i32 to index
    %c0_67 = arith.constant 0 : index
    %c0_68 = arith.constant 0 : index
    %126 = vector.load %arg6[%125, %c0_67, %c0_68] : memref<8x8x128xf32, #tpu.memory_space<vmem>>, vector<1x8x128xf32>
    %127 = vector.shape_cast %126 : vector<1x8x128xf32> to vector<8x128xf32>
    %128 = vector.shape_cast %122 : vector<8x128xf32> to vector<1x8x128xf32>
    tpu.vector_store %arg6[%125, %c0_67, %c0_68], %128 {strides = array<i32>} : memref<8x8x128xf32, #tpu.memory_space<vmem>>, vector<1x8x128xf32>,
    %c4_i32 = arith.constant 4 : i32
    %c0_69 = arith.constant 0 : index
    %c0_70 = arith.constant 0 : index
    %129 = vector.load %arg7[%c0_69, %c0_70] : memref<8x128xf32, #tpu.memory_space<vmem>>, vector<8x128xf32>
    %c0_71 = arith.constant 0 : index
    %c0_72 = arith.constant 0 : index
    %130 = vector.load %arg8[%c0_71, %c0_72] : memref<8x128xf32, #tpu.memory_space<vmem>>, vector<8x128xf32>
    %131 = arith.index_cast %c4_i32 : i32 to index
    %c0_73 = arith.constant 0 : index
    %c0_74 = arith.constant 0 : index
    %132 = vector.load %arg9[%131, %c0_73, %c0_74] : memref<8x8x512xf32, #tpu.memory_space<vmem>>, vector<1x8x512xf32>
    %133 = vector.shape_cast %132 : vector<1x8x512xf32> to vector<8x512xf32>
    %cst_75 = arith.constant dense<0.000000e+00> : vector<8x512xf32>
    %134 = tpu.matmul %129, %12, %cst_75 {dimension_numbers = #tpu.dot_dimension_numbers<[1], [0], [0], [1], [0, 0, 1, 1], [], []>} : vector<8x128xf32>, vector<128x512xf32>, vector<8x512xf32> -> vector<8x512xf32>
    %135 = arith.addf %133, %134 : vector<8x512xf32>
    %136 = vector.extract_strided_slice %135 {offsets = [0, 0], sizes = [8, 384], strides = [1, 1]} : vector<8x512xf32> to vector<8x384xf32>
    %137 = arith.negf %136 : vector<8x384xf32>
    %138 = math.exp %137 : vector<8x384xf32>
    %cst_76 = arith.constant 1.000000e+00 : f32
    %139 = vector.broadcast %cst_76 : f32 to vector<8x384xf32>
    %140 = arith.addf %139, %138 : vector<8x384xf32>
    %141 = arith.divf %139, %140 : vector<8x384xf32>
    %142 = vector.extract_strided_slice %141 {offsets = [0, 0], sizes = [8, 128], strides = [1, 1]} : vector<8x384xf32> to vector<8x128xf32>
    %143 = vector.extract_strided_slice %141 {offsets = [0, 128], sizes = [8, 128], strides = [1, 1]} : vector<8x384xf32> to vector<8x128xf32>
    %144 = vector.extract_strided_slice %141 {offsets = [0, 256], sizes = [8, 128], strides = [1, 1]} : vector<8x384xf32> to vector<8x128xf32>
    %145 = vector.extract_strided_slice %135 {offsets = [0, 384], sizes = [8, 128], strides = [1, 1]} : vector<8x512xf32> to vector<8x128xf32>
    %146 = math.tanh %145 : vector<8x128xf32>
    %147 = arith.mulf %143, %130 : vector<8x128xf32>
    %148 = arith.mulf %142, %146 : vector<8x128xf32>
    %149 = arith.addf %147, %148 : vector<8x128xf32>
    %150 = math.tanh %149 : vector<8x128xf32>
    %151 = arith.mulf %144, %150 : vector<8x128xf32>
    %c0_77 = arith.constant 0 : index
    %c0_78 = arith.constant 0 : index
    %152 = vector.load %arg7[%c0_77, %c0_78] : memref<8x128xf32, #tpu.memory_space<vmem>>, vector<8x128xf32>
    tpu.vector_store %arg7[%c0_77, %c0_78], %151 {strides = array<i32>} : memref<8x128xf32, #tpu.memory_space<vmem>>, vector<8x128xf32>,
    %c0_79 = arith.constant 0 : index
    %c0_80 = arith.constant 0 : index
    %153 = vector.load %arg8[%c0_79, %c0_80] : memref<8x128xf32, #tpu.memory_space<vmem>>, vector<8x128xf32>
    tpu.vector_store %arg8[%c0_79, %c0_80], %149 {strides = array<i32>} : memref<8x128xf32, #tpu.memory_space<vmem>>, vector<8x128xf32>,
    %154 = arith.index_cast %c4_i32 : i32 to index
    %c0_81 = arith.constant 0 : index
    %c0_82 = arith.constant 0 : index
    %155 = vector.load %arg6[%154, %c0_81, %c0_82] : memref<8x8x128xf32, #tpu.memory_space<vmem>>, vector<1x8x128xf32>
    %156 = vector.shape_cast %155 : vector<1x8x128xf32> to vector<8x128xf32>
    %157 = vector.shape_cast %151 : vector<8x128xf32> to vector<1x8x128xf32>
    tpu.vector_store %arg6[%154, %c0_81, %c0_82], %157 {strides = array<i32>} : memref<8x8x128xf32, #tpu.memory_space<vmem>>, vector<1x8x128xf32>,
    %c5_i32 = arith.constant 5 : i32
    %c0_83 = arith.constant 0 : index
    %c0_84 = arith.constant 0 : index
    %158 = vector.load %arg7[%c0_83, %c0_84] : memref<8x128xf32, #tpu.memory_space<vmem>>, vector<8x128xf32>
    %c0_85 = arith.constant 0 : index
    %c0_86 = arith.constant 0 : index
    %159 = vector.load %arg8[%c0_85, %c0_86] : memref<8x128xf32, #tpu.memory_space<vmem>>, vector<8x128xf32>
    %160 = arith.index_cast %c5_i32 : i32 to index
    %c0_87 = arith.constant 0 : index
    %c0_88 = arith.constant 0 : index
    %161 = vector.load %arg9[%160, %c0_87, %c0_88] : memref<8x8x512xf32, #tpu.memory_space<vmem>>, vector<1x8x512xf32>
    %162 = vector.shape_cast %161 : vector<1x8x512xf32> to vector<8x512xf32>
    %cst_89 = arith.constant dense<0.000000e+00> : vector<8x512xf32>
    %163 = tpu.matmul %158, %12, %cst_89 {dimension_numbers = #tpu.dot_dimension_numbers<[1], [0], [0], [1], [0, 0, 1, 1], [], []>} : vector<8x128xf32>, vector<128x512xf32>, vector<8x512xf32> -> vector<8x512xf32>
    %164 = arith.addf %162, %163 : vector<8x512xf32>
    %165 = vector.extract_strided_slice %164 {offsets = [0, 0], sizes = [8, 384], strides = [1, 1]} : vector<8x512xf32> to vector<8x384xf32>
    %166 = arith.negf %165 : vector<8x384xf32>
    %167 = math.exp %166 : vector<8x384xf32>
    %cst_90 = arith.constant 1.000000e+00 : f32
    %168 = vector.broadcast %cst_90 : f32 to vector<8x384xf32>
    %169 = arith.addf %168, %167 : vector<8x384xf32>
    %170 = arith.divf %168, %169 : vector<8x384xf32>
    %171 = vector.extract_strided_slice %170 {offsets = [0, 0], sizes = [8, 128], strides = [1, 1]} : vector<8x384xf32> to vector<8x128xf32>
    %172 = vector.extract_strided_slice %170 {offsets = [0, 128], sizes = [8, 128], strides = [1, 1]} : vector<8x384xf32> to vector<8x128xf32>
    %173 = vector.extract_strided_slice %170 {offsets = [0, 256], sizes = [8, 128], strides = [1, 1]} : vector<8x384xf32> to vector<8x128xf32>
    %174 = vector.extract_strided_slice %164 {offsets = [0, 384], sizes = [8, 128], strides = [1, 1]} : vector<8x512xf32> to vector<8x128xf32>
    %175 = math.tanh %174 : vector<8x128xf32>
    %176 = arith.mulf %172, %159 : vector<8x128xf32>
    %177 = arith.mulf %171, %175 : vector<8x128xf32>
    %178 = arith.addf %176, %177 : vector<8x128xf32>
    %179 = math.tanh %178 : vector<8x128xf32>
    %180 = arith.mulf %173, %179 : vector<8x128xf32>
    %c0_91 = arith.constant 0 : index
    %c0_92 = arith.constant 0 : index
    %181 = vector.load %arg7[%c0_91, %c0_92] : memref<8x128xf32, #tpu.memory_space<vmem>>, vector<8x128xf32>
    tpu.vector_store %arg7[%c0_91, %c0_92], %180 {strides = array<i32>} : memref<8x128xf32, #tpu.memory_space<vmem>>, vector<8x128xf32>,
    %c0_93 = arith.constant 0 : index
    %c0_94 = arith.constant 0 : index
    %182 = vector.load %arg8[%c0_93, %c0_94] : memref<8x128xf32, #tpu.memory_space<vmem>>, vector<8x128xf32>
    tpu.vector_store %arg8[%c0_93, %c0_94], %178 {strides = array<i32>} : memref<8x128xf32, #tpu.memory_space<vmem>>, vector<8x128xf32>,
    %183 = arith.index_cast %c5_i32 : i32 to index
    %c0_95 = arith.constant 0 : index
    %c0_96 = arith.constant 0 : index
    %184 = vector.load %arg6[%183, %c0_95, %c0_96] : memref<8x8x128xf32, #tpu.memory_space<vmem>>, vector<1x8x128xf32>
    %185 = vector.shape_cast %184 : vector<1x8x128xf32> to vector<8x128xf32>
    %186 = vector.shape_cast %180 : vector<8x128xf32> to vector<1x8x128xf32>
    tpu.vector_store %arg6[%183, %c0_95, %c0_96], %186 {strides = array<i32>} : memref<8x8x128xf32, #tpu.memory_space<vmem>>, vector<1x8x128xf32>,
    %c6_i32 = arith.constant 6 : i32
    %c0_97 = arith.constant 0 : index
    %c0_98 = arith.constant 0 : index
    %187 = vector.load %arg7[%c0_97, %c0_98] : memref<8x128xf32, #tpu.memory_space<vmem>>, vector<8x128xf32>
    %c0_99 = arith.constant 0 : index
    %c0_100 = arith.constant 0 : index
    %188 = vector.load %arg8[%c0_99, %c0_100] : memref<8x128xf32, #tpu.memory_space<vmem>>, vector<8x128xf32>
    %189 = arith.index_cast %c6_i32 : i32 to index
    %c0_101 = arith.constant 0 : index
    %c0_102 = arith.constant 0 : index
    %190 = vector.load %arg9[%189, %c0_101, %c0_102] : memref<8x8x512xf32, #tpu.memory_space<vmem>>, vector<1x8x512xf32>
    %191 = vector.shape_cast %190 : vector<1x8x512xf32> to vector<8x512xf32>
    %cst_103 = arith.constant dense<0.000000e+00> : vector<8x512xf32>
    %192 = tpu.matmul %187, %12, %cst_103 {dimension_numbers = #tpu.dot_dimension_numbers<[1], [0], [0], [1], [0, 0, 1, 1], [], []>} : vector<8x128xf32>, vector<128x512xf32>, vector<8x512xf32> -> vector<8x512xf32>
    %193 = arith.addf %191, %192 : vector<8x512xf32>
    %194 = vector.extract_strided_slice %193 {offsets = [0, 0], sizes = [8, 384], strides = [1, 1]} : vector<8x512xf32> to vector<8x384xf32>
    %195 = arith.negf %194 : vector<8x384xf32>
    %196 = math.exp %195 : vector<8x384xf32>
    %cst_104 = arith.constant 1.000000e+00 : f32
    %197 = vector.broadcast %cst_104 : f32 to vector<8x384xf32>
    %198 = arith.addf %197, %196 : vector<8x384xf32>
    %199 = arith.divf %197, %198 : vector<8x384xf32>
    %200 = vector.extract_strided_slice %199 {offsets = [0, 0], sizes = [8, 128], strides = [1, 1]} : vector<8x384xf32> to vector<8x128xf32>
    %201 = vector.extract_strided_slice %199 {offsets = [0, 128], sizes = [8, 128], strides = [1, 1]} : vector<8x384xf32> to vector<8x128xf32>
    %202 = vector.extract_strided_slice %199 {offsets = [0, 256], sizes = [8, 128], strides = [1, 1]} : vector<8x384xf32> to vector<8x128xf32>
    %203 = vector.extract_strided_slice %193 {offsets = [0, 384], sizes = [8, 128], strides = [1, 1]} : vector<8x512xf32> to vector<8x128xf32>
    %204 = math.tanh %203 : vector<8x128xf32>
    %205 = arith.mulf %201, %188 : vector<8x128xf32>
    %206 = arith.mulf %200, %204 : vector<8x128xf32>
    %207 = arith.addf %205, %206 : vector<8x128xf32>
    %208 = math.tanh %207 : vector<8x128xf32>
    %209 = arith.mulf %202, %208 : vector<8x128xf32>
    %c0_105 = arith.constant 0 : index
    %c0_106 = arith.constant 0 : index
    %210 = vector.load %arg7[%c0_105, %c0_106] : memref<8x128xf32, #tpu.memory_space<vmem>>, vector<8x128xf32>
    tpu.vector_store %arg7[%c0_105, %c0_106], %209 {strides = array<i32>} : memref<8x128xf32, #tpu.memory_space<vmem>>, vector<8x128xf32>,
    %c0_107 = arith.constant 0 : index
    %c0_108 = arith.constant 0 : index
    %211 = vector.load %arg8[%c0_107, %c0_108] : memref<8x128xf32, #tpu.memory_space<vmem>>, vector<8x128xf32>
    tpu.vector_store %arg8[%c0_107, %c0_108], %207 {strides = array<i32>} : memref<8x128xf32, #tpu.memory_space<vmem>>, vector<8x128xf32>,
    %212 = arith.index_cast %c6_i32 : i32 to index
    %c0_109 = arith.constant 0 : index
    %c0_110 = arith.constant 0 : index
    %213 = vector.load %arg6[%212, %c0_109, %c0_110] : memref<8x8x128xf32, #tpu.memory_space<vmem>>, vector<1x8x128xf32>
    %214 = vector.shape_cast %213 : vector<1x8x128xf32> to vector<8x128xf32>
    %215 = vector.shape_cast %209 : vector<8x128xf32> to vector<1x8x128xf32>
    tpu.vector_store %arg6[%212, %c0_109, %c0_110], %215 {strides = array<i32>} : memref<8x8x128xf32, #tpu.memory_space<vmem>>, vector<1x8x128xf32>,
    %c7_i32 = arith.constant 7 : i32
    %c0_111 = arith.constant 0 : index
    %c0_112 = arith.constant 0 : index
    %216 = vector.load %arg7[%c0_111, %c0_112] : memref<8x128xf32, #tpu.memory_space<vmem>>, vector<8x128xf32>
    %c0_113 = arith.constant 0 : index
    %c0_114 = arith.constant 0 : index
    %217 = vector.load %arg8[%c0_113, %c0_114] : memref<8x128xf32, #tpu.memory_space<vmem>>, vector<8x128xf32>
    %218 = arith.index_cast %c7_i32 : i32 to index
    %c0_115 = arith.constant 0 : index
    %c0_116 = arith.constant 0 : index
    %219 = vector.load %arg9[%218, %c0_115, %c0_116] : memref<8x8x512xf32, #tpu.memory_space<vmem>>, vector<1x8x512xf32>
    %220 = vector.shape_cast %219 : vector<1x8x512xf32> to vector<8x512xf32>
    %cst_117 = arith.constant dense<0.000000e+00> : vector<8x512xf32>
    %221 = tpu.matmul %216, %12, %cst_117 {dimension_numbers = #tpu.dot_dimension_numbers<[1], [0], [0], [1], [0, 0, 1, 1], [], []>} : vector<8x128xf32>, vector<128x512xf32>, vector<8x512xf32> -> vector<8x512xf32>
    %222 = arith.addf %220, %221 : vector<8x512xf32>
    %223 = vector.extract_strided_slice %222 {offsets = [0, 0], sizes = [8, 384], strides = [1, 1]} : vector<8x512xf32> to vector<8x384xf32>
    %224 = arith.negf %223 : vector<8x384xf32>
    %225 = math.exp %224 : vector<8x384xf32>
    %cst_118 = arith.constant 1.000000e+00 : f32
    %226 = vector.broadcast %cst_118 : f32 to vector<8x384xf32>
    %227 = arith.addf %226, %225 : vector<8x384xf32>
    %228 = arith.divf %226, %227 : vector<8x384xf32>
    %229 = vector.extract_strided_slice %228 {offsets = [0, 0], sizes = [8, 128], strides = [1, 1]} : vector<8x384xf32> to vector<8x128xf32>
    %230 = vector.extract_strided_slice %228 {offsets = [0, 128], sizes = [8, 128], strides = [1, 1]} : vector<8x384xf32> to vector<8x128xf32>
    %231 = vector.extract_strided_slice %228 {offsets = [0, 256], sizes = [8, 128], strides = [1, 1]} : vector<8x384xf32> to vector<8x128xf32>
    %232 = vector.extract_strided_slice %222 {offsets = [0, 384], sizes = [8, 128], strides = [1, 1]} : vector<8x512xf32> to vector<8x128xf32>
    %233 = math.tanh %232 : vector<8x128xf32>
    %234 = arith.mulf %230, %217 : vector<8x128xf32>
    %235 = arith.mulf %229, %233 : vector<8x128xf32>
    %236 = arith.addf %234, %235 : vector<8x128xf32>
    %237 = math.tanh %236 : vector<8x128xf32>
    %238 = arith.mulf %231, %237 : vector<8x128xf32>
    %c0_119 = arith.constant 0 : index
    %c0_120 = arith.constant 0 : index
    %239 = vector.load %arg7[%c0_119, %c0_120] : memref<8x128xf32, #tpu.memory_space<vmem>>, vector<8x128xf32>
    tpu.vector_store %arg7[%c0_119, %c0_120], %238 {strides = array<i32>} : memref<8x128xf32, #tpu.memory_space<vmem>>, vector<8x128xf32>,
    %c0_121 = arith.constant 0 : index
    %c0_122 = arith.constant 0 : index
    %240 = vector.load %arg8[%c0_121, %c0_122] : memref<8x128xf32, #tpu.memory_space<vmem>>, vector<8x128xf32>
    tpu.vector_store %arg8[%c0_121, %c0_122], %236 {strides = array<i32>} : memref<8x128xf32, #tpu.memory_space<vmem>>, vector<8x128xf32>,
    %241 = arith.index_cast %c7_i32 : i32 to index
    %c0_123 = arith.constant 0 : index
    %c0_124 = arith.constant 0 : index
    %242 = vector.load %arg6[%241, %c0_123, %c0_124] : memref<8x8x128xf32, #tpu.memory_space<vmem>>, vector<1x8x128xf32>
    %243 = vector.shape_cast %242 : vector<1x8x128xf32> to vector<8x128xf32>
    %244 = vector.shape_cast %238 : vector<8x128xf32> to vector<1x8x128xf32>
    tpu.vector_store %arg6[%241, %c0_123, %c0_124], %244 {strides = array<i32>} : memref<8x8x128xf32, #tpu.memory_space<vmem>>, vector<1x8x128xf32>,
    %c8_i32 = arith.constant 8 : i32
    return
  }
  func.func @transform_0(%arg0: i32, %arg1: i32) -> (i32, i32, i32) {
    %c0_i32 = arith.constant 0 : i32
    %c0_i32_0 = arith.constant 0 : i32
    return %arg1, %arg0, %c0_i32 : i32, i32, i32
  }
  func.func @transform_1(%arg0: i32, %arg1: i32) -> (i32, i32) {
    %c0_i32 = arith.constant 0 : i32
    %c0_i32_0 = arith.constant 0 : i32
    %c0_i32_1 = arith.constant 0 : i32
    return %c0_i32, %c0_i32_0 : i32, i32
  }
  func.func @transform_2(%arg0: i32, %arg1: i32) -> (i32, i32) {
    %c0_i32 = arith.constant 0 : i32
    %c0_i32_0 = arith.constant 0 : i32
    %c0_i32_1 = arith.constant 0 : i32
    return %c0_i32, %c0_i32_0 : i32, i32
  }
  func.func @transform_3(%arg0: i32, %arg1: i32) -> (i32, i32) {
    %c0_i32 = arith.constant 0 : i32
    %c0_i32_0 = arith.constant 0 : i32
    %c0_i32_1 = arith.constant 0 : i32
    return %c0_i32, %c0_i32_0 : i32, i32
  }
  func.func @transform_4(%arg0: i32, %arg1: i32) -> (i32, i32, i32) {
    %c0_i32 = arith.constant 0 : i32
    %c0_i32_0 = arith.constant 0 : i32
    return %arg1, %arg0, %c0_i32 : i32, i32, i32
  }
}

</mosaic_0001>

<llo_original>
// kernel: encoder_forward.2
$region0: #{encoder_forward.2}
  #allocation0 [shape = 'u32[]', space=smem, size = 0x4, offset = 0x4, fixed_abs, tag = 'smem constant byte address 0x4 - core index']
  #allocation1 [shape = 'u32[144,128]{1,0:T(1,128)}', space=vmem, size = 0x12000, scoped, tag = 'internal scratch']
  #allocation2 [shape = 'f32[8,128]{1,0:T(8,128)}', space=vmem, size = 0x1000, scoped, tag = 'scratch operand']
  #allocation3 [shape = 'f32[8,128]{1,0:T(8,128)}', space=vmem, size = 0x1000, scoped, tag = 'scratch operand']
  #allocation4 [shape = 'f32[8,8,512]{2,1,0:T(8,128)}', space=vmem, size = 0x20000, scoped, tag = 'scratch operand']
  %s0 = inlined_call_operand.vmem [shape: f32[8,8,128], index: 0, kind: input, shape index: {}]
  %s1 = inlined_call_operand.hbm [shape: f32[128,512], index: 1, kind: input, shape index: {}]
  %s2 = inlined_call_operand.hbm [shape: f32[128,512], index: 2, kind: input, shape index: {}]
  %s3 = inlined_call_operand.vmem [shape: f32[1,512], index: 3, kind: input, shape index: {}]
  %s4 = inlined_call_operand.vmem [shape: f32[8,8,128], index: 4, kind: output, shape index: {}]
  %s5 = sld [smem:[#allocation0]]
  $region38: #{encoder_forward.2} parent=0
    _
  %s7 = ssub.s32 1, %s5
  %s8 = scalar_select 0, %s7, %s5
  $region1: #{encoder_forward.2} parent=0
    #allocation5 [shape = 'u8[262144]{0}', space=vmem, size = 0x40000, scoped, tag = 'input window, operand 1, single buffered']
    #allocation6 [shape = 's32[1]{0}', space=sflag, size = 0x4, scoped, tag = 'scoped memory for encoder_forward.2']
    #allocation7 [shape = 'u8[262144]{0}', space=vmem, size = 0x40000, scoped, tag = 'input window, operand 2, single buffered']
    #allocation8 [shape = 's32[1]{0}', space=sflag, size = 0x4, scoped, tag = 'scoped memory for encoder_forward.2']
    %9 = vsyncpa [#allocation6], 0
    %10 = vsyncpa [#allocation8], 0
    // Predicated region
    $region2: #{encoder_forward.2} parent=1 // pred_check
      _
    $region3: #{encoder_forward.2} parent=1 // pred_check_branch
      %12 = sbr.rel (0) target = $region5
    $region4: #{encoder_forward.2} parent=1 // pred_region
      _
    $region5: #{encoder_forward.2} parent=1 // pred_fallthru
      _
    // Predicated region
    $region6: #{encoder_forward.2} parent=1 // pred_check
      _
    $region7: #{encoder_forward.2} parent=1 // pred_check_branch
      %14 = sbr.rel (0) target = $region9
    $region8: #{encoder_forward.2} parent=1 // pred_region
      %s16 = ssub.s32 8192, 8192
      %17 = vsyncadd [#allocation6], %s16
      %s18 = sshll.u32 [#allocation5], 4
      %s19 = int_to_ptr.vmem [resolvable:$true] %s18
      %24 = dma.hbm_to_vmem [thread:$0]  %s1, 8192, %s19, [#allocation6], 512, 512, 32
    $region9: #{encoder_forward.2} parent=1 // pred_fallthru
      _
    // Predicated region
    $region10: #{encoder_forward.2} parent=1 // pred_check
      _
    $region11: #{encoder_forward.2} parent=1 // pred_check_branch
      %26 = sbr.rel (0) target = $region13
    $region12: #{encoder_forward.2} parent=1 // pred_region
      %s28 = ssub.s32 8192, 8192
      %29 = vsyncadd [#allocation8], %s28
      %s30 = sshll.u32 [#allocation7], 4
      %s31 = int_to_ptr.vmem [resolvable:$true] %s30
      %36 = dma.hbm_to_vmem [thread:$0]  %s2, 8192, %s31, [#allocation8], 512, 512, 32
    $region13: #{encoder_forward.2} parent=1 // pred_fallthru
      _
    // Predicated region
    $region14: #{encoder_forward.2} parent=1 // pred_check
      _
    $region15: #{encoder_forward.2} parent=1 // pred_check_branch
      %38 = sbr.rel (0) target = $region17
    $region16: #{encoder_forward.2} parent=1 // pred_region
      _
    $region17: #{encoder_forward.2} parent=1 // pred_fallthru
      _
    // Predicated region
    $region18: #{encoder_forward.2} parent=1 // pred_check
      _
    $region19: #{encoder_forward.2} parent=1 // pred_check_branch
      %40 = sbr.rel (0) target = $region21
    $region20: #{encoder_forward.2} parent=1 // pred_region
      %41 = dma.done [#allocation6], 8192
    $region21: #{encoder_forward.2} parent=1 // pred_fallthru
      _
    // Predicated region
    $region22: #{encoder_forward.2} parent=1 // pred_check
      _
    $region23: #{encoder_forward.2} parent=1 // pred_check_branch
      %43 = sbr.rel (0) target = $region25
    $region24: #{encoder_forward.2} parent=1 // pred_region
      %44 = dma.done [#allocation8], 8192
    $region25: #{encoder_forward.2} parent=1 // pred_fallthru
      _
    %p45 = scmp.eq.s32.totalorder 0, 0
    // Predicated region
    $region26: #{encoder_forward.2} parent=1 // pred_check
      %p46 = pneg %p45
    $region27: #{encoder_forward.2} parent=1 // pred_check_branch
      %48 = sbr.rel (%p46) target = $region29
    $region28: #{encoder_forward.2} parent=1 // pred_region
      %49 = vst [vmem:[#allocation2] sm:$0xff] 0.0
      %50 = vst [vmem:[#allocation3] sm:$0xff] 0.0
    $region29: #{encoder_forward.2} parent=1 // pred_fallthru
      _
    %v51 = vld [vmem:[%s0] sm:$0xff]
    %v52 = vld [vmem:[%s0 + $0x8] sm:$0xff]
    %v53 = vld [vmem:[%s0 + $0x10] sm:$0xff]
    %v54 = vld [vmem:[%s0 + $0x18] sm:$0xff]
    %v55 = vld [vmem:[%s0 + $0x20] sm:$0xff]
    %v56 = vld [vmem:[%s0 + $0x28] sm:$0xff]
    %v57 = vld [vmem:[%s0 + $0x30] sm:$0xff]
    %v58 = vld [vmem:[%s0 + $0x38] sm:$0xff]
    %v59 = vld [vmem:[#allocation5] sm:$0xff]
    %v60 = vld [vmem:[#allocation5 + $0x8] sm:$0xff]
    %v61 = vld [vmem:[#allocation5 + $0x10] sm:$0xff]
    %v62 = vld [vmem:[#allocation5 + $0x18] sm:$0xff]
    %v63 = vld [vmem:[#allocation5 + $0x20] sm:$0xff]
    %v64 = vld [vmem:[#allocation5 + $0x28] sm:$0xff]
    %v65 = vld [vmem:[#allocation5 + $0x30] sm:$0xff]
    %v66 = vld [vmem:[#allocation5 + $0x38] sm:$0xff]
    %v67 = vld [vmem:[#allocation5 + $0x40] sm:$0xff]
    %v68 = vld [vmem:[#allocation5 + $0x48] sm:$0xff]
    %v69 = vld [vmem:[#allocation5 + $0x50] sm:$0xff]
    %v70 = vld [vmem:[#allocation5 + $0x58] sm:$0xff]
    %v71 = vld [vmem:[#allocation5 + $0x60] sm:$0xff]
    %v72 = vld [vmem:[#allocation5 + $0x68] sm:$0xff]
    %v73 = vld [vmem:[#allocation5 + $0x70] sm:$0xff]
    %v74 = vld [vmem:[#allocation5 + $0x78] sm:$0xff]
    %v75 = vld [vmem:[#allocation5 + $0x80] sm:$0xff]
    %v76 = vld [vmem:[#allocation5 + $0x88] sm:$0xff]
    %v77 = vld [vmem:[#allocation5 + $0x90] sm:$0xff]
    %v78 = vld [vmem:[#allocation5 + $0x98] sm:$0xff]
    %v79 = vld [vmem:[#allocation5 + $0xa0] sm:$0xff]
    %v80 = vld [vmem:[#allocation5 + $0xa8] sm:$0xff]
    %v81 = vld [vmem:[#allocation5 + $0xb0] sm:$0xff]
    %v82 = vld [vmem:[#allocation5 + $0xb8] sm:$0xff]
    %v83 = vld [vmem:[#allocation5 + $0xc0] sm:$0xff]
    %v84 = vld [vmem:[#allocation5 + $0xc8] sm:$0xff]
    %v85 = vld [vmem:[#allocation5 + $0xd0] sm:$0xff]
    %v86 = vld [vmem:[#allocation5 + $0xd8] sm:$0xff]
    %v87 = vld [vmem:[#allocation5 + $0xe0] sm:$0xff]
    %v88 = vld [vmem:[#allocation5 + $0xe8] sm:$0xff]
    %v89 = vld [vmem:[#allocation5 + $0xf0] sm:$0xff]
    %v90 = vld [vmem:[#allocation5 + $0xf8] sm:$0xff]
    %v91 = vld [vmem:[#allocation5 + $0x100] sm:$0xff]
    %v92 = vld [vmem:[#allocation5 + $0x108] sm:$0xff]
    %v93 = vld [vmem:[#allocation5 + $0x110] sm:$0xff]
    %v94 = vld [vmem:[#allocation5 + $0x118] sm:$0xff]
    %v95 = vld [vmem:[#allocation5 + $0x120] sm:$0xff]
    %v96 = vld [vmem:[#allocation5 + $0x128] sm:$0xff]
    %v97 = vld [vmem:[#allocation5 + $0x130] sm:$0xff]
    %v98 = vld [vmem:[#allocation5 + $0x138] sm:$0xff]
    %v99 = vld [vmem:[#allocation5 + $0x140] sm:$0xff]
    %v100 = vld [vmem:[#allocation5 + $0x148] sm:$0xff]
    %v101 = vld [vmem:[#allocation5 + $0x150] sm:$0xff]
    %v102 = vld [vmem:[#allocation5 + $0x158] sm:$0xff]
    %v103 = vld [vmem:[#allocation5 + $0x160] sm:$0xff]
    %v104 = vld [vmem:[#allocation5 + $0x168] sm:$0xff]
    %v105 = vld [vmem:[#allocation5 + $0x170] sm:$0xff]
    %v106 = vld [vmem:[#allocation5 + $0x178] sm:$0xff]
    %v107 = vld [vmem:[#allocation5 + $0x180] sm:$0xff]
    %v108 = vld [vmem:[#allocation5 + $0x188] sm:$0xff]
    %v109 = vld [vmem:[#allocation5 + $0x190] sm:$0xff]
    %v110 = vld [vmem:[#allocation5 + $0x198] sm:$0xff]
    %v111 = vld [vmem:[#allocation5 + $0x1a0] sm:$0xff]
    %v112 = vld [vmem:[#allocation5 + $0x1a8] sm:$0xff]
    %v113 = vld [vmem:[#allocation5 + $0x1b0] sm:$0xff]
    %v114 = vld [vmem:[#allocation5 + $0x1b8] sm:$0xff]
    %v115 = vld [vmem:[#allocation5 + $0x1c0] sm:$0xff]
    %v116 = vld [vmem:[#allocation5 + $0x1c8] sm:$0xff]
    %v117 = vld [vmem:[#allocation5 + $0x1d0] sm:$0xff]
    %v118 = vld [vmem:[#allocation5 + $0x1d8] sm:$0xff]
    %v119 = vld [vmem:[#allocation5 + $0x1e0] sm:$0xff]
    %v120 = vld [vmem:[#allocation5 + $0x1e8] sm:$0xff]
    %v121 = vld [vmem:[#allocation5 + $0x1f0] sm:$0xff]
    %v122 = vld [vmem:[#allocation5 + $0x1f8] sm:$0xff]
    %v123 = vld [vmem:[%s3] sm:$0xf]
    %v125 = vlaneseq
    %v126 = vshrl.u32 %v125, 7
    %v127 = vsub.s32 0, %v126
    %v128 = vrot.slane %v123, %v127
    %v129 = vlaneseq
    %v130 = vshrl.u32 %v129, 7
    %v131 = vsub.s32 1, %v130
    %v132 = vrot.slane %v123, %v131
    %v133 = vlaneseq
    %v134 = vshrl.u32 %v133, 7
    %v135 = vsub.s32 2, %v134
    %v136 = vrot.slane %v123, %v135
    %v137 = vlaneseq
    %v138 = vshrl.u32 %v137, 7
    %v139 = vsub.s32 3, %v138
    %v140 = vrot.slane %v123, %v139
    %145 = vmatprep.subr.mxu0 %v60
    %146 = vmatpush1.msra.mxu0 %v59
    %147 = vmatprep.subr.mxu0 %v64
    %148 = vmatpush1.msra.mxu0 %v63
    %149 = vmatprep.subr.mxu0 %v68
    %150 = vmatpush1.msra.mxu0 %v67
    %151 = vmatprep.subr.mxu0 %v72
    %152 = vmatpush1.msra.mxu0 %v71
    %153 = vmatprep.subr.mxu0 %v76
    %154 = vmatpush1.msra.mxu0 %v75
    %155 = vmatprep.subr.mxu0 %v80
    %156 = vmatpush1.msra.mxu0 %v79
    %157 = vmatprep.subr.mxu0 %v84
    %158 = vmatpush1.msra.mxu0 %v83
    %159 = vmatprep.subr.mxu0 %v88
    %160 = vmatpush1.msra.mxu0 %v87
    %161 = vmatprep.subr.mxu0 %v92
    %162 = vmatpush1.msra.mxu0 %v91
    %163 = vmatprep.subr.mxu0 %v96
    %164 = vmatpush1.msra.mxu0 %v95
    %165 = vmatprep.subr.mxu0 %v100
    %166 = vmatpush1.msra.mxu0 %v99
    %167 = vmatprep.subr.mxu0 %v104
    %168 = vmatpush1.msra.mxu0 %v103
    %169 = vmatprep.subr.mxu0 %v108
    %170 = vmatpush1.msra.mxu0 %v107
    %171 = vmatprep.subr.mxu0 %v112
    %172 = vmatpush1.msra.mxu0 %v111
    %173 = vmatprep.subr.mxu0 %v116
    %174 = vmatpush1.msra.mxu0 %v115
    %175 = vmatprep.subr.mxu0 %v120
    %176 = vmatpush1.msra.mxu0 %v119
    %177 = vmatprep.subr.mxu0 0.0
    %178 = vmatpush1.msra.mxu0 0.0
    %179 = vmatprep.subr.mxu0 0.0
    %180 = vmatpush1.msra.mxu0 0.0
    %181 = vmatprep.subr.mxu0 0.0
    %182 = vmatpush1.msra.mxu0 0.0
    %183 = vmatprep.subr.mxu0 0.0
    %184 = vmatpush1.msra.mxu0 0.0
    %185 = vmatprep.subr.mxu0 0.0
    %186 = vmatpush1.msra.mxu0 0.0
    %187 = vmatprep.subr.mxu0 0.0
    %188 = vmatpush1.msra.mxu0 0.0
    %189 = vmatprep.subr.mxu0 0.0
    %190 = vmatpush1.msra.mxu0 0.0
    %191 = vmatprep.subr.mxu0 0.0
    %192 = vmatpush1.msra.mxu0 0.0
    %193 = vmatprep.subr.mxu0 0.0
    %194 = vmatpush1.msra.mxu0 0.0
    %195 = vmatprep.subr.mxu0 0.0
    %196 = vmatpush1.msra.mxu0 0.0
    %197 = vmatprep.subr.mxu0 0.0
    %198 = vmatpush1.msra.mxu0 0.0
    %199 = vmatprep.subr.mxu0 0.0
    %200 = vmatpush1.msra.mxu0 0.0
    %201 = vmatprep.subr.mxu0 0.0
    %202 = vmatpush1.msra.mxu0 0.0
    %203 = vmatprep.subr.mxu0 0.0
    %204 = vmatpush1.msra.mxu0 0.0
    %205 = vmatprep.subr.mxu0 0.0
    %206 = vmatpush1.msra.mxu0 0.0
    %207 = vmatprep.subr.mxu0 0.0
    %208 = vmatpush1.msra.mxu0 0.0
    %209 = vmatprep.mubr.f32.mxu0 0.0
    %210 = vmatmul.mubr.f32.gmra.mrb[0].mxu0 %v51
    %v211 = vpop.f32.mrb[0].mxu0
    %v212 = vadd.f32 %v128, %v211
    %v213 = vpop.f32.mrb[0].mxu0
    %v214 = vadd.f32 %v132, %v213
    %215 = vmatprep.mubr.f32.mxu0 0.0
    %216 = vmatmul.mubr.f32.gmra.mrb[0].mxu0 %v52
    %v217 = vpop.f32.mrb[0].mxu0
    %v218 = vadd.f32 %v128, %v217
    %v219 = vpop.f32.mrb[0].mxu0
    %v220 = vadd.f32 %v132, %v219
    %221 = vmatprep.mubr.f32.mxu0 0.0
    %222 = vmatmul.mubr.f32.gmra.mrb[0].mxu0 %v53
    %v223 = vpop.f32.mrb[0].mxu0
    %v224 = vadd.f32 %v128, %v223
    %v225 = vpop.f32.mrb[0].mxu0
    %v226 = vadd.f32 %v132, %v225
    %227 = vmatprep.mubr.f32.mxu0 0.0
    %228 = vmatmul.mubr.f32.gmra.mrb[0].mxu0 %v54
    %v229 = vpop.f32.mrb[0].mxu0
    %v230 = vadd.f32 %v128, %v229
    %v231 = vpop.f32.mrb[0].mxu0
    %v232 = vadd.f32 %v132, %v231
    %233 = vmatprep.mubr.f32.mxu0 0.0
    %234 = vmatmul.mubr.f32.gmra.mrb[0].mxu0 %v55
    %v235 = vpop.f32.mrb[0].mxu0
    %v236 = vadd.f32 %v128, %v235
    %v237 = vpop.f32.mrb[0].mxu0
    %v238 = vadd.f32 %v132, %v237
    %239 = vmatprep.mubr.f32.mxu0 0.0
    %240 = vmatmul.mubr.f32.gmra.mrb[0].mxu0 %v56
    %v241 = vpop.f32.mrb[0].mxu0
    %v242 = vadd.f32 %v128, %v241
    %v243 = vpop.f32.mrb[0].mxu0
    %v244 = vadd.f32 %v132, %v243
    %245 = vmatprep.mubr.f32.mxu0 0.0
    %246 = vmatmul.mubr.f32.gmra.mrb[0].mxu0 %v57
    %v247 = vpop.f32.mrb[0].mxu0
    %v248 = vadd.f32 %v128, %v247
    %v249 = vpop.f32.mrb[0].mxu0
    %v250 = vadd.f32 %v132, %v249
    %251 = vmatprep.mubr.f32.mxu0 0.0
    %252 = vmatmul.mubr.f32.gmra.mrb[0].mxu0 %v58
    %v253 = vpop.f32.mrb[0].mxu0
    %v254 = vadd.f32 %v128, %v253
    %v255 = vpop.f32.mrb[0].mxu0
    %v256 = vadd.f32 %v132, %v255
    %257 = vdwg.mxu0
    %258 = vmatprep.subr.mxu0 %v62
    %259 = vmatpush1.msra.mxu0 %v61
    %260 = vmatprep.subr.mxu0 %v66
    %261 = vmatpush1.msra.mxu0 %v65
    %262 = vmatprep.subr.mxu0 %v70
    %263 = vmatpush1.msra.mxu0 %v69
    %264 = vmatprep.subr.mxu0 %v74
    %265 = vmatpush1.msra.mxu0 %v73
    %266 = vmatprep.subr.mxu0 %v78
    %267 = vmatpush1.msra.mxu0 %v77
    %268 = vmatprep.subr.mxu0 %v82
    %269 = vmatpush1.msra.mxu0 %v81
    %270 = vmatprep.subr.mxu0 %v86
    %271 = vmatpush1.msra.mxu0 %v85
    %272 = vmatprep.subr.mxu0 %v90
    %273 = vmatpush1.msra.mxu0 %v89
    %274 = vmatprep.subr.mxu0 %v94
    %275 = vmatpush1.msra.mxu0 %v93
    %276 = vmatprep.subr.mxu0 %v98
    %277 = vmatpush1.msra.mxu0 %v97
    %278 = vmatprep.subr.mxu0 %v102
    %279 = vmatpush1.msra.mxu0 %v101
    %280 = vmatprep.subr.mxu0 %v106
    %281 = vmatpush1.msra.mxu0 %v105
    %282 = vmatprep.subr.mxu0 %v110
    %283 = vmatpush1.msra.mxu0 %v109
    %284 = vmatprep.subr.mxu0 %v114
    %285 = vmatpush1.msra.mxu0 %v113
    %286 = vmatprep.subr.mxu0 %v118
    %287 = vmatpush1.msra.mxu0 %v117
    %288 = vmatprep.subr.mxu0 %v122
    %289 = vmatpush1.msra.mxu0 %v121
    %290 = vmatprep.subr.mxu0 0.0
    %291 = vmatpush1.msra.mxu0 0.0
    %292 = vmatprep.subr.mxu0 0.0
    %293 = vmatpush1.msra.mxu0 0.0
    %294 = vmatprep.subr.mxu0 0.0
    %295 = vmatpush1.msra.mxu0 0.0
    %296 = vmatprep.subr.mxu0 0.0
    %297 = vmatpush1.msra.mxu0 0.0
    %298 = vmatprep.subr.mxu0 0.0
    %299 = vmatpush1.msra.mxu0 0.0
    %300 = vmatprep.subr.mxu0 0.0
    %301 = vmatpush1.msra.mxu0 0.0
    %302 = vmatprep.subr.mxu0 0.0
    %303 = vmatpush1.msra.mxu0 0.0
    %304 = vmatprep.subr.mxu0 0.0
    %305 = vmatpush1.msra.mxu0 0.0
    %306 = vmatprep.subr.mxu0 0.0
    %307 = vmatpush1.msra.mxu0 0.0
    %308 = vmatprep.subr.mxu0 0.0
    %309 = vmatpush1.msra.mxu0 0.0
    %310 = vmatprep.subr.mxu0 0.0
    %311 = vmatpush1.msra.mxu0 0.0
    %312 = vmatprep.subr.mxu0 0.0
    %313 = vmatpush1.msra.mxu0 0.0
    %314 = vmatprep.subr.mxu0 0.0
    %315 = vmatpush1.msra.mxu0 0.0
    %316 = vmatprep.subr.mxu0 0.0
    %317 = vmatpush1.msra.mxu0 0.0
    %318 = vmatprep.subr.mxu0 0.0
    %319 = vmatpush1.msra.mxu0 0.0
    %320 = vmatprep.subr.mxu0 0.0
    %321 = vmatpush1.msra.mxu0 0.0
    %322 = vmatprep.mubr.f32.mxu0 0.0
    %323 = vmatmul.mubr.f32.gmra.mrb[0].mxu0 %v51
    %v324 = vpop.f32.mrb[0].mxu0
    %v325 = vadd.f32 %v136, %v324
    %v326 = vpop.f32.mrb[0].mxu0
    %v327 = vadd.f32 %v140, %v326
    %328 = vmatprep.mubr.f32.mxu0 0.0
    %329 = vmatmul.mubr.f32.gmra.mrb[0].mxu0 %v52
    %v330 = vpop.f32.mrb[0].mxu0
    %v331 = vadd.f32 %v136, %v330
    %v332 = vpop.f32.mrb[0].mxu0
    %v333 = vadd.f32 %v140, %v332
    %334 = vmatprep.mubr.f32.mxu0 0.0
    %335 = vmatmul.mubr.f32.gmra.mrb[0].mxu0 %v53
    %v336 = vpop.f32.mrb[0].mxu0
    %v337 = vadd.f32 %v136, %v336
    %v338 = vpop.f32.mrb[0].mxu0
    %v339 = vadd.f32 %v140, %v338
    %340 = vmatprep.mubr.f32.mxu0 0.0
    %341 = vmatmul.mubr.f32.gmra.mrb[0].mxu0 %v54
    %v342 = vpop.f32.mrb[0].mxu0
    %v343 = vadd.f32 %v136, %v342
    %v344 = vpop.f32.mrb[0].mxu0
    %v345 = vadd.f32 %v140, %v344
    %346 = vmatprep.mubr.f32.mxu0 0.0
    %347 = vmatmul.mubr.f32.gmra.mrb[0].mxu0 %v55
    %v348 = vpop.f32.mrb[0].mxu0
    %v349 = vadd.f32 %v136, %v348
    %v350 = vpop.f32.mrb[0].mxu0
    %v351 = vadd.f32 %v140, %v350
    %352 = vmatprep.mubr.f32.mxu0 0.0
    %353 = vmatmul.mubr.f32.gmra.mrb[0].mxu0 %v56
    %v354 = vpop.f32.mrb[0].mxu0
    %v355 = vadd.f32 %v136, %v354
    %v356 = vpop.f32.mrb[0].mxu0
    %v357 = vadd.f32 %v140, %v356
    %358 = vmatprep.mubr.f32.mxu0 0.0
    %359 = vmatmul.mubr.f32.gmra.mrb[0].mxu0 %v57
    %v360 = vpop.f32.mrb[0].mxu0
    %v361 = vadd.f32 %v136, %v360
    %v362 = vpop.f32.mrb[0].mxu0
    %v363 = vadd.f32 %v140, %v362
    %364 = vmatprep.mubr.f32.mxu0 0.0
    %365 = vmatmul.mubr.f32.gmra.mrb[0].mxu0 %v58
    %v366 = vpop.f32.mrb[0].mxu0
    %v367 = vadd.f32 %v136, %v366
    %v368 = vpop.f32.mrb[0].mxu0
    %v369 = vadd.f32 %v140, %v368
    %370 = vdwg.mxu0
    %371 = vst [vmem:[#allocation4] sm:$0xff] %v212
    %372 = vst [vmem:[#allocation4 + $0x8] sm:$0xff] %v214
    %373 = vst [vmem:[#allocation4 + $0x10] sm:$0xff] %v325
    %374 = vst [vmem:[#allocation4 + $0x18] sm:$0xff] %v327
    %375 = vst [vmem:[#allocation4 + $0x20] sm:$0xff] %v218
    %376 = vst [vmem:[#allocation4 + $0x28] sm:$0xff] %v220
    %377 = vst [vmem:[#allocation4 + $0x30] sm:$0xff] %v331
    %378 = vst [vmem:[#allocation4 + $0x38] sm:$0xff] %v333
    %379 = vst [vmem:[#allocation4 + $0x40] sm:$0xff] %v224
    %380 = vst [vmem:[#allocation4 + $0x48] sm:$0xff] %v226
    %381 = vst [vmem:[#allocation4 + $0x50] sm:$0xff] %v337
    %382 = vst [vmem:[#allocation4 + $0x58] sm:$0xff] %v339
    %383 = vst [vmem:[#allocation4 + $0x60] sm:$0xff] %v230
    %384 = vst [vmem:[#allocation4 + $0x68] sm:$0xff] %v232
    %385 = vst [vmem:[#allocation4 + $0x70] sm:$0xff] %v343
    %386 = vst [vmem:[#allocation4 + $0x78] sm:$0xff] %v345
    %387 = vst [vmem:[#allocation4 + $0x80] sm:$0xff] %v236
    %388 = vst [vmem:[#allocation4 + $0x88] sm:$0xff] %v238
    %389 = vst [vmem:[#allocation4 + $0x90] sm:$0xff] %v349
    %390 = vst [vmem:[#allocation4 + $0x98] sm:$0xff] %v351
    %391 = vst [vmem:[#allocation4 + $0xa0] sm:$0xff] %v242
    %392 = vst [vmem:[#allocation4 + $0xa8] sm:$0xff] %v244
    %393 = vst [vmem:[#allocation4 + $0xb0] sm:$0xff] %v355
    %394 = vst [vmem:[#allocation4 + $0xb8] sm:$0xff] %v357
    %395 = vst [vmem:[#allocation4 + $0xc0] sm:$0xff] %v248
    %396 = vst [vmem:[#allocation4 + $0xc8] sm:$0xff] %v250
    %397 = vst [vmem:[#allocation4 + $0xd0] sm:$0xff] %v361
    %398 = vst [vmem:[#allocation4 + $0xd8] sm:$0xff] %v363
    %399 = vst [vmem:[#allocation4 + $0xe0] sm:$0xff] %v254
    %400 = vst [vmem:[#allocation4 + $0xe8] sm:$0xff] %v256
    %401 = vst [vmem:[#allocation4 + $0xf0] sm:$0xff] %v367
    %402 = vst [vmem:[#allocation4 + $0xf8] sm:$0xff] %v369
    %v403 = vld [vmem:[#allocation7] sm:$0xff]
    %v404 = vld [vmem:[#allocation7 + $0x8] sm:$0xff]
    %v405 = vld [vmem:[#allocation7 + $0x10] sm:$0xff]
    %v406 = vld [vmem:[#allocation7 + $0x18] sm:$0xff]
    %v407 = vld [vmem:[#allocation7 + $0x20] sm:$0xff]
    %v408 = vld [vmem:[#allocation7 + $0x28] sm:$0xff]
    %v409 = vld [vmem:[#allocation7 + $0x30] sm:$0xff]
    %v410 = vld [vmem:[#allocation7 + $0x38] sm:$0xff]
    %v411 = vld [vmem:[#allocation7 + $0x40] sm:$0xff]
    %v412 = vld [vmem:[#allocation7 + $0x48] sm:$0xff]
    %v413 = vld [vmem:[#allocation7 + $0x50] sm:$0xff]
    %v414 = vld [vmem:[#allocation7 + $0x58] sm:$0xff]
    %v415 = vld [vmem:[#allocation7 + $0x60] sm:$0xff]
    %v416 = vld [vmem:[#allocation7 + $0x68] sm:$0xff]
    %v417 = vld [vmem:[#allocation7 + $0x70] sm:$0xff]
    %v418 = vld [vmem:[#allocation7 + $0x78] sm:$0xff]
    %v419 = vld [vmem:[#allocation7 + $0x80] sm:$0xff]
    %v420 = vld [vmem:[#allocation7 + $0x88] sm:$0xff]
    %v421 = vld [vmem:[#allocation7 + $0x90] sm:$0xff]
    %v422 = vld [vmem:[#allocation7 + $0x98] sm:$0xff]
    %v423 = vld [vmem:[#allocation7 + $0xa0] sm:$0xff]
    %v424 = vld [vmem:[#allocation7 + $0xa8] sm:$0xff]
    %v425 = vld [vmem:[#allocation7 + $0xb0] sm:$0xff]
    %v426 = vld [vmem:[#allocation7 + $0xb8] sm:$0xff]
    %v427 = vld [vmem:[#allocation7 + $0xc0] sm:$0xff]
    %v428 = vld [vmem:[#allocation7 + $0xc8] sm:$0xff]
    %v429 = vld [vmem:[#allocation7 + $0xd0] sm:$0xff]
    %v430 = vld [vmem:[#allocation7 + $0xd8] sm:$0xff]
    %v431 = vld [vmem:[#allocation7 + $0xe0] sm:$0xff]
    %v432 = vld [vmem:[#allocation7 + $0xe8] sm:$0xff]
    %v433 = vld [vmem:[#allocation7 + $0xf0] sm:$0xff]
    %v434 = vld [vmem:[#allocation7 + $0xf8] sm:$0xff]
    %v435 = vld [vmem:[#allocation7 + $0x100] sm:$0xff]
    %v436 = vld [vmem:[#allocation7 + $0x108] sm:$0xff]
    %v437 = vld [vmem:[#allocation7 + $0x110] sm:$0xff]
    %v438 = vld [vmem:[#allocation7 + $0x118] sm:$0xff]
    %v439 = vld [vmem:[#allocation7 + $0x120] sm:$0xff]
    %v440 = vld [vmem:[#allocation7 + $0x128] sm:$0xff]
    %v441 = vld [vmem:[#allocation7 + $0x130] sm:$0xff]
    %v442 = vld [vmem:[#allocation7 + $0x138] sm:$0xff]
    %v443 = vld [vmem:[#allocation7 + $0x140] sm:$0xff]
    %v444 = vld [vmem:[#allocation7 + $0x148] sm:$0xff]
    %v445 = vld [vmem:[#allocation7 + $0x150] sm:$0xff]
    %v446 = vld [vmem:[#allocation7 + $0x158] sm:$0xff]
    %v447 = vld [vmem:[#allocation7 + $0x160] sm:$0xff]
    %v448 = vld [vmem:[#allocation7 + $0x168] sm:$0xff]
    %v449 = vld [vmem:[#allocation7 + $0x170] sm:$0xff]
    %v450 = vld [vmem:[#allocation7 + $0x178] sm:$0xff]
    %v451 = vld [vmem:[#allocation7 + $0x180] sm:$0xff]
    %v452 = vld [vmem:[#allocation7 + $0x188] sm:$0xff]
    %v453 = vld [vmem:[#allocation7 + $0x190] sm:$0xff]
    %v454 = vld [vmem:[#allocation7 + $0x198] sm:$0xff]
    %v455 = vld [vmem:[#allocation7 + $0x1a0] sm:$0xff]
    %v456 = vld [vmem:[#allocation7 + $0x1a8] sm:$0xff]
    %v457 = vld [vmem:[#allocation7 + $0x1b0] sm:$0xff]
    %v458 = vld [vmem:[#allocation7 + $0x1b8] sm:$0xff]
    %v459 = vld [vmem:[#allocation7 + $0x1c0] sm:$0xff]
    %v460 = vld [vmem:[#allocation7 + $0x1c8] sm:$0xff]
    %v461 = vld [vmem:[#allocation7 + $0x1d0] sm:$0xff]
    %v462 = vld [vmem:[#allocation7 + $0x1d8] sm:$0xff]
    %v463 = vld [vmem:[#allocation7 + $0x1e0] sm:$0xff]
    %v464 = vld [vmem:[#allocation7 + $0x1e8] sm:$0xff]
    %v465 = vld [vmem:[#allocation7 + $0x1f0] sm:$0xff]
    %v466 = vld [vmem:[#allocation7 + $0x1f8] sm:$0xff]
    %v467 = vld [vmem:[#allocation2] sm:$0xff]
    %v468 = vld [vmem:[#allocation3] sm:$0xff]
    %v469 = vld [vmem:[#allocation4] sm:$0xff]
    %v470 = vld [vmem:[#allocation4 + $0x8] sm:$0xff]
    %v471 = vld [vmem:[#allocation4 + $0x10] sm:$0xff]
    %v472 = vld [vmem:[#allocation4 + $0x18] sm:$0xff]
    %473 = vmatprep.subr.mxu0 %v404
    %474 = vmatpush1.msra.mxu0 %v403
    %475 = vmatprep.subr.mxu0 %v408
    %476 = vmatpush1.msra.mxu0 %v407
    %477 = vmatprep.subr.mxu0 %v412
    %478 = vmatpush1.msra.mxu0 %v411
    %479 = vmatprep.subr.mxu0 %v416
    %480 = vmatpush1.msra.mxu0 %v415
    %481 = vmatprep.subr.mxu0 %v420
    %482 = vmatpush1.msra.mxu0 %v419
    %483 = vmatprep.subr.mxu0 %v424
    %484 = vmatpush1.msra.mxu0 %v423
    %485 = vmatprep.subr.mxu0 %v428
    %486 = vmatpush1.msra.mxu0 %v427
    %487 = vmatprep.subr.mxu0 %v432
    %488 = vmatpush1.msra.mxu0 %v431
    %489 = vmatprep.subr.mxu0 %v436
    %490 = vmatpush1.msra.mxu0 %v435
    %491 = vmatprep.subr.mxu0 %v440
    %492 = vmatpush1.msra.mxu0 %v439
    %493 = vmatprep.subr.mxu0 %v444
    %494 = vmatpush1.msra.mxu0 %v443
    %495 = vmatprep.subr.mxu0 %v448
    %496 = vmatpush1.msra.mxu0 %v447
    %497 = vmatprep.subr.mxu0 %v452
    %498 = vmatpush1.msra.mxu0 %v451
    %499 = vmatprep.subr.mxu0 %v456
    %500 = vmatpush1.msra.mxu0 %v455
    %501 = vmatprep.subr.mxu0 %v460
    %502 = vmatpush1.msra.mxu0 %v459
    %503 = vmatprep.subr.mxu0 %v464
    %504 = vmatpush1.msra.mxu0 %v463
    %505 = vmatprep.subr.mxu0 0.0
    %506 = vmatpush1.msra.mxu0 0.0
    %507 = vmatprep.subr.mxu0 0.0
    %508 = vmatpush1.msra.mxu0 0.0
    %509 = vmatprep.subr.mxu0 0.0
    %510 = vmatpush1.msra.mxu0 0.0
    %511 = vmatprep.subr.mxu0 0.0
    %512 = vmatpush1.msra.mxu0 0.0
    %513 = vmatprep.subr.mxu0 0.0
    %514 = vmatpush1.msra.mxu0 0.0
    %515 = vmatprep.subr.mxu0 0.0
    %516 = vmatpush1.msra.mxu0 0.0
    %517 = vmatprep.subr.mxu0 0.0
    %518 = vmatpush1.msra.mxu0 0.0
    %519 = vmatprep.subr.mxu0 0.0
    %520 = vmatpush1.msra.mxu0 0.0
    %521 = vmatprep.subr.mxu0 0.0
    %522 = vmatpush1.msra.mxu0 0.0
    %523 = vmatprep.subr.mxu0 0.0
    %524 = vmatpush1.msra.mxu0 0.0
    %525 = vmatprep.subr.mxu0 0.0
    %526 = vmatpush1.msra.mxu0 0.0
    %527 = vmatprep.subr.mxu0 0.0
    %528 = vmatpush1.msra.mxu0 0.0
    %529 = vmatprep.subr.mxu0 0.0
    %530 = vmatpush1.msra.mxu0 0.0
    %531 = vmatprep.subr.mxu0 0.0
    %532 = vmatpush1.msra.mxu0 0.0
    %533 = vmatprep.subr.mxu0 0.0
    %534 = vmatpush1.msra.mxu0 0.0
    %535 = vmatprep.subr.mxu0 0.0
    %536 = vmatpush1.msra.mxu0 0.0
    %537 = vmatprep.mubr.f32.mxu0 0.0
    %538 = vmatmul.mubr.f32.gmra.mrb[0].mxu0 %v467
    %v539 = vpop.f32.mrb[0].mxu0
    %v540 = vadd.f32 0.0, %v539
    %v541 = vpop.f32.mrb[0].mxu0
    %v542 = vadd.f32 0.0, %v541
    %543 = vdwg.mxu0
    %544 = vmatprep.subr.mxu0 %v406
    %545 = vmatpush1.msra.mxu0 %v405
    %546 = vmatprep.subr.mxu0 %v410
    %547 = vmatpush1.msra.mxu0 %v409
    %548 = vmatprep.subr.mxu0 %v414
    %549 = vmatpush1.msra.mxu0 %v413
    %550 = vmatprep.subr.mxu0 %v418
    %551 = vmatpush1.msra.mxu0 %v417
    %552 = vmatprep.subr.mxu0 %v422
    %553 = vmatpush1.msra.mxu0 %v421
    %554 = vmatprep.subr.mxu0 %v426
    %555 = vmatpush1.msra.mxu0 %v425
    %556 = vmatprep.subr.mxu0 %v430
    %557 = vmatpush1.msra.mxu0 %v429
    %558 = vmatprep.subr.mxu0 %v434
    %559 = vmatpush1.msra.mxu0 %v433
    %560 = vmatprep.subr.mxu0 %v438
    %561 = vmatpush1.msra.mxu0 %v437
    %562 = vmatprep.subr.mxu0 %v442
    %563 = vmatpush1.msra.mxu0 %v441
    %564 = vmatprep.subr.mxu0 %v446
    %565 = vmatpush1.msra.mxu0 %v445
    %566 = vmatprep.subr.mxu0 %v450
    %567 = vmatpush1.msra.mxu0 %v449
    %568 = vmatprep.subr.mxu0 %v454
    %569 = vmatpush1.msra.mxu0 %v453
    %570 = vmatprep.subr.mxu0 %v458
    %571 = vmatpush1.msra.mxu0 %v457
    %572 = vmatprep.subr.mxu0 %v462
    %573 = vmatpush1.msra.mxu0 %v461
    %574 = vmatprep.subr.mxu0 %v466
    %575 = vmatpush1.msra.mxu0 %v465
    %576 = vmatprep.subr.mxu0 0.0
    %577 = vmatpush1.msra.mxu0 0.0
    %578 = vmatprep.subr.mxu0 0.0
    %579 = vmatpush1.msra.mxu0 0.0
    %580 = vmatprep.subr.mxu0 0.0
    %581 = vmatpush1.msra.mxu0 0.0
    %582 = vmatprep.subr.mxu0 0.0
    %583 = vmatpush1.msra.mxu0 0.0
    %584 = vmatprep.subr.mxu0 0.0
    %585 = vmatpush1.msra.mxu0 0.0
    %586 = vmatprep.subr.mxu0 0.0
    %587 = vmatpush1.msra.mxu0 0.0
    %588 = vmatprep.subr.mxu0 0.0
    %589 = vmatpush1.msra.mxu0 0.0
    %590 = vmatprep.subr.mxu0 0.0
    %591 = vmatpush1.msra.mxu0 0.0
    %592 = vmatprep.subr.mxu0 0.0
    %593 = vmatpush1.msra.mxu0 0.0
    %594 = vmatprep.subr.mxu0 0.0
    %595 = vmatpush1.msra.mxu0 0.0
    %596 = vmatprep.subr.mxu0 0.0
    %597 = vmatpush1.msra.mxu0 0.0
    %598 = vmatprep.subr.mxu0 0.0
    %599 = vmatpush1.msra.mxu0 0.0
    %600 = vmatprep.subr.mxu0 0.0
    %601 = vmatpush1.msra.mxu0 0.0
    %602 = vmatprep.subr.mxu0 0.0
    %603 = vmatpush1.msra.mxu0 0.0
    %604 = vmatprep.subr.mxu0 0.0
    %605 = vmatpush1.msra.mxu0 0.0
    %606 = vmatprep.subr.mxu0 0.0
    %607 = vmatpush1.msra.mxu0 0.0
    %608 = vmatprep.mubr.f32.mxu0 0.0
    %609 = vmatmul.mubr.f32.gmra.mrb[0].mxu0 %v467
    %v610 = vpop.f32.mrb[0].mxu0
    %v611 = vadd.f32 0.0, %v610
    %v612 = vpop.f32.mrb[0].mxu0
    %v613 = vadd.f32 0.0, %v612
    %614 = vdwg.mxu0
    %v615 = vadd.f32 %v469, %v540
    %v616 = vadd.f32 %v470, %v542
    %v617 = vadd.f32 %v471, %v611
    %v618 = vadd.f32 %v472, %v613
    %v619 = vxor.u32 %v615, 2147483648
    %v620 = vxor.u32 %v616, 2147483648
    %v621 = vxor.u32 %v617, 2147483648
    %v622 = vmul.f32 %v619, 1.442695
    %v623 = vpow.pop %v622
    %v624 = vmul.f32 %v620, 1.442695
    %v625 = vpow.pop %v624
    %v626 = vmul.f32 %v621, 1.442695
    %v627 = vpow.pop %v626
    %v628 = vadd.f32 %v623, 1.0
    %v629 = vadd.f32 %v625, 1.0
    %v630 = vadd.f32 %v627, 1.0
    %v631 = vrcp.pop %v628
    %v632 = vmul.f32 1.0, %v631
    %v633 = vrcp.pop %v629
    %v634 = vmul.f32 1.0, %v633
    %v635 = vrcp.pop %v630
    %v636 = vmul.f32 1.0, %v635
    %v637 = vtanh.pop %v618
    %v638 = vmul.f32 %v634, %v468
    %v639 = vmul.f32 %v632, %v637
    %v640 = vadd.f32 %v638, %v639
    %v641 = vtanh.pop %v640
    %v642 = vmul.f32 %v636, %v641
    %643 = vst [vmem:[#allocation2] sm:$0xff] %v642
    %644 = vst [vmem:[#allocation3] sm:$0xff] %v640
    %645 = vst [vmem:[%s4] sm:$0xff] %v642
    %v646 = vld [vmem:[#allocation2] sm:$0xff]
    %v647 = vld [vmem:[#allocation3] sm:$0xff]
    %s648 = scalar_lea.vmem [#allocation4], 32
    %v649 = vld [vmem:[%s648] sm:$0xff]
    %v650 = vld [vmem:[%s648 + $0x8] sm:$0xff]
    %v651 = vld [vmem:[%s648 + $0x10] sm:$0xff]
    %v652 = vld [vmem:[%s648 + $0x18] sm:$0xff]
    %653 = vmatprep.subr.mxu0 %v404
    %654 = vmatpush1.msra.mxu0 %v403
    %655 = vmatprep.subr.mxu0 %v408
    %656 = vmatpush1.msra.mxu0 %v407
    %657 = vmatprep.subr.mxu0 %v412
    %658 = vmatpush1.msra.mxu0 %v411
    %659 = vmatprep.subr.mxu0 %v416
    %660 = vmatpush1.msra.mxu0 %v415
    %661 = vmatprep.subr.mxu0 %v420
    %662 = vmatpush1.msra.mxu0 %v419
    %663 = vmatprep.subr.mxu0 %v424
    %664 = vmatpush1.msra.mxu0 %v423
    %665 = vmatprep.subr.mxu0 %v428
    %666 = vmatpush1.msra.mxu0 %v427
    %667 = vmatprep.subr.mxu0 %v432
    %668 = vmatpush1.msra.mxu0 %v431
    %669 = vmatprep.subr.mxu0 %v436
    %670 = vmatpush1.msra.mxu0 %v435
    %671 = vmatprep.subr.mxu0 %v440
    %672 = vmatpush1.msra.mxu0 %v439
    %673 = vmatprep.subr.mxu0 %v444
    %674 = vmatpush1.msra.mxu0 %v443
    %675 = vmatprep.subr.mxu0 %v448
    %676 = vmatpush1.msra.mxu0 %v447
    %677 = vmatprep.subr.mxu0 %v452
    %678 = vmatpush1.msra.mxu0 %v451
    %679 = vmatprep.subr.mxu0 %v456
    %680 = vmatpush1.msra.mxu0 %v455
    %681 = vmatprep.subr.mxu0 %v460
    %682 = vmatpush1.msra.mxu0 %v459
    %683 = vmatprep.subr.mxu0 %v464
    %684 = vmatpush1.msra.mxu0 %v463
    %685 = vmatprep.subr.mxu0 0.0
    %686 = vmatpush1.msra.mxu0 0.0
    %687 = vmatprep.subr.mxu0 0.0
    %688 = vmatpush1.msra.mxu0 0.0
    %689 = vmatprep.subr.mxu0 0.0
    %690 = vmatpush1.msra.mxu0 0.0
    %691 = vmatprep.subr.mxu0 0.0
    %692 = vmatpush1.msra.mxu0 0.0
    %693 = vmatprep.subr.mxu0 0.0
    %694 = vmatpush1.msra.mxu0 0.0
    %695 = vmatprep.subr.mxu0 0.0
    %696 = vmatpush1.msra.mxu0 0.0
    %697 = vmatprep.subr.mxu0 0.0
    %698 = vmatpush1.msra.mxu0 0.0
    %699 = vmatprep.subr.mxu0 0.0
    %700 = vmatpush1.msra.mxu0 0.0
    %701 = vmatprep.subr.mxu0 0.0
    %702 = vmatpush1.msra.mxu0 0.0
    %703 = vmatprep.subr.mxu0 0.0
    %704 = vmatpush1.msra.mxu0 0.0
    %705 = vmatprep.subr.mxu0 0.0
    %706 = vmatpush1.msra.mxu0 0.0
    %707 = vmatprep.subr.mxu0 0.0
    %708 = vmatpush1.msra.mxu0 0.0
    %709 = vmatprep.subr.mxu0 0.0
    %710 = vmatpush1.msra.mxu0 0.0
    %711 = vmatprep.subr.mxu0 0.0
    %712 = vmatpush1.msra.mxu0 0.0
    %713 = vmatprep.subr.mxu0 0.0
    %714 = vmatpush1.msra.mxu0 0.0
    %715 = vmatprep.subr.mxu0 0.0
    %716 = vmatpush1.msra.mxu0 0.0
    %717 = vmatprep.mubr.f32.mxu0 0.0
    %718 = vmatmul.mubr.f32.gmra.mrb[0].mxu0 %v646
    %v719 = vpop.f32.mrb[0].mxu0
    %v720 = vadd.f32 0.0, %v719
    %v721 = vpop.f32.mrb[0].mxu0
    %v722 = vadd.f32 0.0, %v721
    %723 = vdwg.mxu0
    %724 = vmatprep.subr.mxu0 %v406
    %725 = vmatpush1.msra.mxu0 %v405
    %726 = vmatprep.subr.mxu0 %v410
    %727 = vmatpush1.msra.mxu0 %v409
    %728 = vmatprep.subr.mxu0 %v414
    %729 = vmatpush1.msra.mxu0 %v413
    %730 = vmatprep.subr.mxu0 %v418
    %731 = vmatpush1.msra.mxu0 %v417
    %732 = vmatprep.subr.mxu0 %v422
    %733 = vmatpush1.msra.mxu0 %v421
    %734 = vmatprep.subr.mxu0 %v426
    %735 = vmatpush1.msra.mxu0 %v425
    %736 = vmatprep.subr.mxu0 %v430
    %737 = vmatpush1.msra.mxu0 %v429
    %738 = vmatprep.subr.mxu0 %v434
    %739 = vmatpush1.msra.mxu0 %v433
    %740 = vmatprep.subr.mxu0 %v438
    %741 = vmatpush1.msra.mxu0 %v437
    %742 = vmatprep.subr.mxu0 %v442
    %743 = vmatpush1.msra.mxu0 %v441
    %744 = vmatprep.subr.mxu0 %v446
    %745 = vmatpush1.msra.mxu0 %v445
    %746 = vmatprep.subr.mxu0 %v450
    %747 = vmatpush1.msra.mxu0 %v449
    %748 = vmatprep.subr.mxu0 %v454
    %749 = vmatpush1.msra.mxu0 %v453
    %750 = vmatprep.subr.mxu0 %v458
    %751 = vmatpush1.msra.mxu0 %v457
    %752 = vmatprep.subr.mxu0 %v462
    %753 = vmatpush1.msra.mxu0 %v461
    %754 = vmatprep.subr.mxu0 %v466
    %755 = vmatpush1.msra.mxu0 %v465
    %756 = vmatprep.subr.mxu0 0.0
    %757 = vmatpush1.msra.mxu0 0.0
    %758 = vmatprep.subr.mxu0 0.0
    %759 = vmatpush1.msra.mxu0 0.0
    %760 = vmatprep.subr.mxu0 0.0
    %761 = vmatpush1.msra.mxu0 0.0
    %762 = vmatprep.subr.mxu0 0.0
    %763 = vmatpush1.msra.mxu0 0.0
    %764 = vmatprep.subr.mxu0 0.0
    %765 = vmatpush1.msra.mxu0 0.0
    %766 = vmatprep.subr.mxu0 0.0
    %767 = vmatpush1.msra.mxu0 0.0
    %768 = vmatprep.subr.mxu0 0.0
    %769 = vmatpush1.msra.mxu0 0.0
    %770 = vmatprep.subr.mxu0 0.0
    %771 = vmatpush1.msra.mxu0 0.0
    %772 = vmatprep.subr.mxu0 0.0
    %773 = vmatpush1.msra.mxu0 0.0
    %774 = vmatprep.subr.mxu0 0.0
    %775 = vmatpush1.msra.mxu0 0.0
    %776 = vmatprep.subr.mxu0 0.0
    %777 = vmatpush1.msra.mxu0 0.0
    %778 = vmatprep.subr.mxu0 0.0
    %779 = vmatpush1.msra.mxu0 0.0
    %780 = vmatprep.subr.mxu0 0.0
    %781 = vmatpush1.msra.mxu0 0.0
    %782 = vmatprep.subr.mxu0 0.0
    %783 = vmatpush1.msra.mxu0 0.0
    %784 = vmatprep.subr.mxu0 0.0
    %785 = vmatpush1.msra.mxu0 0.0
    %786 = vmatprep.subr.mxu0 0.0
    %787 = vmatpush1.msra.mxu0 0.0
    %788 = vmatprep.mubr.f32.mxu0 0.0
    %789 = vmatmul.mubr.f32.gmra.mrb[0].mxu0 %v646
    %v790 = vpop.f32.mrb[0].mxu0
    %v791 = vadd.f32 0.0, %v790
    %v792 = vpop.f32.mrb[0].mxu0
    %v793 = vadd.f32 0.0, %v792
    %794 = vdwg.mxu0
    %v795 = vadd.f32 %v649, %v720
    %v796 = vadd.f32 %v650, %v722
    %v797 = vadd.f32 %v651, %v791
    %v798 = vadd.f32 %v652, %v793
    %v799 = vxor.u32 %v795, 2147483648
    %v800 = vxor.u32 %v796, 2147483648
    %v801 = vxor.u32 %v797, 2147483648
    %v802 = vmul.f32 %v799, 1.442695
    %v803 = vpow.pop %v802
    %v804 = vmul.f32 %v800, 1.442695
    %v805 = vpow.pop %v804
    %v806 = vmul.f32 %v801, 1.442695
    %v807 = vpow.pop %v806
    %v808 = vadd.f32 %v803, 1.0
    %v809 = vadd.f32 %v805, 1.0
    %v810 = vadd.f32 %v807, 1.0
    %v811 = vrcp.pop %v808
    %v812 = vmul.f32 1.0, %v811
    %v813 = vrcp.pop %v809
    %v814 = vmul.f32 1.0, %v813
    %v815 = vrcp.pop %v810
    %v816 = vmul.f32 1.0, %v815
    %v817 = vtanh.pop %v798
    %v818 = vmul.f32 %v814, %v647
    %v819 = vmul.f32 %v812, %v817
    %v820 = vadd.f32 %v818, %v819
    %v821 = vtanh.pop %v820
    %v822 = vmul.f32 %v816, %v821
    %823 = vst [vmem:[#allocation2] sm:$0xff] %v822
    %824 = vst [vmem:[#allocation3] sm:$0xff] %v820
    %s825 = scalar_lea.vmem %s4, 8
    %826 = vst [vmem:[%s825] sm:$0xff] %v822
    %v827 = vld [vmem:[#allocation2] sm:$0xff]
    %v828 = vld [vmem:[#allocation3] sm:$0xff]
    %s829 = scalar_lea.vmem [#allocation4], 64
    %v830 = vld [vmem:[%s829] sm:$0xff]
    %v831 = vld [vmem:[%s829 + $0x8] sm:$0xff]
    %v832 = vld [vmem:[%s829 + $0x10] sm:$0xff]
    %v833 = vld [vmem:[%s829 + $0x18] sm:$0xff]
    %834 = vmatprep.subr.mxu0 %v404
    %835 = vmatpush1.msra.mxu0 %v403
    %836 = vmatprep.subr.mxu0 %v408
    %837 = vmatpush1.msra.mxu0 %v407
    %838 = vmatprep.subr.mxu0 %v412
    %839 = vmatpush1.msra.mxu0 %v411
    %840 = vmatprep.subr.mxu0 %v416
    %841 = vmatpush1.msra.mxu0 %v415
    %842 = vmatprep.subr.mxu0 %v420
    %843 = vmatpush1.msra.mxu0 %v419
    %844 = vmatprep.subr.mxu0 %v424
    %845 = vmatpush1.msra.mxu0 %v423
    %846 = vmatprep.subr.mxu0 %v428
    %847 = vmatpush1.msra.mxu0 %v427
    %848 = vmatprep.subr.mxu0 %v432
    %849 = vmatpush1.msra.mxu0 %v431
    %850 = vmatprep.subr.mxu0 %v436
    %851 = vmatpush1.msra.mxu0 %v435
    %852 = vmatprep.subr.mxu0 %v440
    %853 = vmatpush1.msra.mxu0 %v439
    %854 = vmatprep.subr.mxu0 %v444
    %855 = vmatpush1.msra.mxu0 %v443
    %856 = vmatprep.subr.mxu0 %v448
    %857 = vmatpush1.msra.mxu0 %v447
    %858 = vmatprep.subr.mxu0 %v452
    %859 = vmatpush1.msra.mxu0 %v451
    %860 = vmatprep.subr.mxu0 %v456
    %861 = vmatpush1.msra.mxu0 %v455
    %862 = vmatprep.subr.mxu0 %v460
    %863 = vmatpush1.msra.mxu0 %v459
    %864 = vmatprep.subr.mxu0 %v464
    %865 = vmatpush1.msra.mxu0 %v463
    %866 = vmatprep.subr.mxu0 0.0
    %867 = vmatpush1.msra.mxu0 0.0
    %868 = vmatprep.subr.mxu0 0.0
    %869 = vmatpush1.msra.mxu0 0.0
    %870 = vmatprep.subr.mxu0 0.0
    %871 = vmatpush1.msra.mxu0 0.0
    %872 = vmatprep.subr.mxu0 0.0
    %873 = vmatpush1.msra.mxu0 0.0
    %874 = vmatprep.subr.mxu0 0.0
    %875 = vmatpush1.msra.mxu0 0.0
    %876 = vmatprep.subr.mxu0 0.0
    %877 = vmatpush1.msra.mxu0 0.0
    %878 = vmatprep.subr.mxu0 0.0
    %879 = vmatpush1.msra.mxu0 0.0
    %880 = vmatprep.subr.mxu0 0.0
    %881 = vmatpush1.msra.mxu0 0.0
    %882 = vmatprep.subr.mxu0 0.0
    %883 = vmatpush1.msra.mxu0 0.0
    %884 = vmatprep.subr.mxu0 0.0
    %885 = vmatpush1.msra.mxu0 0.0
    %886 = vmatprep.subr.mxu0 0.0
    %887 = vmatpush1.msra.mxu0 0.0
    %888 = vmatprep.subr.mxu0 0.0
    %889 = vmatpush1.msra.mxu0 0.0
    %890 = vmatprep.subr.mxu0 0.0
    %891 = vmatpush1.msra.mxu0 0.0
    %892 = vmatprep.subr.mxu0 0.0
    %893 = vmatpush1.msra.mxu0 0.0
    %894 = vmatprep.subr.mxu0 0.0
    %895 = vmatpush1.msra.mxu0 0.0
    %896 = vmatprep.subr.mxu0 0.0
    %897 = vmatpush1.msra.mxu0 0.0
    %898 = vmatprep.mubr.f32.mxu0 0.0
    %899 = vmatmul.mubr.f32.gmra.mrb[0].mxu0 %v827
    %v900 = vpop.f32.mrb[0].mxu0
    %v901 = vadd.f32 0.0, %v900
    %v902 = vpop.f32.mrb[0].mxu0
    %v903 = vadd.f32 0.0, %v902
    %904 = vdwg.mxu0
    %905 = vmatprep.subr.mxu0 %v406
    %906 = vmatpush1.msra.mxu0 %v405
    %907 = vmatprep.subr.mxu0 %v410
    %908 = vmatpush1.msra.mxu0 %v409
    %909 = vmatprep.subr.mxu0 %v414
    %910 = vmatpush1.msra.mxu0 %v413
    %911 = vmatprep.subr.mxu0 %v418
    %912 = vmatpush1.msra.mxu0 %v417
    %913 = vmatprep.subr.mxu0 %v422
    %914 = vmatpush1.msra.mxu0 %v421
    %915 = vmatprep.subr.mxu0 %v426
    %916 = vmatpush1.msra.mxu0 %v425
    %917 = vmatprep.subr.mxu0 %v430
    %918 = vmatpush1.msra.mxu0 %v429
    %919 = vmatprep.subr.mxu0 %v434
    %920 = vmatpush1.msra.mxu0 %v433
    %921 = vmatprep.subr.mxu0 %v438
    %922 = vmatpush1.msra.mxu0 %v437
    %923 = vmatprep.subr.mxu0 %v442
    %924 = vmatpush1.msra.mxu0 %v441
    %925 = vmatprep.subr.mxu0 %v446
    %926 = vmatpush1.msra.mxu0 %v445
    %927 = vmatprep.subr.mxu0 %v450
    %928 = vmatpush1.msra.mxu0 %v449
    %929 = vmatprep.subr.mxu0 %v454
    %930 = vmatpush1.msra.mxu0 %v453
    %931 = vmatprep.subr.mxu0 %v458
    %932 = vmatpush1.msra.mxu0 %v457
    %933 = vmatprep.subr.mxu0 %v462
    %934 = vmatpush1.msra.mxu0 %v461
    %935 = vmatprep.subr.mxu0 %v466
    %936 = vmatpush1.msra.mxu0 %v465
    %937 = vmatprep.subr.mxu0 0.0
    %938 = vmatpush1.msra.mxu0 0.0
    %939 = vmatprep.subr.mxu0 0.0
    %940 = vmatpush1.msra.mxu0 0.0
    %941 = vmatprep.subr.mxu0 0.0
    %942 = vmatpush1.msra.mxu0 0.0
    %943 = vmatprep.subr.mxu0 0.0
    %944 = vmatpush1.msra.mxu0 0.0
    %945 = vmatprep.subr.mxu0 0.0
    %946 = vmatpush1.msra.mxu0 0.0
    %947 = vmatprep.subr.mxu0 0.0
    %948 = vmatpush1.msra.mxu0 0.0
    %949 = vmatprep.subr.mxu0 0.0
    %950 = vmatpush1.msra.mxu0 0.0
    %951 = vmatprep.subr.mxu0 0.0
    %952 = vmatpush1.msra.mxu0 0.0
    %953 = vmatprep.subr.mxu0 0.0
    %954 = vmatpush1.msra.mxu0 0.0
    %955 = vmatprep.subr.mxu0 0.0
    %956 = vmatpush1.msra.mxu0 0.0
    %957 = vmatprep.subr.mxu0 0.0
    %958 = vmatpush1.msra.mxu0 0.0
    %959 = vmatprep.subr.mxu0 0.0
    %960 = vmatpush1.msra.mxu0 0.0
    %961 = vmatprep.subr.mxu0 0.0
    %962 = vmatpush1.msra.mxu0 0.0
    %963 = vmatprep.subr.mxu0 0.0
    %964 = vmatpush1.msra.mxu0 0.0
    %965 = vmatprep.subr.mxu0 0.0
    %966 = vmatpush1.msra.mxu0 0.0
    %967 = vmatprep.subr.mxu0 0.0
    %968 = vmatpush1.msra.mxu0 0.0
    %969 = vmatprep.mubr.f32.mxu0 0.0
    %970 = vmatmul.mubr.f32.gmra.mrb[0].mxu0 %v827
    %v971 = vpop.f32.mrb[0].mxu0
    %v972 = vadd.f32 0.0, %v971
    %v973 = vpop.f32.mrb[0].mxu0
    %v974 = vadd.f32 0.0, %v973
    %975 = vdwg.mxu0
    %v976 = vadd.f32 %v830, %v901
    %v977 = vadd.f32 %v831, %v903
    %v978 = vadd.f32 %v832, %v972
    %v979 = vadd.f32 %v833, %v974
    %v980 = vxor.u32 %v976, 2147483648
    %v981 = vxor.u32 %v977, 2147483648
    %v982 = vxor.u32 %v978, 2147483648
    %v983 = vmul.f32 %v980, 1.442695
    %v984 = vpow.pop %v983
    %v985 = vmul.f32 %v981, 1.442695
    %v986 = vpow.pop %v985
    %v987 = vmul.f32 %v982, 1.442695
    %v988 = vpow.pop %v987
    %v989 = vadd.f32 %v984, 1.0
    %v990 = vadd.f32 %v986, 1.0
    %v991 = vadd.f32 %v988, 1.0
    %v992 = vrcp.pop %v989
    %v993 = vmul.f32 1.0, %v992
    %v994 = vrcp.pop %v990
    %v995 = vmul.f32 1.0, %v994
    %v996 = vrcp.pop %v991
    %v997 = vmul.f32 1.0, %v996
    %v998 = vtanh.pop %v979
    %v999 = vmul.f32 %v995, %v828
    %v1000 = vmul.f32 %v993, %v998
    %v1001 = vadd.f32 %v999, %v1000
    %v1002 = vtanh.pop %v1001
    %v1003 = vmul.f32 %v997, %v1002
    %1004 = vst [vmem:[#allocation2] sm:$0xff] %v1003
    %1005 = vst [vmem:[#allocation3] sm:$0xff] %v1001
    %s1006 = scalar_lea.vmem %s4, 16
    %1007 = vst [vmem:[%s1006] sm:$0xff] %v1003
    %v1008 = vld [vmem:[#allocation2] sm:$0xff]
    %v1009 = vld [vmem:[#allocation3] sm:$0xff]
    %s1010 = scalar_lea.vmem [#allocation4], 96
    %v1011 = vld [vmem:[%s1010] sm:$0xff]
    %v1012 = vld [vmem:[%s1010 + $0x8] sm:$0xff]
    %v1013 = vld [vmem:[%s1010 + $0x10] sm:$0xff]
    %v1014 = vld [vmem:[%s1010 + $0x18] sm:$0xff]
    %1015 = vmatprep.subr.mxu0 %v404
    %1016 = vmatpush1.msra.mxu0 %v403
    %1017 = vmatprep.subr.mxu0 %v408
    %1018 = vmatpush1.msra.mxu0 %v407
    %1019 = vmatprep.subr.mxu0 %v412
    %1020 = vmatpush1.msra.mxu0 %v411
    %1021 = vmatprep.subr.mxu0 %v416
    %1022 = vmatpush1.msra.mxu0 %v415
    %1023 = vmatprep.subr.mxu0 %v420
    %1024 = vmatpush1.msra.mxu0 %v419
    %1025 = vmatprep.subr.mxu0 %v424
    %1026 = vmatpush1.msra.mxu0 %v423
    %1027 = vmatprep.subr.mxu0 %v428
    %1028 = vmatpush1.msra.mxu0 %v427
    %1029 = vmatprep.subr.mxu0 %v432
    %1030 = vmatpush1.msra.mxu0 %v431
    %1031 = vmatprep.subr.mxu0 %v436
    %1032 = vmatpush1.msra.mxu0 %v435
    %1033 = vmatprep.subr.mxu0 %v440
    %1034 = vmatpush1.msra.mxu0 %v439
    %1035 = vmatprep.subr.mxu0 %v444
    %1036 = vmatpush1.msra.mxu0 %v443
    %1037 = vmatprep.subr.mxu0 %v448
    %1038 = vmatpush1.msra.mxu0 %v447
    %1039 = vmatprep.subr.mxu0 %v452
    %1040 = vmatpush1.msra.mxu0 %v451
    %1041 = vmatprep.subr.mxu0 %v456
    %1042 = vmatpush1.msra.mxu0 %v455
    %1043 = vmatprep.subr.mxu0 %v460
    %1044 = vmatpush1.msra.mxu0 %v459
    %1045 = vmatprep.subr.mxu0 %v464
    %1046 = vmatpush1.msra.mxu0 %v463
    %1047 = vmatprep.subr.mxu0 0.0
    %1048 = vmatpush1.msra.mxu0 0.0
    %1049 = vmatprep.subr.mxu0 0.0
    %1050 = vmatpush1.msra.mxu0 0.0
    %1051 = vmatprep.subr.mxu0 0.0
    %1052 = vmatpush1.msra.mxu0 0.0
    %1053 = vmatprep.subr.mxu0 0.0
    %1054 = vmatpush1.msra.mxu0 0.0
    %1055 = vmatprep.subr.mxu0 0.0
    %1056 = vmatpush1.msra.mxu0 0.0
    %1057 = vmatprep.subr.mxu0 0.0
    %1058 = vmatpush1.msra.mxu0 0.0
    %1059 = vmatprep.subr.mxu0 0.0
    %1060 = vmatpush1.msra.mxu0 0.0
    %1061 = vmatprep.subr.mxu0 0.0
    %1062 = vmatpush1.msra.mxu0 0.0
    %1063 = vmatprep.subr.mxu0 0.0
    %1064 = vmatpush1.msra.mxu0 0.0
    %1065 = vmatprep.subr.mxu0 0.0
    %1066 = vmatpush1.msra.mxu0 0.0
    %1067 = vmatprep.subr.mxu0 0.0
    %1068 = vmatpush1.msra.mxu0 0.0
    %1069 = vmatprep.subr.mxu0 0.0
    %1070 = vmatpush1.msra.mxu0 0.0
    %1071 = vmatprep.subr.mxu0 0.0
    %1072 = vmatpush1.msra.mxu0 0.0
    %1073 = vmatprep.subr.mxu0 0.0
    %1074 = vmatpush1.msra.mxu0 0.0
    %1075 = vmatprep.subr.mxu0 0.0
    %1076 = vmatpush1.msra.mxu0 0.0
    %1077 = vmatprep.subr.mxu0 0.0
    %1078 = vmatpush1.msra.mxu0 0.0
    %1079 = vmatprep.mubr.f32.mxu0 0.0
    %1080 = vmatmul.mubr.f32.gmra.mrb[0].mxu0 %v1008
    %v1081 = vpop.f32.mrb[0].mxu0
    %v1082 = vadd.f32 0.0, %v1081
    %v1083 = vpop.f32.mrb[0].mxu0
    %v1084 = vadd.f32 0.0, %v1083
    %1085 = vdwg.mxu0
    %1086 = vmatprep.subr.mxu0 %v406
    %1087 = vmatpush1.msra.mxu0 %v405
    %1088 = vmatprep.subr.mxu0 %v410
    %1089 = vmatpush1.msra.mxu0 %v409
    %1090 = vmatprep.subr.mxu0 %v414
    %1091 = vmatpush1.msra.mxu0 %v413
    %1092 = vmatprep.subr.mxu0 %v418
    %1093 = vmatpush1.msra.mxu0 %v417
    %1094 = vmatprep.subr.mxu0 %v422
    %1095 = vmatpush1.msra.mxu0 %v421
    %1096 = vmatprep.subr.mxu0 %v426
    %1097 = vmatpush1.msra.mxu0 %v425
    %1098 = vmatprep.subr.mxu0 %v430
    %1099 = vmatpush1.msra.mxu0 %v429
    %1100 = vmatprep.subr.mxu0 %v434
    %1101 = vmatpush1.msra.mxu0 %v433
    %1102 = vmatprep.subr.mxu0 %v438
    %1103 = vmatpush1.msra.mxu0 %v437
    %1104 = vmatprep.subr.mxu0 %v442
    %1105 = vmatpush1.msra.mxu0 %v441
    %1106 = vmatprep.subr.mxu0 %v446
    %1107 = vmatpush1.msra.mxu0 %v445
    %1108 = vmatprep.subr.mxu0 %v450
    %1109 = vmatpush1.msra.mxu0 %v449
    %1110 = vmatprep.subr.mxu0 %v454
    %1111 = vmatpush1.msra.mxu0 %v453
    %1112 = vmatprep.subr.mxu0 %v458
    %1113 = vmatpush1.msra.mxu0 %v457
    %1114 = vmatprep.subr.mxu0 %v462
    %1115 = vmatpush1.msra.mxu0 %v461
    %1116 = vmatprep.subr.mxu0 %v466
    %1117 = vmatpush1.msra.mxu0 %v465
    %1118 = vmatprep.subr.mxu0 0.0
    %1119 = vmatpush1.msra.mxu0 0.0
    %1120 = vmatprep.subr.mxu0 0.0
    %1121 = vmatpush1.msra.mxu0 0.0
    %1122 = vmatprep.subr.mxu0 0.0
    %1123 = vmatpush1.msra.mxu0 0.0
    %1124 = vmatprep.subr.mxu0 0.0
    %1125 = vmatpush1.msra.mxu0 0.0
    %1126 = vmatprep.subr.mxu0 0.0
    %1127 = vmatpush1.msra.mxu0 0.0
    %1128 = vmatprep.subr.mxu0 0.0
    %1129 = vmatpush1.msra.mxu0 0.0
    %1130 = vmatprep.subr.mxu0 0.0
    %1131 = vmatpush1.msra.mxu0 0.0
    %1132 = vmatprep.subr.mxu0 0.0
    %1133 = vmatpush1.msra.mxu0 0.0
    %1134 = vmatprep.subr.mxu0 0.0
    %1135 = vmatpush1.msra.mxu0 0.0
    %1136 = vmatprep.subr.mxu0 0.0
    %1137 = vmatpush1.msra.mxu0 0.0
    %1138 = vmatprep.subr.mxu0 0.0
    %1139 = vmatpush1.msra.mxu0 0.0
    %1140 = vmatprep.subr.mxu0 0.0
    %1141 = vmatpush1.msra.mxu0 0.0
    %1142 = vmatprep.subr.mxu0 0.0
    %1143 = vmatpush1.msra.mxu0 0.0
    %1144 = vmatprep.subr.mxu0 0.0
    %1145 = vmatpush1.msra.mxu0 0.0
    %1146 = vmatprep.subr.mxu0 0.0
    %1147 = vmatpush1.msra.mxu0 0.0
    %1148 = vmatprep.subr.mxu0 0.0
    %1149 = vmatpush1.msra.mxu0 0.0
    %1150 = vmatprep.mubr.f32.mxu0 0.0
    %1151 = vmatmul.mubr.f32.gmra.mrb[0].mxu0 %v1008
    %v1152 = vpop.f32.mrb[0].mxu0
    %v1153 = vadd.f32 0.0, %v1152
    %v1154 = vpop.f32.mrb[0].mxu0
    %v1155 = vadd.f32 0.0, %v1154
    %1156 = vdwg.mxu0
    %v1157 = vadd.f32 %v1011, %v1082
    %v1158 = vadd.f32 %v1012, %v1084
    %v1159 = vadd.f32 %v1013, %v1153
    %v1160 = vadd.f32 %v1014, %v1155
    %v1161 = vxor.u32 %v1157, 2147483648
    %v1162 = vxor.u32 %v1158, 2147483648
    %v1163 = vxor.u32 %v1159, 2147483648
    %v1164 = vmul.f32 %v1161, 1.442695
    %v1165 = vpow.pop %v1164
    %v1166 = vmul.f32 %v1162, 1.442695
    %v1167 = vpow.pop %v1166
    %v1168 = vmul.f32 %v1163, 1.442695
    %v1169 = vpow.pop %v1168
    %v1170 = vadd.f32 %v1165, 1.0
    %v1171 = vadd.f32 %v1167, 1.0
    %v1172 = vadd.f32 %v1169, 1.0
    %v1173 = vrcp.pop %v1170
    %v1174 = vmul.f32 1.0, %v1173
    %v1175 = vrcp.pop %v1171
    %v1176 = vmul.f32 1.0, %v1175
    %v1177 = vrcp.pop %v1172
    %v1178 = vmul.f32 1.0, %v1177
    %v1179 = vtanh.pop %v1160
    %v1180 = vmul.f32 %v1176, %v1009
    %v1181 = vmul.f32 %v1174, %v1179
    %v1182 = vadd.f32 %v1180, %v1181
    %v1183 = vtanh.pop %v1182
    %v1184 = vmul.f32 %v1178, %v1183
    %1185 = vst [vmem:[#allocation2] sm:$0xff] %v1184
    %1186 = vst [vmem:[#allocation3] sm:$0xff] %v1182
    %s1187 = scalar_lea.vmem %s4, 24
    %1188 = vst [vmem:[%s1187] sm:$0xff] %v1184
    %v1189 = vld [vmem:[#allocation2] sm:$0xff]
    %v1190 = vld [vmem:[#allocation3] sm:$0xff]
    %s1191 = scalar_lea.vmem [#allocation4], 128
    %v1192 = vld [vmem:[%s1191] sm:$0xff]
    %v1193 = vld [vmem:[%s1191 + $0x8] sm:$0xff]
    %v1194 = vld [vmem:[%s1191 + $0x10] sm:$0xff]
    %v1195 = vld [vmem:[%s1191 + $0x18] sm:$0xff]
    %1196 = vmatprep.subr.mxu0 %v404
    %1197 = vmatpush1.msra.mxu0 %v403
    %1198 = vmatprep.subr.mxu0 %v408
    %1199 = vmatpush1.msra.mxu0 %v407
    %1200 = vmatprep.subr.mxu0 %v412
    %1201 = vmatpush1.msra.mxu0 %v411
    %1202 = vmatprep.subr.mxu0 %v416
    %1203 = vmatpush1.msra.mxu0 %v415
    %1204 = vmatprep.subr.mxu0 %v420
    %1205 = vmatpush1.msra.mxu0 %v419
    %1206 = vmatprep.subr.mxu0 %v424
    %1207 = vmatpush1.msra.mxu0 %v423
    %1208 = vmatprep.subr.mxu0 %v428
    %1209 = vmatpush1.msra.mxu0 %v427
    %1210 = vmatprep.subr.mxu0 %v432
    %1211 = vmatpush1.msra.mxu0 %v431
    %1212 = vmatprep.subr.mxu0 %v436
    %1213 = vmatpush1.msra.mxu0 %v435
    %1214 = vmatprep.subr.mxu0 %v440
    %1215 = vmatpush1.msra.mxu0 %v439
    %1216 = vmatprep.subr.mxu0 %v444
    %1217 = vmatpush1.msra.mxu0 %v443
    %1218 = vmatprep.subr.mxu0 %v448
    %1219 = vmatpush1.msra.mxu0 %v447
    %1220 = vmatprep.subr.mxu0 %v452
    %1221 = vmatpush1.msra.mxu0 %v451
    %1222 = vmatprep.subr.mxu0 %v456
    %1223 = vmatpush1.msra.mxu0 %v455
    %1224 = vmatprep.subr.mxu0 %v460
    %1225 = vmatpush1.msra.mxu0 %v459
    %1226 = vmatprep.subr.mxu0 %v464
    %1227 = vmatpush1.msra.mxu0 %v463
    %1228 = vmatprep.subr.mxu0 0.0
    %1229 = vmatpush1.msra.mxu0 0.0
    %1230 = vmatprep.subr.mxu0 0.0
    %1231 = vmatpush1.msra.mxu0 0.0
    %1232 = vmatprep.subr.mxu0 0.0
    %1233 = vmatpush1.msra.mxu0 0.0
    %1234 = vmatprep.subr.mxu0 0.0
    %1235 = vmatpush1.msra.mxu0 0.0
    %1236 = vmatprep.subr.mxu0 0.0
    %1237 = vmatpush1.msra.mxu0 0.0
    %1238 = vmatprep.subr.mxu0 0.0
    %1239 = vmatpush1.msra.mxu0 0.0
    %1240 = vmatprep.subr.mxu0 0.0
    %1241 = vmatpush1.msra.mxu0 0.0
    %1242 = vmatprep.subr.mxu0 0.0
    %1243 = vmatpush1.msra.mxu0 0.0
    %1244 = vmatprep.subr.mxu0 0.0
    %1245 = vmatpush1.msra.mxu0 0.0
    %1246 = vmatprep.subr.mxu0 0.0
    %1247 = vmatpush1.msra.mxu0 0.0
    %1248 = vmatprep.subr.mxu0 0.0
    %1249 = vmatpush1.msra.mxu0 0.0
    %1250 = vmatprep.subr.mxu0 0.0
    %1251 = vmatpush1.msra.mxu0 0.0
    %1252 = vmatprep.subr.mxu0 0.0
    %1253 = vmatpush1.msra.mxu0 0.0
    %1254 = vmatprep.subr.mxu0 0.0
    %1255 = vmatpush1.msra.mxu0 0.0
    %1256 = vmatprep.subr.mxu0 0.0
    %1257 = vmatpush1.msra.mxu0 0.0
    %1258 = vmatprep.subr.mxu0 0.0
    %1259 = vmatpush1.msra.mxu0 0.0
    %1260 = vmatprep.mubr.f32.mxu0 0.0
    %1261 = vmatmul.mubr.f32.gmra.mrb[0].mxu0 %v1189
    %v1262 = vpop.f32.mrb[0].mxu0
    %v1263 = vadd.f32 0.0, %v1262
    %v1264 = vpop.f32.mrb[0].mxu0
    %v1265 = vadd.f32 0.0, %v1264
    %1266 = vdwg.mxu0
    %1267 = vmatprep.subr.mxu0 %v406
    %1268 = vmatpush1.msra.mxu0 %v405
    %1269 = vmatprep.subr.mxu0 %v410
    %1270 = vmatpush1.msra.mxu0 %v409
    %1271 = vmatprep.subr.mxu0 %v414
    %1272 = vmatpush1.msra.mxu0 %v413
    %1273 = vmatprep.subr.mxu0 %v418
    %1274 = vmatpush1.msra.mxu0 %v417
    %1275 = vmatprep.subr.mxu0 %v422
    %1276 = vmatpush1.msra.mxu0 %v421
    %1277 = vmatprep.subr.mxu0 %v426
    %1278 = vmatpush1.msra.mxu0 %v425
    %1279 = vmatprep.subr.mxu0 %v430
    %1280 = vmatpush1.msra.mxu0 %v429
    %1281 = vmatprep.subr.mxu0 %v434
    %1282 = vmatpush1.msra.mxu0 %v433
    %1283 = vmatprep.subr.mxu0 %v438
    %1284 = vmatpush1.msra.mxu0 %v437
    %1285 = vmatprep.subr.mxu0 %v442
    %1286 = vmatpush1.msra.mxu0 %v441
    %1287 = vmatprep.subr.mxu0 %v446
    %1288 = vmatpush1.msra.mxu0 %v445
    %1289 = vmatprep.subr.mxu0 %v450
    %1290 = vmatpush1.msra.mxu0 %v449
    %1291 = vmatprep.subr.mxu0 %v454
    %1292 = vmatpush1.msra.mxu0 %v453
    %1293 = vmatprep.subr.mxu0 %v458
    %1294 = vmatpush1.msra.mxu0 %v457
    %1295 = vmatprep.subr.mxu0 %v462
    %1296 = vmatpush1.msra.mxu0 %v461
    %1297 = vmatprep.subr.mxu0 %v466
    %1298 = vmatpush1.msra.mxu0 %v465
    %1299 = vmatprep.subr.mxu0 0.0
    %1300 = vmatpush1.msra.mxu0 0.0
    %1301 = vmatprep.subr.mxu0 0.0
    %1302 = vmatpush1.msra.mxu0 0.0
    %1303 = vmatprep.subr.mxu0 0.0
    %1304 = vmatpush1.msra.mxu0 0.0
    %1305 = vmatprep.subr.mxu0 0.0
    %1306 = vmatpush1.msra.mxu0 0.0
    %1307 = vmatprep.subr.mxu0 0.0
    %1308 = vmatpush1.msra.mxu0 0.0
    %1309 = vmatprep.subr.mxu0 0.0
    %1310 = vmatpush1.msra.mxu0 0.0
    %1311 = vmatprep.subr.mxu0 0.0
    %1312 = vmatpush1.msra.mxu0 0.0
    %1313 = vmatprep.subr.mxu0 0.0
    %1314 = vmatpush1.msra.mxu0 0.0
    %1315 = vmatprep.subr.mxu0 0.0
    %1316 = vmatpush1.msra.mxu0 0.0
    %1317 = vmatprep.subr.mxu0 0.0
    %1318 = vmatpush1.msra.mxu0 0.0
    %1319 = vmatprep.subr.mxu0 0.0
    %1320 = vmatpush1.msra.mxu0 0.0
    %1321 = vmatprep.subr.mxu0 0.0
    %1322 = vmatpush1.msra.mxu0 0.0
    %1323 = vmatprep.subr.mxu0 0.0
    %1324 = vmatpush1.msra.mxu0 0.0
    %1325 = vmatprep.subr.mxu0 0.0
    %1326 = vmatpush1.msra.mxu0 0.0
    %1327 = vmatprep.subr.mxu0 0.0
    %1328 = vmatpush1.msra.mxu0 0.0
    %1329 = vmatprep.subr.mxu0 0.0
    %1330 = vmatpush1.msra.mxu0 0.0
    %1331 = vmatprep.mubr.f32.mxu0 0.0
    %1332 = vmatmul.mubr.f32.gmra.mrb[0].mxu0 %v1189
    %v1333 = vpop.f32.mrb[0].mxu0
    %v1334 = vadd.f32 0.0, %v1333
    %v1335 = vpop.f32.mrb[0].mxu0
    %v1336 = vadd.f32 0.0, %v1335
    %1337 = vdwg.mxu0
    %v1338 = vadd.f32 %v1192, %v1263
    %v1339 = vadd.f32 %v1193, %v1265
    %v1340 = vadd.f32 %v1194, %v1334
    %v1341 = vadd.f32 %v1195, %v1336
    %v1342 = vxor.u32 %v1338, 2147483648
    %v1343 = vxor.u32 %v1339, 2147483648
    %v1344 = vxor.u32 %v1340, 2147483648
    %v1345 = vmul.f32 %v1342, 1.442695
    %v1346 = vpow.pop %v1345
    %v1347 = vmul.f32 %v1343, 1.442695
    %v1348 = vpow.pop %v1347
    %v1349 = vmul.f32 %v1344, 1.442695
    %v1350 = vpow.pop %v1349
    %v1351 = vadd.f32 %v1346, 1.0
    %v1352 = vadd.f32 %v1348, 1.0
    %v1353 = vadd.f32 %v1350, 1.0
    %v1354 = vrcp.pop %v1351
    %v1355 = vmul.f32 1.0, %v1354
    %v1356 = vrcp.pop %v1352
    %v1357 = vmul.f32 1.0, %v1356
    %v1358 = vrcp.pop %v1353
    %v1359 = vmul.f32 1.0, %v1358
    %v1360 = vtanh.pop %v1341
    %v1361 = vmul.f32 %v1357, %v1190
    %v1362 = vmul.f32 %v1355, %v1360
    %v1363 = vadd.f32 %v1361, %v1362
    %v1364 = vtanh.pop %v1363
    %v1365 = vmul.f32 %v1359, %v1364
    %1366 = vst [vmem:[#allocation2] sm:$0xff] %v1365
    %1367 = vst [vmem:[#allocation3] sm:$0xff] %v1363
    %s1368 = scalar_lea.vmem %s4, 32
    %1369 = vst [vmem:[%s1368] sm:$0xff] %v1365
    %v1370 = vld [vmem:[#allocation2] sm:$0xff]
    %v1371 = vld [vmem:[#allocation3] sm:$0xff]
    %s1372 = scalar_lea.vmem [#allocation4], 160
    %v1373 = vld [vmem:[%s1372] sm:$0xff]
    %v1374 = vld [vmem:[%s1372 + $0x8] sm:$0xff]
    %v1375 = vld [vmem:[%s1372 + $0x10] sm:$0xff]
    %v1376 = vld [vmem:[%s1372 + $0x18] sm:$0xff]
    %1377 = vmatprep.subr.mxu0 %v404
    %1378 = vmatpush1.msra.mxu0 %v403
    %1379 = vmatprep.subr.mxu0 %v408
    %1380 = vmatpush1.msra.mxu0 %v407
    %1381 = vmatprep.subr.mxu0 %v412
    %1382 = vmatpush1.msra.mxu0 %v411
    %1383 = vmatprep.subr.mxu0 %v416
    %1384 = vmatpush1.msra.mxu0 %v415
    %1385 = vmatprep.subr.mxu0 %v420
    %1386 = vmatpush1.msra.mxu0 %v419
    %1387 = vmatprep.subr.mxu0 %v424
    %1388 = vmatpush1.msra.mxu0 %v423
    %1389 = vmatprep.subr.mxu0 %v428
    %1390 = vmatpush1.msra.mxu0 %v427
    %1391 = vmatprep.subr.mxu0 %v432
    %1392 = vmatpush1.msra.mxu0 %v431
    %1393 = vmatprep.subr.mxu0 %v436
    %1394 = vmatpush1.msra.mxu0 %v435
    %1395 = vmatprep.subr.mxu0 %v440
    %1396 = vmatpush1.msra.mxu0 %v439
    %1397 = vmatprep.subr.mxu0 %v444
    %1398 = vmatpush1.msra.mxu0 %v443
    %1399 = vmatprep.subr.mxu0 %v448
    %1400 = vmatpush1.msra.mxu0 %v447
    %1401 = vmatprep.subr.mxu0 %v452
    %1402 = vmatpush1.msra.mxu0 %v451
    %1403 = vmatprep.subr.mxu0 %v456
    %1404 = vmatpush1.msra.mxu0 %v455
    %1405 = vmatprep.subr.mxu0 %v460
    %1406 = vmatpush1.msra.mxu0 %v459
    %1407 = vmatprep.subr.mxu0 %v464
    %1408 = vmatpush1.msra.mxu0 %v463
    %1409 = vmatprep.subr.mxu0 0.0
    %1410 = vmatpush1.msra.mxu0 0.0
    %1411 = vmatprep.subr.mxu0 0.0
    %1412 = vmatpush1.msra.mxu0 0.0
    %1413 = vmatprep.subr.mxu0 0.0
    %1414 = vmatpush1.msra.mxu0 0.0
    %1415 = vmatprep.subr.mxu0 0.0
    %1416 = vmatpush1.msra.mxu0 0.0
    %1417 = vmatprep.subr.mxu0 0.0
    %1418 = vmatpush1.msra.mxu0 0.0
    %1419 = vmatprep.subr.mxu0 0.0
    %1420 = vmatpush1.msra.mxu0 0.0
    %1421 = vmatprep.subr.mxu0 0.0
    %1422 = vmatpush1.msra.mxu0 0.0
    %1423 = vmatprep.subr.mxu0 0.0
    %1424 = vmatpush1.msra.mxu0 0.0
    %1425 = vmatprep.subr.mxu0 0.0
    %1426 = vmatpush1.msra.mxu0 0.0
    %1427 = vmatprep.subr.mxu0 0.0
    %1428 = vmatpush1.msra.mxu0 0.0
    %1429 = vmatprep.subr.mxu0 0.0
    %1430 = vmatpush1.msra.mxu0 0.0
    %1431 = vmatprep.subr.mxu0 0.0
    %1432 = vmatpush1.msra.mxu0 0.0
    %1433 = vmatprep.subr.mxu0 0.0
    %1434 = vmatpush1.msra.mxu0 0.0
    %1435 = vmatprep.subr.mxu0 0.0
    %1436 = vmatpush1.msra.mxu0 0.0
    %1437 = vmatprep.subr.mxu0 0.0
    %1438 = vmatpush1.msra.mxu0 0.0
    %1439 = vmatprep.subr.mxu0 0.0
    %1440 = vmatpush1.msra.mxu0 0.0
    %1441 = vmatprep.mubr.f32.mxu0 0.0
    %1442 = vmatmul.mubr.f32.gmra.mrb[0].mxu0 %v1370
    %v1443 = vpop.f32.mrb[0].mxu0
    %v1444 = vadd.f32 0.0, %v1443
    %v1445 = vpop.f32.mrb[0].mxu0
    %v1446 = vadd.f32 0.0, %v1445
    %1447 = vdwg.mxu0
    %1448 = vmatprep.subr.mxu0 %v406
    %1449 = vmatpush1.msra.mxu0 %v405
    %1450 = vmatprep.subr.mxu0 %v410
    %1451 = vmatpush1.msra.mxu0 %v409
    %1452 = vmatprep.subr.mxu0 %v414
    %1453 = vmatpush1.msra.mxu0 %v413
    %1454 = vmatprep.subr.mxu0 %v418
    %1455 = vmatpush1.msra.mxu0 %v417
    %1456 = vmatprep.subr.mxu0 %v422
    %1457 = vmatpush1.msra.mxu0 %v421
    %1458 = vmatprep.subr.mxu0 %v426
    %1459 = vmatpush1.msra.mxu0 %v425
    %1460 = vmatprep.subr.mxu0 %v430
    %1461 = vmatpush1.msra.mxu0 %v429
    %1462 = vmatprep.subr.mxu0 %v434
    %1463 = vmatpush1.msra.mxu0 %v433
    %1464 = vmatprep.subr.mxu0 %v438
    %1465 = vmatpush1.msra.mxu0 %v437
    %1466 = vmatprep.subr.mxu0 %v442
    %1467 = vmatpush1.msra.mxu0 %v441
    %1468 = vmatprep.subr.mxu0 %v446
    %1469 = vmatpush1.msra.mxu0 %v445
    %1470 = vmatprep.subr.mxu0 %v450
    %1471 = vmatpush1.msra.mxu0 %v449
    %1472 = vmatprep.subr.mxu0 %v454
    %1473 = vmatpush1.msra.mxu0 %v453
    %1474 = vmatprep.subr.mxu0 %v458
    %1475 = vmatpush1.msra.mxu0 %v457
    %1476 = vmatprep.subr.mxu0 %v462
    %1477 = vmatpush1.msra.mxu0 %v461
    %1478 = vmatprep.subr.mxu0 %v466
    %1479 = vmatpush1.msra.mxu0 %v465
    %1480 = vmatprep.subr.mxu0 0.0
    %1481 = vmatpush1.msra.mxu0 0.0
    %1482 = vmatprep.subr.mxu0 0.0
    %1483 = vmatpush1.msra.mxu0 0.0
    %1484 = vmatprep.subr.mxu0 0.0
    %1485 = vmatpush1.msra.mxu0 0.0
    %1486 = vmatprep.subr.mxu0 0.0
    %1487 = vmatpush1.msra.mxu0 0.0
    %1488 = vmatprep.subr.mxu0 0.0
    %1489 = vmatpush1.msra.mxu0 0.0
    %1490 = vmatprep.subr.mxu0 0.0
    %1491 = vmatpush1.msra.mxu0 0.0
    %1492 = vmatprep.subr.mxu0 0.0
    %1493 = vmatpush1.msra.mxu0 0.0
    %1494 = vmatprep.subr.mxu0 0.0
    %1495 = vmatpush1.msra.mxu0 0.0
    %1496 = vmatprep.subr.mxu0 0.0
    %1497 = vmatpush1.msra.mxu0 0.0
    %1498 = vmatprep.subr.mxu0 0.0
    %1499 = vmatpush1.msra.mxu0 0.0
    %1500 = vmatprep.subr.mxu0 0.0
    %1501 = vmatpush1.msra.mxu0 0.0
    %1502 = vmatprep.subr.mxu0 0.0
    %1503 = vmatpush1.msra.mxu0 0.0
    %1504 = vmatprep.subr.mxu0 0.0
    %1505 = vmatpush1.msra.mxu0 0.0
    %1506 = vmatprep.subr.mxu0 0.0
    %1507 = vmatpush1.msra.mxu0 0.0
    %1508 = vmatprep.subr.mxu0 0.0
    %1509 = vmatpush1.msra.mxu0 0.0
    %1510 = vmatprep.subr.mxu0 0.0
    %1511 = vmatpush1.msra.mxu0 0.0
    %1512 = vmatprep.mubr.f32.mxu0 0.0
    %1513 = vmatmul.mubr.f32.gmra.mrb[0].mxu0 %v1370
    %v1514 = vpop.f32.mrb[0].mxu0
    %v1515 = vadd.f32 0.0, %v1514
    %v1516 = vpop.f32.mrb[0].mxu0
    %v1517 = vadd.f32 0.0, %v1516
    %1518 = vdwg.mxu0
    %v1519 = vadd.f32 %v1373, %v1444
    %v1520 = vadd.f32 %v1374, %v1446
    %v1521 = vadd.f32 %v1375, %v1515
    %v1522 = vadd.f32 %v1376, %v1517
    %v1523 = vxor.u32 %v1519, 2147483648
    %v1524 = vxor.u32 %v1520, 2147483648
    %v1525 = vxor.u32 %v1521, 2147483648
    %v1526 = vmul.f32 %v1523, 1.442695
    %v1527 = vpow.pop %v1526
    %v1528 = vmul.f32 %v1524, 1.442695
    %v1529 = vpow.pop %v1528
    %v1530 = vmul.f32 %v1525, 1.442695
    %v1531 = vpow.pop %v1530
    %v1532 = vadd.f32 %v1527, 1.0
    %v1533 = vadd.f32 %v1529, 1.0
    %v1534 = vadd.f32 %v1531, 1.0
    %v1535 = vrcp.pop %v1532
    %v1536 = vmul.f32 1.0, %v1535
    %v1537 = vrcp.pop %v1533
    %v1538 = vmul.f32 1.0, %v1537
    %v1539 = vrcp.pop %v1534
    %v1540 = vmul.f32 1.0, %v1539
    %v1541 = vtanh.pop %v1522
    %v1542 = vmul.f32 %v1538, %v1371
    %v1543 = vmul.f32 %v1536, %v1541
    %v1544 = vadd.f32 %v1542, %v1543
    %v1545 = vtanh.pop %v1544
    %v1546 = vmul.f32 %v1540, %v1545
    %1547 = vst [vmem:[#allocation2] sm:$0xff] %v1546
    %1548 = vst [vmem:[#allocation3] sm:$0xff] %v1544
    %s1549 = scalar_lea.vmem %s4, 40
    %1550 = vst [vmem:[%s1549] sm:$0xff] %v1546
    %v1551 = vld [vmem:[#allocation2] sm:$0xff]
    %v1552 = vld [vmem:[#allocation3] sm:$0xff]
    %s1553 = scalar_lea.vmem [#allocation4], 192
    %v1554 = vld [vmem:[%s1553] sm:$0xff]
    %v1555 = vld [vmem:[%s1553 + $0x8] sm:$0xff]
    %v1556 = vld [vmem:[%s1553 + $0x10] sm:$0xff]
    %v1557 = vld [vmem:[%s1553 + $0x18] sm:$0xff]
    %1558 = vmatprep.subr.mxu0 %v404
    %1559 = vmatpush1.msra.mxu0 %v403
    %1560 = vmatprep.subr.mxu0 %v408
    %1561 = vmatpush1.msra.mxu0 %v407
    %1562 = vmatprep.subr.mxu0 %v412
    %1563 = vmatpush1.msra.mxu0 %v411
    %1564 = vmatprep.subr.mxu0 %v416
    %1565 = vmatpush1.msra.mxu0 %v415
    %1566 = vmatprep.subr.mxu0 %v420
    %1567 = vmatpush1.msra.mxu0 %v419
    %1568 = vmatprep.subr.mxu0 %v424
    %1569 = vmatpush1.msra.mxu0 %v423
    %1570 = vmatprep.subr.mxu0 %v428
    %1571 = vmatpush1.msra.mxu0 %v427
    %1572 = vmatprep.subr.mxu0 %v432
    %1573 = vmatpush1.msra.mxu0 %v431
    %1574 = vmatprep.subr.mxu0 %v436
    %1575 = vmatpush1.msra.mxu0 %v435
    %1576 = vmatprep.subr.mxu0 %v440
    %1577 = vmatpush1.msra.mxu0 %v439
    %1578 = vmatprep.subr.mxu0 %v444
    %1579 = vmatpush1.msra.mxu0 %v443
    %1580 = vmatprep.subr.mxu0 %v448
    %1581 = vmatpush1.msra.mxu0 %v447
    %1582 = vmatprep.subr.mxu0 %v452
    %1583 = vmatpush1.msra.mxu0 %v451
    %1584 = vmatprep.subr.mxu0 %v456
    %1585 = vmatpush1.msra.mxu0 %v455
    %1586 = vmatprep.subr.mxu0 %v460
    %1587 = vmatpush1.msra.mxu0 %v459
    %1588 = vmatprep.subr.mxu0 %v464
    %1589 = vmatpush1.msra.mxu0 %v463
    %1590 = vmatprep.subr.mxu0 0.0
    %1591 = vmatpush1.msra.mxu0 0.0
    %1592 = vmatprep.subr.mxu0 0.0
    %1593 = vmatpush1.msra.mxu0 0.0
    %1594 = vmatprep.subr.mxu0 0.0
    %1595 = vmatpush1.msra.mxu0 0.0
    %1596 = vmatprep.subr.mxu0 0.0
    %1597 = vmatpush1.msra.mxu0 0.0
    %1598 = vmatprep.subr.mxu0 0.0
    %1599 = vmatpush1.msra.mxu0 0.0
    %1600 = vmatprep.subr.mxu0 0.0
    %1601 = vmatpush1.msra.mxu0 0.0
    %1602 = vmatprep.subr.mxu0 0.0
    %1603 = vmatpush1.msra.mxu0 0.0
    %1604 = vmatprep.subr.mxu0 0.0
    %1605 = vmatpush1.msra.mxu0 0.0
    %1606 = vmatprep.subr.mxu0 0.0
    %1607 = vmatpush1.msra.mxu0 0.0
    %1608 = vmatprep.subr.mxu0 0.0
    %1609 = vmatpush1.msra.mxu0 0.0
    %1610 = vmatprep.subr.mxu0 0.0
    %1611 = vmatpush1.msra.mxu0 0.0
    %1612 = vmatprep.subr.mxu0 0.0
    %1613 = vmatpush1.msra.mxu0 0.0
    %1614 = vmatprep.subr.mxu0 0.0
    %1615 = vmatpush1.msra.mxu0 0.0
    %1616 = vmatprep.subr.mxu0 0.0
    %1617 = vmatpush1.msra.mxu0 0.0
    %1618 = vmatprep.subr.mxu0 0.0
    %1619 = vmatpush1.msra.mxu0 0.0
    %1620 = vmatprep.subr.mxu0 0.0
    %1621 = vmatpush1.msra.mxu0 0.0
    %1622 = vmatprep.mubr.f32.mxu0 0.0
    %1623 = vmatmul.mubr.f32.gmra.mrb[0].mxu0 %v1551
    %v1624 = vpop.f32.mrb[0].mxu0
    %v1625 = vadd.f32 0.0, %v1624
    %v1626 = vpop.f32.mrb[0].mxu0
    %v1627 = vadd.f32 0.0, %v1626
    %1628 = vdwg.mxu0
    %1629 = vmatprep.subr.mxu0 %v406
    %1630 = vmatpush1.msra.mxu0 %v405
    %1631 = vmatprep.subr.mxu0 %v410
    %1632 = vmatpush1.msra.mxu0 %v409
    %1633 = vmatprep.subr.mxu0 %v414
    %1634 = vmatpush1.msra.mxu0 %v413
    %1635 = vmatprep.subr.mxu0 %v418
    %1636 = vmatpush1.msra.mxu0 %v417
    %1637 = vmatprep.subr.mxu0 %v422
    %1638 = vmatpush1.msra.mxu0 %v421
    %1639 = vmatprep.subr.mxu0 %v426
    %1640 = vmatpush1.msra.mxu0 %v425
    %1641 = vmatprep.subr.mxu0 %v430
    %1642 = vmatpush1.msra.mxu0 %v429
    %1643 = vmatprep.subr.mxu0 %v434
    %1644 = vmatpush1.msra.mxu0 %v433
    %1645 = vmatprep.subr.mxu0 %v438
    %1646 = vmatpush1.msra.mxu0 %v437
    %1647 = vmatprep.subr.mxu0 %v442
    %1648 = vmatpush1.msra.mxu0 %v441
    %1649 = vmatprep.subr.mxu0 %v446
    %1650 = vmatpush1.msra.mxu0 %v445
    %1651 = vmatprep.subr.mxu0 %v450
    %1652 = vmatpush1.msra.mxu0 %v449
    %1653 = vmatprep.subr.mxu0 %v454
    %1654 = vmatpush1.msra.mxu0 %v453
    %1655 = vmatprep.subr.mxu0 %v458
    %1656 = vmatpush1.msra.mxu0 %v457
    %1657 = vmatprep.subr.mxu0 %v462
    %1658 = vmatpush1.msra.mxu0 %v461
    %1659 = vmatprep.subr.mxu0 %v466
    %1660 = vmatpush1.msra.mxu0 %v465
    %1661 = vmatprep.subr.mxu0 0.0
    %1662 = vmatpush1.msra.mxu0 0.0
    %1663 = vmatprep.subr.mxu0 0.0
    %1664 = vmatpush1.msra.mxu0 0.0
    %1665 = vmatprep.subr.mxu0 0.0
    %1666 = vmatpush1.msra.mxu0 0.0
    %1667 = vmatprep.subr.mxu0 0.0
    %1668 = vmatpush1.msra.mxu0 0.0
    %1669 = vmatprep.subr.mxu0 0.0
    %1670 = vmatpush1.msra.mxu0 0.0
    %1671 = vmatprep.subr.mxu0 0.0
    %1672 = vmatpush1.msra.mxu0 0.0
    %1673 = vmatprep.subr.mxu0 0.0
    %1674 = vmatpush1.msra.mxu0 0.0
    %1675 = vmatprep.subr.mxu0 0.0
    %1676 = vmatpush1.msra.mxu0 0.0
    %1677 = vmatprep.subr.mxu0 0.0
    %1678 = vmatpush1.msra.mxu0 0.0
    %1679 = vmatprep.subr.mxu0 0.0
    %1680 = vmatpush1.msra.mxu0 0.0
    %1681 = vmatprep.subr.mxu0 0.0
    %1682 = vmatpush1.msra.mxu0 0.0
    %1683 = vmatprep.subr.mxu0 0.0
    %1684 = vmatpush1.msra.mxu0 0.0
    %1685 = vmatprep.subr.mxu0 0.0
    %1686 = vmatpush1.msra.mxu0 0.0
    %1687 = vmatprep.subr.mxu0 0.0
    %1688 = vmatpush1.msra.mxu0 0.0
    %1689 = vmatprep.subr.mxu0 0.0
    %1690 = vmatpush1.msra.mxu0 0.0
    %1691 = vmatprep.subr.mxu0 0.0
    %1692 = vmatpush1.msra.mxu0 0.0
    %1693 = vmatprep.mubr.f32.mxu0 0.0
    %1694 = vmatmul.mubr.f32.gmra.mrb[0].mxu0 %v1551
    %v1695 = vpop.f32.mrb[0].mxu0
    %v1696 = vadd.f32 0.0, %v1695
    %v1697 = vpop.f32.mrb[0].mxu0
    %v1698 = vadd.f32 0.0, %v1697
    %1699 = vdwg.mxu0
    %v1700 = vadd.f32 %v1554, %v1625
    %v1701 = vadd.f32 %v1555, %v1627
    %v1702 = vadd.f32 %v1556, %v1696
    %v1703 = vadd.f32 %v1557, %v1698
    %v1704 = vxor.u32 %v1700, 2147483648
    %v1705 = vxor.u32 %v1701, 2147483648
    %v1706 = vxor.u32 %v1702, 2147483648
    %v1707 = vmul.f32 %v1704, 1.442695
    %v1708 = vpow.pop %v1707
    %v1709 = vmul.f32 %v1705, 1.442695
    %v1710 = vpow.pop %v1709
    %v1711 = vmul.f32 %v1706, 1.442695
    %v1712 = vpow.pop %v1711
    %v1713 = vadd.f32 %v1708, 1.0
    %v1714 = vadd.f32 %v1710, 1.0
    %v1715 = vadd.f32 %v1712, 1.0
    %v1716 = vrcp.pop %v1713
    %v1717 = vmul.f32 1.0, %v1716
    %v1718 = vrcp.pop %v1714
    %v1719 = vmul.f32 1.0, %v1718
    %v1720 = vrcp.pop %v1715
    %v1721 = vmul.f32 1.0, %v1720
    %v1722 = vtanh.pop %v1703
    %v1723 = vmul.f32 %v1719, %v1552
    %v1724 = vmul.f32 %v1717, %v1722
    %v1725 = vadd.f32 %v1723, %v1724
    %v1726 = vtanh.pop %v1725
    %v1727 = vmul.f32 %v1721, %v1726
    %1728 = vst [vmem:[#allocation2] sm:$0xff] %v1727
    %1729 = vst [vmem:[#allocation3] sm:$0xff] %v1725
    %s1730 = scalar_lea.vmem %s4, 48
    %1731 = vst [vmem:[%s1730] sm:$0xff] %v1727
    %v1732 = vld [vmem:[#allocation2] sm:$0xff]
    %v1733 = vld [vmem:[#allocation3] sm:$0xff]
    %s1734 = scalar_lea.vmem [#allocation4], 224
    %v1735 = vld [vmem:[%s1734] sm:$0xff]
    %v1736 = vld [vmem:[%s1734 + $0x8] sm:$0xff]
    %v1737 = vld [vmem:[%s1734 + $0x10] sm:$0xff]
    %v1738 = vld [vmem:[%s1734 + $0x18] sm:$0xff]
    %1739 = vmatprep.subr.mxu0 %v404
    %1740 = vmatpush1.msra.mxu0 %v403
    %1741 = vmatprep.subr.mxu0 %v408
    %1742 = vmatpush1.msra.mxu0 %v407
    %1743 = vmatprep.subr.mxu0 %v412
    %1744 = vmatpush1.msra.mxu0 %v411
    %1745 = vmatprep.subr.mxu0 %v416
    %1746 = vmatpush1.msra.mxu0 %v415
    %1747 = vmatprep.subr.mxu0 %v420
    %1748 = vmatpush1.msra.mxu0 %v419
    %1749 = vmatprep.subr.mxu0 %v424
    %1750 = vmatpush1.msra.mxu0 %v423
    %1751 = vmatprep.subr.mxu0 %v428
    %1752 = vmatpush1.msra.mxu0 %v427
    %1753 = vmatprep.subr.mxu0 %v432
    %1754 = vmatpush1.msra.mxu0 %v431
    %1755 = vmatprep.subr.mxu0 %v436
    %1756 = vmatpush1.msra.mxu0 %v435
    %1757 = vmatprep.subr.mxu0 %v440
    %1758 = vmatpush1.msra.mxu0 %v439
    %1759 = vmatprep.subr.mxu0 %v444
    %1760 = vmatpush1.msra.mxu0 %v443
    %1761 = vmatprep.subr.mxu0 %v448
    %1762 = vmatpush1.msra.mxu0 %v447
    %1763 = vmatprep.subr.mxu0 %v452
    %1764 = vmatpush1.msra.mxu0 %v451
    %1765 = vmatprep.subr.mxu0 %v456
    %1766 = vmatpush1.msra.mxu0 %v455
    %1767 = vmatprep.subr.mxu0 %v460
    %1768 = vmatpush1.msra.mxu0 %v459
    %1769 = vmatprep.subr.mxu0 %v464
    %1770 = vmatpush1.msra.mxu0 %v463
    %1771 = vmatprep.subr.mxu0 0.0
    %1772 = vmatpush1.msra.mxu0 0.0
    %1773 = vmatprep.subr.mxu0 0.0
    %1774 = vmatpush1.msra.mxu0 0.0
    %1775 = vmatprep.subr.mxu0 0.0
    %1776 = vmatpush1.msra.mxu0 0.0
    %1777 = vmatprep.subr.mxu0 0.0
    %1778 = vmatpush1.msra.mxu0 0.0
    %1779 = vmatprep.subr.mxu0 0.0
    %1780 = vmatpush1.msra.mxu0 0.0
    %1781 = vmatprep.subr.mxu0 0.0
    %1782 = vmatpush1.msra.mxu0 0.0
    %1783 = vmatprep.subr.mxu0 0.0
    %1784 = vmatpush1.msra.mxu0 0.0
    %1785 = vmatprep.subr.mxu0 0.0
    %1786 = vmatpush1.msra.mxu0 0.0
    %1787 = vmatprep.subr.mxu0 0.0
    %1788 = vmatpush1.msra.mxu0 0.0
    %1789 = vmatprep.subr.mxu0 0.0
    %1790 = vmatpush1.msra.mxu0 0.0
    %1791 = vmatprep.subr.mxu0 0.0
    %1792 = vmatpush1.msra.mxu0 0.0
    %1793 = vmatprep.subr.mxu0 0.0
    %1794 = vmatpush1.msra.mxu0 0.0
    %1795 = vmatprep.subr.mxu0 0.0
    %1796 = vmatpush1.msra.mxu0 0.0
    %1797 = vmatprep.subr.mxu0 0.0
    %1798 = vmatpush1.msra.mxu0 0.0
    %1799 = vmatprep.subr.mxu0 0.0
    %1800 = vmatpush1.msra.mxu0 0.0
    %1801 = vmatprep.subr.mxu0 0.0
    %1802 = vmatpush1.msra.mxu0 0.0
    %1803 = vmatprep.mubr.f32.mxu0 0.0
    %1804 = vmatmul.mubr.f32.gmra.mrb[0].mxu0 %v1732
    %v1805 = vpop.f32.mrb[0].mxu0
    %v1806 = vadd.f32 0.0, %v1805
    %v1807 = vpop.f32.mrb[0].mxu0
    %v1808 = vadd.f32 0.0, %v1807
    %1809 = vdwg.mxu0
    %1810 = vmatprep.subr.mxu0 %v406
    %1811 = vmatpush1.msra.mxu0 %v405
    %1812 = vmatprep.subr.mxu0 %v410
    %1813 = vmatpush1.msra.mxu0 %v409
    %1814 = vmatprep.subr.mxu0 %v414
    %1815 = vmatpush1.msra.mxu0 %v413
    %1816 = vmatprep.subr.mxu0 %v418
    %1817 = vmatpush1.msra.mxu0 %v417
    %1818 = vmatprep.subr.mxu0 %v422
    %1819 = vmatpush1.msra.mxu0 %v421
    %1820 = vmatprep.subr.mxu0 %v426
    %1821 = vmatpush1.msra.mxu0 %v425
    %1822 = vmatprep.subr.mxu0 %v430
    %1823 = vmatpush1.msra.mxu0 %v429
    %1824 = vmatprep.subr.mxu0 %v434
    %1825 = vmatpush1.msra.mxu0 %v433
    %1826 = vmatprep.subr.mxu0 %v438
    %1827 = vmatpush1.msra.mxu0 %v437
    %1828 = vmatprep.subr.mxu0 %v442
    %1829 = vmatpush1.msra.mxu0 %v441
    %1830 = vmatprep.subr.mxu0 %v446
    %1831 = vmatpush1.msra.mxu0 %v445
    %1832 = vmatprep.subr.mxu0 %v450
    %1833 = vmatpush1.msra.mxu0 %v449
    %1834 = vmatprep.subr.mxu0 %v454
    %1835 = vmatpush1.msra.mxu0 %v453
    %1836 = vmatprep.subr.mxu0 %v458
    %1837 = vmatpush1.msra.mxu0 %v457
    %1838 = vmatprep.subr.mxu0 %v462
    %1839 = vmatpush1.msra.mxu0 %v461
    %1840 = vmatprep.subr.mxu0 %v466
    %1841 = vmatpush1.msra.mxu0 %v465
    %1842 = vmatprep.subr.mxu0 0.0
    %1843 = vmatpush1.msra.mxu0 0.0
    %1844 = vmatprep.subr.mxu0 0.0
    %1845 = vmatpush1.msra.mxu0 0.0
    %1846 = vmatprep.subr.mxu0 0.0
    %1847 = vmatpush1.msra.mxu0 0.0
    %1848 = vmatprep.subr.mxu0 0.0
    %1849 = vmatpush1.msra.mxu0 0.0
    %1850 = vmatprep.subr.mxu0 0.0
    %1851 = vmatpush1.msra.mxu0 0.0
    %1852 = vmatprep.subr.mxu0 0.0
    %1853 = vmatpush1.msra.mxu0 0.0
    %1854 = vmatprep.subr.mxu0 0.0
    %1855 = vmatpush1.msra.mxu0 0.0
    %1856 = vmatprep.subr.mxu0 0.0
    %1857 = vmatpush1.msra.mxu0 0.0
    %1858 = vmatprep.subr.mxu0 0.0
    %1859 = vmatpush1.msra.mxu0 0.0
    %1860 = vmatprep.subr.mxu0 0.0
    %1861 = vmatpush1.msra.mxu0 0.0
    %1862 = vmatprep.subr.mxu0 0.0
    %1863 = vmatpush1.msra.mxu0 0.0
    %1864 = vmatprep.subr.mxu0 0.0
    %1865 = vmatpush1.msra.mxu0 0.0
    %1866 = vmatprep.subr.mxu0 0.0
    %1867 = vmatpush1.msra.mxu0 0.0
    %1868 = vmatprep.subr.mxu0 0.0
    %1869 = vmatpush1.msra.mxu0 0.0
    %1870 = vmatprep.subr.mxu0 0.0
    %1871 = vmatpush1.msra.mxu0 0.0
    %1872 = vmatprep.subr.mxu0 0.0
    %1873 = vmatpush1.msra.mxu0 0.0
    %1874 = vmatprep.mubr.f32.mxu0 0.0
    %1875 = vmatmul.mubr.f32.gmra.mrb[0].mxu0 %v1732
    %v1876 = vpop.f32.mrb[0].mxu0
    %v1877 = vadd.f32 0.0, %v1876
    %v1878 = vpop.f32.mrb[0].mxu0
    %v1879 = vadd.f32 0.0, %v1878
    %1880 = vdwg.mxu0
    %v1881 = vadd.f32 %v1735, %v1806
    %v1882 = vadd.f32 %v1736, %v1808
    %v1883 = vadd.f32 %v1737, %v1877
    %v1884 = vadd.f32 %v1738, %v1879
    %v1885 = vxor.u32 %v1881, 2147483648
    %v1886 = vxor.u32 %v1882, 2147483648
    %v1887 = vxor.u32 %v1883, 2147483648
    %v1888 = vmul.f32 %v1885, 1.442695
    %v1889 = vpow.pop %v1888
    %v1890 = vmul.f32 %v1886, 1.442695
    %v1891 = vpow.pop %v1890
    %v1892 = vmul.f32 %v1887, 1.442695
    %v1893 = vpow.pop %v1892
    %v1894 = vadd.f32 %v1889, 1.0
    %v1895 = vadd.f32 %v1891, 1.0
    %v1896 = vadd.f32 %v1893, 1.0
    %v1897 = vrcp.pop %v1894
    %v1898 = vmul.f32 1.0, %v1897
    %v1899 = vrcp.pop %v1895
    %v1900 = vmul.f32 1.0, %v1899
    %v1901 = vrcp.pop %v1896
    %v1902 = vmul.f32 1.0, %v1901
    %v1903 = vtanh.pop %v1884
    %v1904 = vmul.f32 %v1900, %v1733
    %v1905 = vmul.f32 %v1898, %v1903
    %v1906 = vadd.f32 %v1904, %v1905
    %v1907 = vtanh.pop %v1906
    %v1908 = vmul.f32 %v1902, %v1907
    %1909 = vst [vmem:[#allocation2] sm:$0xff] %v1908
    %1910 = vst [vmem:[#allocation3] sm:$0xff] %v1906
    %s1911 = scalar_lea.vmem %s4, 56
    %1912 = vst [vmem:[%s1911] sm:$0xff] %v1908
    // Predicated region
    $region30: #{encoder_forward.2} parent=1 // pred_check
      _
    $region31: #{encoder_forward.2} parent=1 // pred_check_branch
      %1914 = sbr.rel (0) target = $region33
    $region32: #{encoder_forward.2} parent=1 // pred_region
      _
    $region33: #{encoder_forward.2} parent=1 // pred_fallthru
      _
    // Predicated region
    $region34: #{encoder_forward.2} parent=1 // pred_check
      _
    $region35: #{encoder_forward.2} parent=1 // pred_check_branch
      %1916 = sbr.rel (0) target = $region37
    $region36: #{encoder_forward.2} parent=1 // pred_region
      _
    $region37: #{encoder_forward.2} parent=1 // pred_fallthru
      _
    %1917 = vsyncpa [#allocation6], 1
    %1918 = vsyncpa [#allocation8], 1

// kernel: encoder_forward.3
$region0: #{encoder_forward.3}
  #allocation0 [shape = 'u32[]', space=smem, size = 0x4, offset = 0x4, fixed_abs, tag = 'smem constant byte address 0x4 - core index']
  #allocation1 [shape = 'u32[144,128]{1,0:T(1,128)}', space=vmem, size = 0x12000, scoped, tag = 'internal scratch']
  #allocation2 [shape = 'f32[8,128]{1,0:T(8,128)}', space=vmem, size = 0x1000, scoped, tag = 'scratch operand']
  #allocation3 [shape = 'f32[8,128]{1,0:T(8,128)}', space=vmem, size = 0x1000, scoped, tag = 'scratch operand']
  #allocation4 [shape = 'f32[8,8,512]{2,1,0:T(8,128)}', space=vmem, size = 0x20000, scoped, tag = 'scratch operand']
  %s0 = inlined_call_operand.vmem [shape: f32[8,8,128], index: 0, kind: input, shape index: {}]
  %s1 = inlined_call_operand.vmem [shape: f32[128,512], index: 1, kind: input, shape index: {}]
  %s2 = inlined_call_operand.vmem [shape: f32[128,512], index: 2, kind: input, shape index: {}]
  %s3 = inlined_call_operand.vmem [shape: f32[1,512], index: 3, kind: input, shape index: {}]
  %s4 = inlined_call_operand.vmem [shape: f32[8,128], index: 4, kind: output, shape index: {}]
  %s5 = sld [smem:[#allocation0]]
  $region34: #{encoder_forward.3} parent=0
    _
  %s7 = ssub.s32 1, %s5
  %s8 = scalar_select 0, %s7, %s5
  // Predicated region
  $region2: #{encoder_forward.3} parent=0 // pred_check
    _
  $region3: #{encoder_forward.3} parent=0 // pred_check_branch
    %10 = sbr.rel (0) target = $region5
  $region4: #{encoder_forward.3} parent=0 // pred_region
    _
  $region5: #{encoder_forward.3} parent=0 // pred_fallthru
    _
  // Predicated region
  $region6: #{encoder_forward.3} parent=0 // pred_check
    _
  $region7: #{encoder_forward.3} parent=0 // pred_check_branch
    %12 = sbr.rel (0) target = $region9
  $region8: #{encoder_forward.3} parent=0 // pred_region
    _
  $region9: #{encoder_forward.3} parent=0 // pred_fallthru
    _
  // Predicated region
  $region10: #{encoder_forward.3} parent=0 // pred_check
    _
  $region11: #{encoder_forward.3} parent=0 // pred_check_branch
    %14 = sbr.rel (0) target = $region13
  $region12: #{encoder_forward.3} parent=0 // pred_region
    _
  $region13: #{encoder_forward.3} parent=0 // pred_fallthru
    _
  // Predicated region
  $region14: #{encoder_forward.3} parent=0 // pred_check
    _
  $region15: #{encoder_forward.3} parent=0 // pred_check_branch
    %16 = sbr.rel (0) target = $region17
  $region16: #{encoder_forward.3} parent=0 // pred_region
    _
  $region17: #{encoder_forward.3} parent=0 // pred_fallthru
    _
  %p17 = scmp.eq.s32.totalorder 0, 0
  // Predicated region
  $region18: #{encoder_forward.3} parent=0 // pred_check
    %p18 = pneg %p17
  $region19: #{encoder_forward.3} parent=0 // pred_check_branch
    %20 = sbr.rel (%p18) target = $region21
  $region20: #{encoder_forward.3} parent=0 // pred_region
    %21 = vst [vmem:[#allocation2] sm:$0xff] 0.0
    %22 = vst [vmem:[#allocation3] sm:$0xff] 0.0
  $region21: #{encoder_forward.3} parent=0 // pred_fallthru
    _
  %v23 = vld [vmem:[%s0] sm:$0xff]
  %v24 = vld [vmem:[%s0 + $0x8] sm:$0xff]
  %v25 = vld [vmem:[%s0 + $0x10] sm:$0xff]
  %v26 = vld [vmem:[%s0 + $0x18] sm:$0xff]
  %v27 = vld [vmem:[%s0 + $0x20] sm:$0xff]
  %v28 = vld [vmem:[%s0 + $0x28] sm:$0xff]
  %v29 = vld [vmem:[%s0 + $0x30] sm:$0xff]
  %v30 = vld [vmem:[%s0 + $0x38] sm:$0xff]
  %v31 = vld [vmem:[%s1] sm:$0xff]
  %v32 = vld [vmem:[%s1 + $0x8] sm:$0xff]
  %v33 = vld [vmem:[%s1 + $0x10] sm:$0xff]
  %v34 = vld [vmem:[%s1 + $0x18] sm:$0xff]
  %v35 = vld [vmem:[%s1 + $0x20] sm:$0xff]
  %v36 = vld [vmem:[%s1 + $0x28] sm:$0xff]
  %v37 = vld [vmem:[%s1 + $0x30] sm:$0xff]
  %v38 = vld [vmem:[%s1 + $0x38] sm:$0xff]
  %v39 = vld [vmem:[%s1 + $0x40] sm:$0xff]
  %v40 = vld [vmem:[%s1 + $0x48] sm:$0xff]
  %v41 = vld [vmem:[%s1 + $0x50] sm:$0xff]
  %v42 = vld [vmem:[%s1 + $0x58] sm:$0xff]
  %v43 = vld [vmem:[%s1 + $0x60] sm:$0xff]
  %v44 = vld [vmem:[%s1 + $0x68] sm:$0xff]
  %v45 = vld [vmem:[%s1 + $0x70] sm:$0xff]
  %v46 = vld [vmem:[%s1 + $0x78] sm:$0xff]
  %v47 = vld [vmem:[%s1 + $0x80] sm:$0xff]
  %v48 = vld [vmem:[%s1 + $0x88] sm:$0xff]
  %v49 = vld [vmem:[%s1 + $0x90] sm:$0xff]
  %v50 = vld [vmem:[%s1 + $0x98] sm:$0xff]
  %v51 = vld [vmem:[%s1 + $0xa0] sm:$0xff]
  %v52 = vld [vmem:[%s1 + $0xa8] sm:$0xff]
  %v53 = vld [vmem:[%s1 + $0xb0] sm:$0xff]
  %v54 = vld [vmem:[%s1 + $0xb8] sm:$0xff]
  %v55 = vld [vmem:[%s1 + $0xc0] sm:$0xff]
  %v56 = vld [vmem:[%s1 + $0xc8] sm:$0xff]
  %v57 = vld [vmem:[%s1 + $0xd0] sm:$0xff]
  %v58 = vld [vmem:[%s1 + $0xd8] sm:$0xff]
  %v59 = vld [vmem:[%s1 + $0xe0] sm:$0xff]
  %v60 = vld [vmem:[%s1 + $0xe8] sm:$0xff]
  %v61 = vld [vmem:[%s1 + $0xf0] sm:$0xff]
  %v62 = vld [vmem:[%s1 + $0xf8] sm:$0xff]
  %v63 = vld [vmem:[%s1 + $0x100] sm:$0xff]
  %v64 = vld [vmem:[%s1 + $0x108] sm:$0xff]
  %v65 = vld [vmem:[%s1 + $0x110] sm:$0xff]
  %v66 = vld [vmem:[%s1 + $0x118] sm:$0xff]
  %v67 = vld [vmem:[%s1 + $0x120] sm:$0xff]
  %v68 = vld [vmem:[%s1 + $0x128] sm:$0xff]
  %v69 = vld [vmem:[%s1 + $0x130] sm:$0xff]
  %v70 = vld [vmem:[%s1 + $0x138] sm:$0xff]
  %v71 = vld [vmem:[%s1 + $0x140] sm:$0xff]
  %v72 = vld [vmem:[%s1 + $0x148] sm:$0xff]
  %v73 = vld [vmem:[%s1 + $0x150] sm:$0xff]
  %v74 = vld [vmem:[%s1 + $0x158] sm:$0xff]
  %v75 = vld [vmem:[%s1 + $0x160] sm:$0xff]
  %v76 = vld [vmem:[%s1 + $0x168] sm:$0xff]
  %v77 = vld [vmem:[%s1 + $0x170] sm:$0xff]
  %v78 = vld [vmem:[%s1 + $0x178] sm:$0xff]
  %v79 = vld [vmem:[%s1 + $0x180] sm:$0xff]
  %v80 = vld [vmem:[%s1 + $0x188] sm:$0xff]
  %v81 = vld [vmem:[%s1 + $0x190] sm:$0xff]
  %v82 = vld [vmem:[%s1 + $0x198] sm:$0xff]
  %v83 = vld [vmem:[%s1 + $0x1a0] sm:$0xff]
  %v84 = vld [vmem:[%s1 + $0x1a8] sm:$0xff]
  %v85 = vld [vmem:[%s1 + $0x1b0] sm:$0xff]
  %v86 = vld [vmem:[%s1 + $0x1b8] sm:$0xff]
  %v87 = vld [vmem:[%s1 + $0x1c0] sm:$0xff]
  %v88 = vld [vmem:[%s1 + $0x1c8] sm:$0xff]
  %v89 = vld [vmem:[%s1 + $0x1d0] sm:$0xff]
  %v90 = vld [vmem:[%s1 + $0x1d8] sm:$0xff]
  %v91 = vld [vmem:[%s1 + $0x1e0] sm:$0xff]
  %v92 = vld [vmem:[%s1 + $0x1e8] sm:$0xff]
  %v93 = vld [vmem:[%s1 + $0x1f0] sm:$0xff]
  %v94 = vld [vmem:[%s1 + $0x1f8] sm:$0xff]
  %v95 = vld [vmem:[%s3] sm:$0xf]
  %v97 = vlaneseq
  %v98 = vshrl.u32 %v97, 7
  %v99 = vsub.s32 0, %v98
  %v100 = vrot.slane %v95, %v99
  %v101 = vlaneseq
  %v102 = vshrl.u32 %v101, 7
  %v103 = vsub.s32 1, %v102
  %v104 = vrot.slane %v95, %v103
  %v105 = vlaneseq
  %v106 = vshrl.u32 %v105, 7
  %v107 = vsub.s32 2, %v106
  %v108 = vrot.slane %v95, %v107
  %v109 = vlaneseq
  %v110 = vshrl.u32 %v109, 7
  %v111 = vsub.s32 3, %v110
  %v112 = vrot.slane %v95, %v111
  %117 = vmatprep.subr.mxu0 %v32
  %118 = vmatpush1.msra.mxu0 %v31
  %119 = vmatprep.subr.mxu0 %v36
  %120 = vmatpush1.msra.mxu0 %v35
  %121 = vmatprep.subr.mxu0 %v40
  %122 = vmatpush1.msra.mxu0 %v39
  %123 = vmatprep.subr.mxu0 %v44
  %124 = vmatpush1.msra.mxu0 %v43
  %125 = vmatprep.subr.mxu0 %v48
  %126 = vmatpush1.msra.mxu0 %v47
  %127 = vmatprep.subr.mxu0 %v52
  %128 = vmatpush1.msra.mxu0 %v51
  %129 = vmatprep.subr.mxu0 %v56
  %130 = vmatpush1.msra.mxu0 %v55
  %131 = vmatprep.subr.mxu0 %v60
  %132 = vmatpush1.msra.mxu0 %v59
  %133 = vmatprep.subr.mxu0 %v64
  %134 = vmatpush1.msra.mxu0 %v63
  %135 = vmatprep.subr.mxu0 %v68
  %136 = vmatpush1.msra.mxu0 %v67
  %137 = vmatprep.subr.mxu0 %v72
  %138 = vmatpush1.msra.mxu0 %v71
  %139 = vmatprep.subr.mxu0 %v76
  %140 = vmatpush1.msra.mxu0 %v75
  %141 = vmatprep.subr.mxu0 %v80
  %142 = vmatpush1.msra.mxu0 %v79
  %143 = vmatprep.subr.mxu0 %v84
  %144 = vmatpush1.msra.mxu0 %v83
  %145 = vmatprep.subr.mxu0 %v88
  %146 = vmatpush1.msra.mxu0 %v87
  %147 = vmatprep.subr.mxu0 %v92
  %148 = vmatpush1.msra.mxu0 %v91
  %149 = vmatprep.subr.mxu0 0.0
  %150 = vmatpush1.msra.mxu0 0.0
  %151 = vmatprep.subr.mxu0 0.0
  %152 = vmatpush1.msra.mxu0 0.0
  %153 = vmatprep.subr.mxu0 0.0
  %154 = vmatpush1.msra.mxu0 0.0
  %155 = vmatprep.subr.mxu0 0.0
  %156 = vmatpush1.msra.mxu0 0.0
  %157 = vmatprep.subr.mxu0 0.0
  %158 = vmatpush1.msra.mxu0 0.0
  %159 = vmatprep.subr.mxu0 0.0
  %160 = vmatpush1.msra.mxu0 0.0
  %161 = vmatprep.subr.mxu0 0.0
  %162 = vmatpush1.msra.mxu0 0.0
  %163 = vmatprep.subr.mxu0 0.0
  %164 = vmatpush1.msra.mxu0 0.0
  %165 = vmatprep.subr.mxu0 0.0
  %166 = vmatpush1.msra.mxu0 0.0
  %167 = vmatprep.subr.mxu0 0.0
  %168 = vmatpush1.msra.mxu0 0.0
  %169 = vmatprep.subr.mxu0 0.0
  %170 = vmatpush1.msra.mxu0 0.0
  %171 = vmatprep.subr.mxu0 0.0
  %172 = vmatpush1.msra.mxu0 0.0
  %173 = vmatprep.subr.mxu0 0.0
  %174 = vmatpush1.msra.mxu0 0.0
  %175 = vmatprep.subr.mxu0 0.0
  %176 = vmatpush1.msra.mxu0 0.0
  %177 = vmatprep.subr.mxu0 0.0
  %178 = vmatpush1.msra.mxu0 0.0
  %179 = vmatprep.subr.mxu0 0.0
  %180 = vmatpush1.msra.mxu0 0.0
  %181 = vmatprep.mubr.f32.mxu0 0.0
  %182 = vmatmul.mubr.f32.gmra.mrb[0].mxu0 %v23
  %v183 = vpop.f32.mrb[0].mxu0
  %v184 = vadd.f32 %v100, %v183
  %v185 = vpop.f32.mrb[0].mxu0
  %v186 = vadd.f32 %v104, %v185
  %187 = vmatprep.mubr.f32.mxu0 0.0
  %188 = vmatmul.mubr.f32.gmra.mrb[0].mxu0 %v24
  %v189 = vpop.f32.mrb[0].mxu0
  %v190 = vadd.f32 %v100, %v189
  %v191 = vpop.f32.mrb[0].mxu0
  %v192 = vadd.f32 %v104, %v191
  %193 = vmatprep.mubr.f32.mxu0 0.0
  %194 = vmatmul.mubr.f32.gmra.mrb[0].mxu0 %v25
  %v195 = vpop.f32.mrb[0].mxu0
  %v196 = vadd.f32 %v100, %v195
  %v197 = vpop.f32.mrb[0].mxu0
  %v198 = vadd.f32 %v104, %v197
  %199 = vmatprep.mubr.f32.mxu0 0.0
  %200 = vmatmul.mubr.f32.gmra.mrb[0].mxu0 %v26
  %v201 = vpop.f32.mrb[0].mxu0
  %v202 = vadd.f32 %v100, %v201
  %v203 = vpop.f32.mrb[0].mxu0
  %v204 = vadd.f32 %v104, %v203
  %205 = vmatprep.mubr.f32.mxu0 0.0
  %206 = vmatmul.mubr.f32.gmra.mrb[0].mxu0 %v27
  %v207 = vpop.f32.mrb[0].mxu0
  %v208 = vadd.f32 %v100, %v207
  %v209 = vpop.f32.mrb[0].mxu0
  %v210 = vadd.f32 %v104, %v209
  %211 = vmatprep.mubr.f32.mxu0 0.0
  %212 = vmatmul.mubr.f32.gmra.mrb[0].mxu0 %v28
  %v213 = vpop.f32.mrb[0].mxu0
  %v214 = vadd.f32 %v100, %v213
  %v215 = vpop.f32.mrb[0].mxu0
  %v216 = vadd.f32 %v104, %v215
  %217 = vmatprep.mubr.f32.mxu0 0.0
  %218 = vmatmul.mubr.f32.gmra.mrb[0].mxu0 %v29
  %v219 = vpop.f32.mrb[0].mxu0
  %v220 = vadd.f32 %v100, %v219
  %v221 = vpop.f32.mrb[0].mxu0
  %v222 = vadd.f32 %v104, %v221
  %223 = vmatprep.mubr.f32.mxu0 0.0
  %224 = vmatmul.mubr.f32.gmra.mrb[0].mxu0 %v30
  %v225 = vpop.f32.mrb[0].mxu0
  %v226 = vadd.f32 %v100, %v225
  %v227 = vpop.f32.mrb[0].mxu0
  %v228 = vadd.f32 %v104, %v227
  %229 = vdwg.mxu0
  %230 = vmatprep.subr.mxu0 %v34
  %231 = vmatpush1.msra.mxu0 %v33
  %232 = vmatprep.subr.mxu0 %v38
  %233 = vmatpush1.msra.mxu0 %v37
  %234 = vmatprep.subr.mxu0 %v42
  %235 = vmatpush1.msra.mxu0 %v41
  %236 = vmatprep.subr.mxu0 %v46
  %237 = vmatpush1.msra.mxu0 %v45
  %238 = vmatprep.subr.mxu0 %v50
  %239 = vmatpush1.msra.mxu0 %v49
  %240 = vmatprep.subr.mxu0 %v54
  %241 = vmatpush1.msra.mxu0 %v53
  %242 = vmatprep.subr.mxu0 %v58
  %243 = vmatpush1.msra.mxu0 %v57
  %244 = vmatprep.subr.mxu0 %v62
  %245 = vmatpush1.msra.mxu0 %v61
  %246 = vmatprep.subr.mxu0 %v66
  %247 = vmatpush1.msra.mxu0 %v65
  %248 = vmatprep.subr.mxu0 %v70
  %249 = vmatpush1.msra.mxu0 %v69
  %250 = vmatprep.subr.mxu0 %v74
  %251 = vmatpush1.msra.mxu0 %v73
  %252 = vmatprep.subr.mxu0 %v78
  %253 = vmatpush1.msra.mxu0 %v77
  %254 = vmatprep.subr.mxu0 %v82
  %255 = vmatpush1.msra.mxu0 %v81
  %256 = vmatprep.subr.mxu0 %v86
  %257 = vmatpush1.msra.mxu0 %v85
  %258 = vmatprep.subr.mxu0 %v90
  %259 = vmatpush1.msra.mxu0 %v89
  %260 = vmatprep.subr.mxu0 %v94
  %261 = vmatpush1.msra.mxu0 %v93
  %262 = vmatprep.subr.mxu0 0.0
  %263 = vmatpush1.msra.mxu0 0.0
  %264 = vmatprep.subr.mxu0 0.0
  %265 = vmatpush1.msra.mxu0 0.0
  %266 = vmatprep.subr.mxu0 0.0
  %267 = vmatpush1.msra.mxu0 0.0
  %268 = vmatprep.subr.mxu0 0.0
  %269 = vmatpush1.msra.mxu0 0.0
  %270 = vmatprep.subr.mxu0 0.0
  %271 = vmatpush1.msra.mxu0 0.0
  %272 = vmatprep.subr.mxu0 0.0
  %273 = vmatpush1.msra.mxu0 0.0
  %274 = vmatprep.subr.mxu0 0.0
  %275 = vmatpush1.msra.mxu0 0.0
  %276 = vmatprep.subr.mxu0 0.0
  %277 = vmatpush1.msra.mxu0 0.0
  %278 = vmatprep.subr.mxu0 0.0
  %279 = vmatpush1.msra.mxu0 0.0
  %280 = vmatprep.subr.mxu0 0.0
  %281 = vmatpush1.msra.mxu0 0.0
  %282 = vmatprep.subr.mxu0 0.0
  %283 = vmatpush1.msra.mxu0 0.0
  %284 = vmatprep.subr.mxu0 0.0
  %285 = vmatpush1.msra.mxu0 0.0
  %286 = vmatprep.subr.mxu0 0.0
  %287 = vmatpush1.msra.mxu0 0.0
  %288 = vmatprep.subr.mxu0 0.0
  %289 = vmatpush1.msra.mxu0 0.0
  %290 = vmatprep.subr.mxu0 0.0
  %291 = vmatpush1.msra.mxu0 0.0
  %292 = vmatprep.subr.mxu0 0.0
  %293 = vmatpush1.msra.mxu0 0.0
  %294 = vmatprep.mubr.f32.mxu0 0.0
  %295 = vmatmul.mubr.f32.gmra.mrb[0].mxu0 %v23
  %v296 = vpop.f32.mrb[0].mxu0
  %v297 = vadd.f32 %v108, %v296
  %v298 = vpop.f32.mrb[0].mxu0
  %v299 = vadd.f32 %v112, %v298
  %300 = vmatprep.mubr.f32.mxu0 0.0
  %301 = vmatmul.mubr.f32.gmra.mrb[0].mxu0 %v24
  %v302 = vpop.f32.mrb[0].mxu0
  %v303 = vadd.f32 %v108, %v302
  %v304 = vpop.f32.mrb[0].mxu0
  %v305 = vadd.f32 %v112, %v304
  %306 = vmatprep.mubr.f32.mxu0 0.0
  %307 = vmatmul.mubr.f32.gmra.mrb[0].mxu0 %v25
  %v308 = vpop.f32.mrb[0].mxu0
  %v309 = vadd.f32 %v108, %v308
  %v310 = vpop.f32.mrb[0].mxu0
  %v311 = vadd.f32 %v112, %v310
  %312 = vmatprep.mubr.f32.mxu0 0.0
  %313 = vmatmul.mubr.f32.gmra.mrb[0].mxu0 %v26
  %v314 = vpop.f32.mrb[0].mxu0
  %v315 = vadd.f32 %v108, %v314
  %v316 = vpop.f32.mrb[0].mxu0
  %v317 = vadd.f32 %v112, %v316
  %318 = vmatprep.mubr.f32.mxu0 0.0
  %319 = vmatmul.mubr.f32.gmra.mrb[0].mxu0 %v27
  %v320 = vpop.f32.mrb[0].mxu0
  %v321 = vadd.f32 %v108, %v320
  %v322 = vpop.f32.mrb[0].mxu0
  %v323 = vadd.f32 %v112, %v322
  %324 = vmatprep.mubr.f32.mxu0 0.0
  %325 = vmatmul.mubr.f32.gmra.mrb[0].mxu0 %v28
  %v326 = vpop.f32.mrb[0].mxu0
  %v327 = vadd.f32 %v108, %v326
  %v328 = vpop.f32.mrb[0].mxu0
  %v329 = vadd.f32 %v112, %v328
  %330 = vmatprep.mubr.f32.mxu0 0.0
  %331 = vmatmul.mubr.f32.gmra.mrb[0].mxu0 %v29
  %v332 = vpop.f32.mrb[0].mxu0
  %v333 = vadd.f32 %v108, %v332
  %v334 = vpop.f32.mrb[0].mxu0
  %v335 = vadd.f32 %v112, %v334
  %336 = vmatprep.mubr.f32.mxu0 0.0
  %337 = vmatmul.mubr.f32.gmra.mrb[0].mxu0 %v30
  %v338 = vpop.f32.mrb[0].mxu0
  %v339 = vadd.f32 %v108, %v338
  %v340 = vpop.f32.mrb[0].mxu0
  %v341 = vadd.f32 %v112, %v340
  %342 = vdwg.mxu0
  %343 = vst [vmem:[#allocation4] sm:$0xff] %v184
  %344 = vst [vmem:[#allocation4 + $0x8] sm:$0xff] %v186
  %345 = vst [vmem:[#allocation4 + $0x10] sm:$0xff] %v297
  %346 = vst [vmem:[#allocation4 + $0x18] sm:$0xff] %v299
  %347 = vst [vmem:[#allocation4 + $0x20] sm:$0xff] %v190
  %348 = vst [vmem:[#allocation4 + $0x28] sm:$0xff] %v192
  %349 = vst [vmem:[#allocation4 + $0x30] sm:$0xff] %v303
  %350 = vst [vmem:[#allocation4 + $0x38] sm:$0xff] %v305
  %351 = vst [vmem:[#allocation4 + $0x40] sm:$0xff] %v196
  %352 = vst [vmem:[#allocation4 + $0x48] sm:$0xff] %v198
  %353 = vst [vmem:[#allocation4 + $0x50] sm:$0xff] %v309
  %354 = vst [vmem:[#allocation4 + $0x58] sm:$0xff] %v311
  %355 = vst [vmem:[#allocation4 + $0x60] sm:$0xff] %v202
  %356 = vst [vmem:[#allocation4 + $0x68] sm:$0xff] %v204
  %357 = vst [vmem:[#allocation4 + $0x70] sm:$0xff] %v315
  %358 = vst [vmem:[#allocation4 + $0x78] sm:$0xff] %v317
  %359 = vst [vmem:[#allocation4 + $0x80] sm:$0xff] %v208
  %360 = vst [vmem:[#allocation4 + $0x88] sm:$0xff] %v210
  %361 = vst [vmem:[#allocation4 + $0x90] sm:$0xff] %v321
  %362 = vst [vmem:[#allocation4 + $0x98] sm:$0xff] %v323
  %363 = vst [vmem:[#allocation4 + $0xa0] sm:$0xff] %v214
  %364 = vst [vmem:[#allocation4 + $0xa8] sm:$0xff] %v216
  %365 = vst [vmem:[#allocation4 + $0xb0] sm:$0xff] %v327
  %366 = vst [vmem:[#allocation4 + $0xb8] sm:$0xff] %v329
  %367 = vst [vmem:[#allocation4 + $0xc0] sm:$0xff] %v220
  %368 = vst [vmem:[#allocation4 + $0xc8] sm:$0xff] %v222
  %369 = vst [vmem:[#allocation4 + $0xd0] sm:$0xff] %v333
  %370 = vst [vmem:[#allocation4 + $0xd8] sm:$0xff] %v335
  %371 = vst [vmem:[#allocation4 + $0xe0] sm:$0xff] %v226
  %372 = vst [vmem:[#allocation4 + $0xe8] sm:$0xff] %v228
  %373 = vst [vmem:[#allocation4 + $0xf0] sm:$0xff] %v339
  %374 = vst [vmem:[#allocation4 + $0xf8] sm:$0xff] %v341
  %v375 = vld [vmem:[%s2] sm:$0xff]
  %v376 = vld [vmem:[%s2 + $0x8] sm:$0xff]
  %v377 = vld [vmem:[%s2 + $0x10] sm:$0xff]
  %v378 = vld [vmem:[%s2 + $0x18] sm:$0xff]
  %v379 = vld [vmem:[%s2 + $0x20] sm:$0xff]
  %v380 = vld [vmem:[%s2 + $0x28] sm:$0xff]
  %v381 = vld [vmem:[%s2 + $0x30] sm:$0xff]
  %v382 = vld [vmem:[%s2 + $0x38] sm:$0xff]
  %v383 = vld [vmem:[%s2 + $0x40] sm:$0xff]
  %v384 = vld [vmem:[%s2 + $0x48] sm:$0xff]
  %v385 = vld [vmem:[%s2 + $0x50] sm:$0xff]
  %v386 = vld [vmem:[%s2 + $0x58] sm:$0xff]
  %v387 = vld [vmem:[%s2 + $0x60] sm:$0xff]
  %v388 = vld [vmem:[%s2 + $0x68] sm:$0xff]
  %v389 = vld [vmem:[%s2 + $0x70] sm:$0xff]
  %v390 = vld [vmem:[%s2 + $0x78] sm:$0xff]
  %v391 = vld [vmem:[%s2 + $0x80] sm:$0xff]
  %v392 = vld [vmem:[%s2 + $0x88] sm:$0xff]
  %v393 = vld [vmem:[%s2 + $0x90] sm:$0xff]
  %v394 = vld [vmem:[%s2 + $0x98] sm:$0xff]
  %v395 = vld [vmem:[%s2 + $0xa0] sm:$0xff]
  %v396 = vld [vmem:[%s2 + $0xa8] sm:$0xff]
  %v397 = vld [vmem:[%s2 + $0xb0] sm:$0xff]
  %v398 = vld [vmem:[%s2 + $0xb8] sm:$0xff]
  %v399 = vld [vmem:[%s2 + $0xc0] sm:$0xff]
  %v400 = vld [vmem:[%s2 + $0xc8] sm:$0xff]
  %v401 = vld [vmem:[%s2 + $0xd0] sm:$0xff]
  %v402 = vld [vmem:[%s2 + $0xd8] sm:$0xff]
  %v403 = vld [vmem:[%s2 + $0xe0] sm:$0xff]
  %v404 = vld [vmem:[%s2 + $0xe8] sm:$0xff]
  %v405 = vld [vmem:[%s2 + $0xf0] sm:$0xff]
  %v406 = vld [vmem:[%s2 + $0xf8] sm:$0xff]
  %v407 = vld [vmem:[%s2 + $0x100] sm:$0xff]
  %v408 = vld [vmem:[%s2 + $0x108] sm:$0xff]
  %v409 = vld [vmem:[%s2 + $0x110] sm:$0xff]
  %v410 = vld [vmem:[%s2 + $0x118] sm:$0xff]
  %v411 = vld [vmem:[%s2 + $0x120] sm:$0xff]
  %v412 = vld [vmem:[%s2 + $0x128] sm:$0xff]
  %v413 = vld [vmem:[%s2 + $0x130] sm:$0xff]
  %v414 = vld [vmem:[%s2 + $0x138] sm:$0xff]
  %v415 = vld [vmem:[%s2 + $0x140] sm:$0xff]
  %v416 = vld [vmem:[%s2 + $0x148] sm:$0xff]
  %v417 = vld [vmem:[%s2 + $0x150] sm:$0xff]
  %v418 = vld [vmem:[%s2 + $0x158] sm:$0xff]
  %v419 = vld [vmem:[%s2 + $0x160] sm:$0xff]
  %v420 = vld [vmem:[%s2 + $0x168] sm:$0xff]
  %v421 = vld [vmem:[%s2 + $0x170] sm:$0xff]
  %v422 = vld [vmem:[%s2 + $0x178] sm:$0xff]
  %v423 = vld [vmem:[%s2 + $0x180] sm:$0xff]
  %v424 = vld [vmem:[%s2 + $0x188] sm:$0xff]
  %v425 = vld [vmem:[%s2 + $0x190] sm:$0xff]
  %v426 = vld [vmem:[%s2 + $0x198] sm:$0xff]
  %v427 = vld [vmem:[%s2 + $0x1a0] sm:$0xff]
  %v428 = vld [vmem:[%s2 + $0x1a8] sm:$0xff]
  %v429 = vld [vmem:[%s2 + $0x1b0] sm:$0xff]
  %v430 = vld [vmem:[%s2 + $0x1b8] sm:$0xff]
  %v431 = vld [vmem:[%s2 + $0x1c0] sm:$0xff]
  %v432 = vld [vmem:[%s2 + $0x1c8] sm:$0xff]
  %v433 = vld [vmem:[%s2 + $0x1d0] sm:$0xff]
  %v434 = vld [vmem:[%s2 + $0x1d8] sm:$0xff]
  %v435 = vld [vmem:[%s2 + $0x1e0] sm:$0xff]
  %v436 = vld [vmem:[%s2 + $0x1e8] sm:$0xff]
  %v437 = vld [vmem:[%s2 + $0x1f0] sm:$0xff]
  %v438 = vld [vmem:[%s2 + $0x1f8] sm:$0xff]
  %v439 = vld [vmem:[#allocation2] sm:$0xff]
  %v440 = vld [vmem:[#allocation3] sm:$0xff]
  %v441 = vld [vmem:[#allocation4] sm:$0xff]
  %v442 = vld [vmem:[#allocation4 + $0x8] sm:$0xff]
  %v443 = vld [vmem:[#allocation4 + $0x10] sm:$0xff]
  %v444 = vld [vmem:[#allocation4 + $0x18] sm:$0xff]
  %445 = vmatprep.subr.mxu0 %v376
  %446 = vmatpush1.msra.mxu0 %v375
  %447 = vmatprep.subr.mxu0 %v380
  %448 = vmatpush1.msra.mxu0 %v379
  %449 = vmatprep.subr.mxu0 %v384
  %450 = vmatpush1.msra.mxu0 %v383
  %451 = vmatprep.subr.mxu0 %v388
  %452 = vmatpush1.msra.mxu0 %v387
  %453 = vmatprep.subr.mxu0 %v392
  %454 = vmatpush1.msra.mxu0 %v391
  %455 = vmatprep.subr.mxu0 %v396
  %456 = vmatpush1.msra.mxu0 %v395
  %457 = vmatprep.subr.mxu0 %v400
  %458 = vmatpush1.msra.mxu0 %v399
  %459 = vmatprep.subr.mxu0 %v404
  %460 = vmatpush1.msra.mxu0 %v403
  %461 = vmatprep.subr.mxu0 %v408
  %462 = vmatpush1.msra.mxu0 %v407
  %463 = vmatprep.subr.mxu0 %v412
  %464 = vmatpush1.msra.mxu0 %v411
  %465 = vmatprep.subr.mxu0 %v416
  %466 = vmatpush1.msra.mxu0 %v415
  %467 = vmatprep.subr.mxu0 %v420
  %468 = vmatpush1.msra.mxu0 %v419
  %469 = vmatprep.subr.mxu0 %v424
  %470 = vmatpush1.msra.mxu0 %v423
  %471 = vmatprep.subr.mxu0 %v428
  %472 = vmatpush1.msra.mxu0 %v427
  %473 = vmatprep.subr.mxu0 %v432
  %474 = vmatpush1.msra.mxu0 %v431
  %475 = vmatprep.subr.mxu0 %v436
  %476 = vmatpush1.msra.mxu0 %v435
  %477 = vmatprep.subr.mxu0 0.0
  %478 = vmatpush1.msra.mxu0 0.0
  %479 = vmatprep.subr.mxu0 0.0
  %480 = vmatpush1.msra.mxu0 0.0
  %481 = vmatprep.subr.mxu0 0.0
  %482 = vmatpush1.msra.mxu0 0.0
  %483 = vmatprep.subr.mxu0 0.0
  %484 = vmatpush1.msra.mxu0 0.0
  %485 = vmatprep.subr.mxu0 0.0
  %486 = vmatpush1.msra.mxu0 0.0
  %487 = vmatprep.subr.mxu0 0.0
  %488 = vmatpush1.msra.mxu0 0.0
  %489 = vmatprep.subr.mxu0 0.0
  %490 = vmatpush1.msra.mxu0 0.0
  %491 = vmatprep.subr.mxu0 0.0
  %492 = vmatpush1.msra.mxu0 0.0
  %493 = vmatprep.subr.mxu0 0.0
  %494 = vmatpush1.msra.mxu0 0.0
  %495 = vmatprep.subr.mxu0 0.0
  %496 = vmatpush1.msra.mxu0 0.0
  %497 = vmatprep.subr.mxu0 0.0
  %498 = vmatpush1.msra.mxu0 0.0
  %499 = vmatprep.subr.mxu0 0.0
  %500 = vmatpush1.msra.mxu0 0.0
  %501 = vmatprep.subr.mxu0 0.0
  %502 = vmatpush1.msra.mxu0 0.0
  %503 = vmatprep.subr.mxu0 0.0
  %504 = vmatpush1.msra.mxu0 0.0
  %505 = vmatprep.subr.mxu0 0.0
  %506 = vmatpush1.msra.mxu0 0.0
  %507 = vmatprep.subr.mxu0 0.0
  %508 = vmatpush1.msra.mxu0 0.0
  %509 = vmatprep.mubr.f32.mxu0 0.0
  %510 = vmatmul.mubr.f32.gmra.mrb[0].mxu0 %v439
  %v511 = vpop.f32.mrb[0].mxu0
  %v512 = vadd.f32 0.0, %v511
  %v513 = vpop.f32.mrb[0].mxu0
  %v514 = vadd.f32 0.0, %v513
  %515 = vdwg.mxu0
  %516 = vmatprep.subr.mxu0 %v378
  %517 = vmatpush1.msra.mxu0 %v377
  %518 = vmatprep.subr.mxu0 %v382
  %519 = vmatpush1.msra.mxu0 %v381
  %520 = vmatprep.subr.mxu0 %v386
  %521 = vmatpush1.msra.mxu0 %v385
  %522 = vmatprep.subr.mxu0 %v390
  %523 = vmatpush1.msra.mxu0 %v389
  %524 = vmatprep.subr.mxu0 %v394
  %525 = vmatpush1.msra.mxu0 %v393
  %526 = vmatprep.subr.mxu0 %v398
  %527 = vmatpush1.msra.mxu0 %v397
  %528 = vmatprep.subr.mxu0 %v402
  %529 = vmatpush1.msra.mxu0 %v401
  %530 = vmatprep.subr.mxu0 %v406
  %531 = vmatpush1.msra.mxu0 %v405
  %532 = vmatprep.subr.mxu0 %v410
  %533 = vmatpush1.msra.mxu0 %v409
  %534 = vmatprep.subr.mxu0 %v414
  %535 = vmatpush1.msra.mxu0 %v413
  %536 = vmatprep.subr.mxu0 %v418
  %537 = vmatpush1.msra.mxu0 %v417
  %538 = vmatprep.subr.mxu0 %v422
  %539 = vmatpush1.msra.mxu0 %v421
  %540 = vmatprep.subr.mxu0 %v426
  %541 = vmatpush1.msra.mxu0 %v425
  %542 = vmatprep.subr.mxu0 %v430
  %543 = vmatpush1.msra.mxu0 %v429
  %544 = vmatprep.subr.mxu0 %v434
  %545 = vmatpush1.msra.mxu0 %v433
  %546 = vmatprep.subr.mxu0 %v438
  %547 = vmatpush1.msra.mxu0 %v437
  %548 = vmatprep.subr.mxu0 0.0
  %549 = vmatpush1.msra.mxu0 0.0
  %550 = vmatprep.subr.mxu0 0.0
  %551 = vmatpush1.msra.mxu0 0.0
  %552 = vmatprep.subr.mxu0 0.0
  %553 = vmatpush1.msra.mxu0 0.0
  %554 = vmatprep.subr.mxu0 0.0
  %555 = vmatpush1.msra.mxu0 0.0
  %556 = vmatprep.subr.mxu0 0.0
  %557 = vmatpush1.msra.mxu0 0.0
  %558 = vmatprep.subr.mxu0 0.0
  %559 = vmatpush1.msra.mxu0 0.0
  %560 = vmatprep.subr.mxu0 0.0
  %561 = vmatpush1.msra.mxu0 0.0
  %562 = vmatprep.subr.mxu0 0.0
  %563 = vmatpush1.msra.mxu0 0.0
  %564 = vmatprep.subr.mxu0 0.0
  %565 = vmatpush1.msra.mxu0 0.0
  %566 = vmatprep.subr.mxu0 0.0
  %567 = vmatpush1.msra.mxu0 0.0
  %568 = vmatprep.subr.mxu0 0.0
  %569 = vmatpush1.msra.mxu0 0.0
  %570 = vmatprep.subr.mxu0 0.0
  %571 = vmatpush1.msra.mxu0 0.0
  %572 = vmatprep.subr.mxu0 0.0
  %573 = vmatpush1.msra.mxu0 0.0
  %574 = vmatprep.subr.mxu0 0.0
  %575 = vmatpush1.msra.mxu0 0.0
  %576 = vmatprep.subr.mxu0 0.0
  %577 = vmatpush1.msra.mxu0 0.0
  %578 = vmatprep.subr.mxu0 0.0
  %579 = vmatpush1.msra.mxu0 0.0
  %580 = vmatprep.mubr.f32.mxu0 0.0
  %581 = vmatmul.mubr.f32.gmra.mrb[0].mxu0 %v439
  %v582 = vpop.f32.mrb[0].mxu0
  %v583 = vadd.f32 0.0, %v582
  %v584 = vpop.f32.mrb[0].mxu0
  %v585 = vadd.f32 0.0, %v584
  %586 = vdwg.mxu0
  %v587 = vadd.f32 %v441, %v512
  %v588 = vadd.f32 %v442, %v514
  %v589 = vadd.f32 %v443, %v583
  %v590 = vadd.f32 %v444, %v585
  %v591 = vxor.u32 %v587, 2147483648
  %v592 = vxor.u32 %v588, 2147483648
  %v593 = vxor.u32 %v589, 2147483648
  %v594 = vmul.f32 %v591, 1.442695
  %v595 = vpow.pop %v594
  %v596 = vmul.f32 %v592, 1.442695
  %v597 = vpow.pop %v596
  %v598 = vmul.f32 %v593, 1.442695
  %v599 = vpow.pop %v598
  %v600 = vadd.f32 %v595, 1.0
  %v601 = vadd.f32 %v597, 1.0
  %v602 = vadd.f32 %v599, 1.0
  %v603 = vrcp.pop %v600
  %v604 = vmul.f32 1.0, %v603
  %v605 = vrcp.pop %v601
  %v606 = vmul.f32 1.0, %v605
  %v607 = vrcp.pop %v602
  %v608 = vmul.f32 1.0, %v607
  %v609 = vtanh.pop %v590
  %v610 = vmul.f32 %v606, %v440
  %v611 = vmul.f32 %v604, %v609
  %v612 = vadd.f32 %v610, %v611
  %v613 = vtanh.pop %v612
  %v614 = vmul.f32 %v608, %v613
  %615 = vst [vmem:[#allocation2] sm:$0xff] %v614
  %616 = vst [vmem:[#allocation3] sm:$0xff] %v612
  %v617 = vld [vmem:[#allocation2] sm:$0xff]
  %v618 = vld [vmem:[#allocation3] sm:$0xff]
  %s619 = scalar_lea.vmem [#allocation4], 32
  %v620 = vld [vmem:[%s619] sm:$0xff]
  %v621 = vld [vmem:[%s619 + $0x8] sm:$0xff]
  %v622 = vld [vmem:[%s619 + $0x10] sm:$0xff]
  %v623 = vld [vmem:[%s619 + $0x18] sm:$0xff]
  %624 = vmatprep.subr.mxu0 %v376
  %625 = vmatpush1.msra.mxu0 %v375
  %626 = vmatprep.subr.mxu0 %v380
  %627 = vmatpush1.msra.mxu0 %v379
  %628 = vmatprep.subr.mxu0 %v384
  %629 = vmatpush1.msra.mxu0 %v383
  %630 = vmatprep.subr.mxu0 %v388
  %631 = vmatpush1.msra.mxu0 %v387
  %632 = vmatprep.subr.mxu0 %v392
  %633 = vmatpush1.msra.mxu0 %v391
  %634 = vmatprep.subr.mxu0 %v396
  %635 = vmatpush1.msra.mxu0 %v395
  %636 = vmatprep.subr.mxu0 %v400
  %637 = vmatpush1.msra.mxu0 %v399
  %638 = vmatprep.subr.mxu0 %v404
  %639 = vmatpush1.msra.mxu0 %v403
  %640 = vmatprep.subr.mxu0 %v408
  %641 = vmatpush1.msra.mxu0 %v407
  %642 = vmatprep.subr.mxu0 %v412
  %643 = vmatpush1.msra.mxu0 %v411
  %644 = vmatprep.subr.mxu0 %v416
  %645 = vmatpush1.msra.mxu0 %v415
  %646 = vmatprep.subr.mxu0 %v420
  %647 = vmatpush1.msra.mxu0 %v419
  %648 = vmatprep.subr.mxu0 %v424
  %649 = vmatpush1.msra.mxu0 %v423
  %650 = vmatprep.subr.mxu0 %v428
  %651 = vmatpush1.msra.mxu0 %v427
  %652 = vmatprep.subr.mxu0 %v432
  %653 = vmatpush1.msra.mxu0 %v431
  %654 = vmatprep.subr.mxu0 %v436
  %655 = vmatpush1.msra.mxu0 %v435
  %656 = vmatprep.subr.mxu0 0.0
  %657 = vmatpush1.msra.mxu0 0.0
  %658 = vmatprep.subr.mxu0 0.0
  %659 = vmatpush1.msra.mxu0 0.0
  %660 = vmatprep.subr.mxu0 0.0
  %661 = vmatpush1.msra.mxu0 0.0
  %662 = vmatprep.subr.mxu0 0.0
  %663 = vmatpush1.msra.mxu0 0.0
  %664 = vmatprep.subr.mxu0 0.0
  %665 = vmatpush1.msra.mxu0 0.0
  %666 = vmatprep.subr.mxu0 0.0
  %667 = vmatpush1.msra.mxu0 0.0
  %668 = vmatprep.subr.mxu0 0.0
  %669 = vmatpush1.msra.mxu0 0.0
  %670 = vmatprep.subr.mxu0 0.0
  %671 = vmatpush1.msra.mxu0 0.0
  %672 = vmatprep.subr.mxu0 0.0
  %673 = vmatpush1.msra.mxu0 0.0
  %674 = vmatprep.subr.mxu0 0.0
  %675 = vmatpush1.msra.mxu0 0.0
  %676 = vmatprep.subr.mxu0 0.0
  %677 = vmatpush1.msra.mxu0 0.0
  %678 = vmatprep.subr.mxu0 0.0
  %679 = vmatpush1.msra.mxu0 0.0
  %680 = vmatprep.subr.mxu0 0.0
  %681 = vmatpush1.msra.mxu0 0.0
  %682 = vmatprep.subr.mxu0 0.0
  %683 = vmatpush1.msra.mxu0 0.0
  %684 = vmatprep.subr.mxu0 0.0
  %685 = vmatpush1.msra.mxu0 0.0
  %686 = vmatprep.subr.mxu0 0.0
  %687 = vmatpush1.msra.mxu0 0.0
  %688 = vmatprep.mubr.f32.mxu0 0.0
  %689 = vmatmul.mubr.f32.gmra.mrb[0].mxu0 %v617
  %v690 = vpop.f32.mrb[0].mxu0
  %v691 = vadd.f32 0.0, %v690
  %v692 = vpop.f32.mrb[0].mxu0
  %v693 = vadd.f32 0.0, %v692
  %694 = vdwg.mxu0
  %695 = vmatprep.subr.mxu0 %v378
  %696 = vmatpush1.msra.mxu0 %v377
  %697 = vmatprep.subr.mxu0 %v382
  %698 = vmatpush1.msra.mxu0 %v381
  %699 = vmatprep.subr.mxu0 %v386
  %700 = vmatpush1.msra.mxu0 %v385
  %701 = vmatprep.subr.mxu0 %v390
  %702 = vmatpush1.msra.mxu0 %v389
  %703 = vmatprep.subr.mxu0 %v394
  %704 = vmatpush1.msra.mxu0 %v393
  %705 = vmatprep.subr.mxu0 %v398
  %706 = vmatpush1.msra.mxu0 %v397
  %707 = vmatprep.subr.mxu0 %v402
  %708 = vmatpush1.msra.mxu0 %v401
  %709 = vmatprep.subr.mxu0 %v406
  %710 = vmatpush1.msra.mxu0 %v405
  %711 = vmatprep.subr.mxu0 %v410
  %712 = vmatpush1.msra.mxu0 %v409
  %713 = vmatprep.subr.mxu0 %v414
  %714 = vmatpush1.msra.mxu0 %v413
  %715 = vmatprep.subr.mxu0 %v418
  %716 = vmatpush1.msra.mxu0 %v417
  %717 = vmatprep.subr.mxu0 %v422
  %718 = vmatpush1.msra.mxu0 %v421
  %719 = vmatprep.subr.mxu0 %v426
  %720 = vmatpush1.msra.mxu0 %v425
  %721 = vmatprep.subr.mxu0 %v430
  %722 = vmatpush1.msra.mxu0 %v429
  %723 = vmatprep.subr.mxu0 %v434
  %724 = vmatpush1.msra.mxu0 %v433
  %725 = vmatprep.subr.mxu0 %v438
  %726 = vmatpush1.msra.mxu0 %v437
  %727 = vmatprep.subr.mxu0 0.0
  %728 = vmatpush1.msra.mxu0 0.0
  %729 = vmatprep.subr.mxu0 0.0
  %730 = vmatpush1.msra.mxu0 0.0
  %731 = vmatprep.subr.mxu0 0.0
  %732 = vmatpush1.msra.mxu0 0.0
  %733 = vmatprep.subr.mxu0 0.0
  %734 = vmatpush1.msra.mxu0 0.0
  %735 = vmatprep.subr.mxu0 0.0
  %736 = vmatpush1.msra.mxu0 0.0
  %737 = vmatprep.subr.mxu0 0.0
  %738 = vmatpush1.msra.mxu0 0.0
  %739 = vmatprep.subr.mxu0 0.0
  %740 = vmatpush1.msra.mxu0 0.0
  %741 = vmatprep.subr.mxu0 0.0
  %742 = vmatpush1.msra.mxu0 0.0
  %743 = vmatprep.subr.mxu0 0.0
  %744 = vmatpush1.msra.mxu0 0.0
  %745 = vmatprep.subr.mxu0 0.0
  %746 = vmatpush1.msra.mxu0 0.0
  %747 = vmatprep.subr.mxu0 0.0
  %748 = vmatpush1.msra.mxu0 0.0
  %749 = vmatprep.subr.mxu0 0.0
  %750 = vmatpush1.msra.mxu0 0.0
  %751 = vmatprep.subr.mxu0 0.0
  %752 = vmatpush1.msra.mxu0 0.0
  %753 = vmatprep.subr.mxu0 0.0
  %754 = vmatpush1.msra.mxu0 0.0
  %755 = vmatprep.subr.mxu0 0.0
  %756 = vmatpush1.msra.mxu0 0.0
  %757 = vmatprep.subr.mxu0 0.0
  %758 = vmatpush1.msra.mxu0 0.0
  %759 = vmatprep.mubr.f32.mxu0 0.0
  %760 = vmatmul.mubr.f32.gmra.mrb[0].mxu0 %v617
  %v761 = vpop.f32.mrb[0].mxu0
  %v762 = vadd.f32 0.0, %v761
  %v763 = vpop.f32.mrb[0].mxu0
  %v764 = vadd.f32 0.0, %v763
  %765 = vdwg.mxu0
  %v766 = vadd.f32 %v620, %v691
  %v767 = vadd.f32 %v621, %v693
  %v768 = vadd.f32 %v622, %v762
  %v769 = vadd.f32 %v623, %v764
  %v770 = vxor.u32 %v766, 2147483648
  %v771 = vxor.u32 %v767, 2147483648
  %v772 = vxor.u32 %v768, 2147483648
  %v773 = vmul.f32 %v770, 1.442695
  %v774 = vpow.pop %v773
  %v775 = vmul.f32 %v771, 1.442695
  %v776 = vpow.pop %v775
  %v777 = vmul.f32 %v772, 1.442695
  %v778 = vpow.pop %v777
  %v779 = vadd.f32 %v774, 1.0
  %v780 = vadd.f32 %v776, 1.0
  %v781 = vadd.f32 %v778, 1.0
  %v782 = vrcp.pop %v779
  %v783 = vmul.f32 1.0, %v782
  %v784 = vrcp.pop %v780
  %v785 = vmul.f32 1.0, %v784
  %v786 = vrcp.pop %v781
  %v787 = vmul.f32 1.0, %v786
  %v788 = vtanh.pop %v769
  %v789 = vmul.f32 %v785, %v618
  %v790 = vmul.f32 %v783, %v788
  %v791 = vadd.f32 %v789, %v790
  %v792 = vtanh.pop %v791
  %v793 = vmul.f32 %v787, %v792
  %794 = vst [vmem:[#allocation2] sm:$0xff] %v793
  %795 = vst [vmem:[#allocation3] sm:$0xff] %v791
  %v796 = vld [vmem:[#allocation2] sm:$0xff]
  %v797 = vld [vmem:[#allocation3] sm:$0xff]
  %s798 = scalar_lea.vmem [#allocation4], 64
  %v799 = vld [vmem:[%s798] sm:$0xff]
  %v800 = vld [vmem:[%s798 + $0x8] sm:$0xff]
  %v801 = vld [vmem:[%s798 + $0x10] sm:$0xff]
  %v802 = vld [vmem:[%s798 + $0x18] sm:$0xff]
  %803 = vmatprep.subr.mxu0 %v376
  %804 = vmatpush1.msra.mxu0 %v375
  %805 = vmatprep.subr.mxu0 %v380
  %806 = vmatpush1.msra.mxu0 %v379
  %807 = vmatprep.subr.mxu0 %v384
  %808 = vmatpush1.msra.mxu0 %v383
  %809 = vmatprep.subr.mxu0 %v388
  %810 = vmatpush1.msra.mxu0 %v387
  %811 = vmatprep.subr.mxu0 %v392
  %812 = vmatpush1.msra.mxu0 %v391
  %813 = vmatprep.subr.mxu0 %v396
  %814 = vmatpush1.msra.mxu0 %v395
  %815 = vmatprep.subr.mxu0 %v400
  %816 = vmatpush1.msra.mxu0 %v399
  %817 = vmatprep.subr.mxu0 %v404
  %818 = vmatpush1.msra.mxu0 %v403
  %819 = vmatprep.subr.mxu0 %v408
  %820 = vmatpush1.msra.mxu0 %v407
  %821 = vmatprep.subr.mxu0 %v412
  %822 = vmatpush1.msra.mxu0 %v411
  %823 = vmatprep.subr.mxu0 %v416
  %824 = vmatpush1.msra.mxu0 %v415
  %825 = vmatprep.subr.mxu0 %v420
  %826 = vmatpush1.msra.mxu0 %v419
  %827 = vmatprep.subr.mxu0 %v424
  %828 = vmatpush1.msra.mxu0 %v423
  %829 = vmatprep.subr.mxu0 %v428
  %830 = vmatpush1.msra.mxu0 %v427
  %831 = vmatprep.subr.mxu0 %v432
  %832 = vmatpush1.msra.mxu0 %v431
  %833 = vmatprep.subr.mxu0 %v436
  %834 = vmatpush1.msra.mxu0 %v435
  %835 = vmatprep.subr.mxu0 0.0
  %836 = vmatpush1.msra.mxu0 0.0
  %837 = vmatprep.subr.mxu0 0.0
  %838 = vmatpush1.msra.mxu0 0.0
  %839 = vmatprep.subr.mxu0 0.0
  %840 = vmatpush1.msra.mxu0 0.0
  %841 = vmatprep.subr.mxu0 0.0
  %842 = vmatpush1.msra.mxu0 0.0
  %843 = vmatprep.subr.mxu0 0.0
  %844 = vmatpush1.msra.mxu0 0.0
  %845 = vmatprep.subr.mxu0 0.0
  %846 = vmatpush1.msra.mxu0 0.0
  %847 = vmatprep.subr.mxu0 0.0
  %848 = vmatpush1.msra.mxu0 0.0
  %849 = vmatprep.subr.mxu0 0.0
  %850 = vmatpush1.msra.mxu0 0.0
  %851 = vmatprep.subr.mxu0 0.0
  %852 = vmatpush1.msra.mxu0 0.0
  %853 = vmatprep.subr.mxu0 0.0
  %854 = vmatpush1.msra.mxu0 0.0
  %855 = vmatprep.subr.mxu0 0.0
  %856 = vmatpush1.msra.mxu0 0.0
  %857 = vmatprep.subr.mxu0 0.0
  %858 = vmatpush1.msra.mxu0 0.0
  %859 = vmatprep.subr.mxu0 0.0
  %860 = vmatpush1.msra.mxu0 0.0
  %861 = vmatprep.subr.mxu0 0.0
  %862 = vmatpush1.msra.mxu0 0.0
  %863 = vmatprep.subr.mxu0 0.0
  %864 = vmatpush1.msra.mxu0 0.0
  %865 = vmatprep.subr.mxu0 0.0
  %866 = vmatpush1.msra.mxu0 0.0
  %867 = vmatprep.mubr.f32.mxu0 0.0
  %868 = vmatmul.mubr.f32.gmra.mrb[0].mxu0 %v796
  %v869 = vpop.f32.mrb[0].mxu0
  %v870 = vadd.f32 0.0, %v869
  %v871 = vpop.f32.mrb[0].mxu0
  %v872 = vadd.f32 0.0, %v871
  %873 = vdwg.mxu0
  %874 = vmatprep.subr.mxu0 %v378
  %875 = vmatpush1.msra.mxu0 %v377
  %876 = vmatprep.subr.mxu0 %v382
  %877 = vmatpush1.msra.mxu0 %v381
  %878 = vmatprep.subr.mxu0 %v386
  %879 = vmatpush1.msra.mxu0 %v385
  %880 = vmatprep.subr.mxu0 %v390
  %881 = vmatpush1.msra.mxu0 %v389
  %882 = vmatprep.subr.mxu0 %v394
  %883 = vmatpush1.msra.mxu0 %v393
  %884 = vmatprep.subr.mxu0 %v398
  %885 = vmatpush1.msra.mxu0 %v397
  %886 = vmatprep.subr.mxu0 %v402
  %887 = vmatpush1.msra.mxu0 %v401
  %888 = vmatprep.subr.mxu0 %v406
  %889 = vmatpush1.msra.mxu0 %v405
  %890 = vmatprep.subr.mxu0 %v410
  %891 = vmatpush1.msra.mxu0 %v409
  %892 = vmatprep.subr.mxu0 %v414
  %893 = vmatpush1.msra.mxu0 %v413
  %894 = vmatprep.subr.mxu0 %v418
  %895 = vmatpush1.msra.mxu0 %v417
  %896 = vmatprep.subr.mxu0 %v422
  %897 = vmatpush1.msra.mxu0 %v421
  %898 = vmatprep.subr.mxu0 %v426
  %899 = vmatpush1.msra.mxu0 %v425
  %900 = vmatprep.subr.mxu0 %v430
  %901 = vmatpush1.msra.mxu0 %v429
  %902 = vmatprep.subr.mxu0 %v434
  %903 = vmatpush1.msra.mxu0 %v433
  %904 = vmatprep.subr.mxu0 %v438
  %905 = vmatpush1.msra.mxu0 %v437
  %906 = vmatprep.subr.mxu0 0.0
  %907 = vmatpush1.msra.mxu0 0.0
  %908 = vmatprep.subr.mxu0 0.0
  %909 = vmatpush1.msra.mxu0 0.0
  %910 = vmatprep.subr.mxu0 0.0
  %911 = vmatpush1.msra.mxu0 0.0
  %912 = vmatprep.subr.mxu0 0.0
  %913 = vmatpush1.msra.mxu0 0.0
  %914 = vmatprep.subr.mxu0 0.0
  %915 = vmatpush1.msra.mxu0 0.0
  %916 = vmatprep.subr.mxu0 0.0
  %917 = vmatpush1.msra.mxu0 0.0
  %918 = vmatprep.subr.mxu0 0.0
  %919 = vmatpush1.msra.mxu0 0.0
  %920 = vmatprep.subr.mxu0 0.0
  %921 = vmatpush1.msra.mxu0 0.0
  %922 = vmatprep.subr.mxu0 0.0
  %923 = vmatpush1.msra.mxu0 0.0
  %924 = vmatprep.subr.mxu0 0.0
  %925 = vmatpush1.msra.mxu0 0.0
  %926 = vmatprep.subr.mxu0 0.0
  %927 = vmatpush1.msra.mxu0 0.0
  %928 = vmatprep.subr.mxu0 0.0
  %929 = vmatpush1.msra.mxu0 0.0
  %930 = vmatprep.subr.mxu0 0.0
  %931 = vmatpush1.msra.mxu0 0.0
  %932 = vmatprep.subr.mxu0 0.0
  %933 = vmatpush1.msra.mxu0 0.0
  %934 = vmatprep.subr.mxu0 0.0
  %935 = vmatpush1.msra.mxu0 0.0
  %936 = vmatprep.subr.mxu0 0.0
  %937 = vmatpush1.msra.mxu0 0.0
  %938 = vmatprep.mubr.f32.mxu0 0.0
  %939 = vmatmul.mubr.f32.gmra.mrb[0].mxu0 %v796
  %v940 = vpop.f32.mrb[0].mxu0
  %v941 = vadd.f32 0.0, %v940
  %v942 = vpop.f32.mrb[0].mxu0
  %v943 = vadd.f32 0.0, %v942
  %944 = vdwg.mxu0
  %v945 = vadd.f32 %v799, %v870
  %v946 = vadd.f32 %v800, %v872
  %v947 = vadd.f32 %v801, %v941
  %v948 = vadd.f32 %v802, %v943
  %v949 = vxor.u32 %v945, 2147483648
  %v950 = vxor.u32 %v946, 2147483648
  %v951 = vxor.u32 %v947, 2147483648
  %v952 = vmul.f32 %v949, 1.442695
  %v953 = vpow.pop %v952
  %v954 = vmul.f32 %v950, 1.442695
  %v955 = vpow.pop %v954
  %v956 = vmul.f32 %v951, 1.442695
  %v957 = vpow.pop %v956
  %v958 = vadd.f32 %v953, 1.0
  %v959 = vadd.f32 %v955, 1.0
  %v960 = vadd.f32 %v957, 1.0
  %v961 = vrcp.pop %v958
  %v962 = vmul.f32 1.0, %v961
  %v963 = vrcp.pop %v959
  %v964 = vmul.f32 1.0, %v963
  %v965 = vrcp.pop %v960
  %v966 = vmul.f32 1.0, %v965
  %v967 = vtanh.pop %v948
  %v968 = vmul.f32 %v964, %v797
  %v969 = vmul.f32 %v962, %v967
  %v970 = vadd.f32 %v968, %v969
  %v971 = vtanh.pop %v970
  %v972 = vmul.f32 %v966, %v971
  %973 = vst [vmem:[#allocation2] sm:$0xff] %v972
  %974 = vst [vmem:[#allocation3] sm:$0xff] %v970
  %v975 = vld [vmem:[#allocation2] sm:$0xff]
  %v976 = vld [vmem:[#allocation3] sm:$0xff]
  %s977 = scalar_lea.vmem [#allocation4], 96
  %v978 = vld [vmem:[%s977] sm:$0xff]
  %v979 = vld [vmem:[%s977 + $0x8] sm:$0xff]
  %v980 = vld [vmem:[%s977 + $0x10] sm:$0xff]
  %v981 = vld [vmem:[%s977 + $0x18] sm:$0xff]
  %982 = vmatprep.subr.mxu0 %v376
  %983 = vmatpush1.msra.mxu0 %v375
  %984 = vmatprep.subr.mxu0 %v380
  %985 = vmatpush1.msra.mxu0 %v379
  %986 = vmatprep.subr.mxu0 %v384
  %987 = vmatpush1.msra.mxu0 %v383
  %988 = vmatprep.subr.mxu0 %v388
  %989 = vmatpush1.msra.mxu0 %v387
  %990 = vmatprep.subr.mxu0 %v392
  %991 = vmatpush1.msra.mxu0 %v391
  %992 = vmatprep.subr.mxu0 %v396
  %993 = vmatpush1.msra.mxu0 %v395
  %994 = vmatprep.subr.mxu0 %v400
  %995 = vmatpush1.msra.mxu0 %v399
  %996 = vmatprep.subr.mxu0 %v404
  %997 = vmatpush1.msra.mxu0 %v403
  %998 = vmatprep.subr.mxu0 %v408
  %999 = vmatpush1.msra.mxu0 %v407
  %1000 = vmatprep.subr.mxu0 %v412
  %1001 = vmatpush1.msra.mxu0 %v411
  %1002 = vmatprep.subr.mxu0 %v416
  %1003 = vmatpush1.msra.mxu0 %v415
  %1004 = vmatprep.subr.mxu0 %v420
  %1005 = vmatpush1.msra.mxu0 %v419
  %1006 = vmatprep.subr.mxu0 %v424
  %1007 = vmatpush1.msra.mxu0 %v423
  %1008 = vmatprep.subr.mxu0 %v428
  %1009 = vmatpush1.msra.mxu0 %v427
  %1010 = vmatprep.subr.mxu0 %v432
  %1011 = vmatpush1.msra.mxu0 %v431
  %1012 = vmatprep.subr.mxu0 %v436
  %1013 = vmatpush1.msra.mxu0 %v435
  %1014 = vmatprep.subr.mxu0 0.0
  %1015 = vmatpush1.msra.mxu0 0.0
  %1016 = vmatprep.subr.mxu0 0.0
  %1017 = vmatpush1.msra.mxu0 0.0
  %1018 = vmatprep.subr.mxu0 0.0
  %1019 = vmatpush1.msra.mxu0 0.0
  %1020 = vmatprep.subr.mxu0 0.0
  %1021 = vmatpush1.msra.mxu0 0.0
  %1022 = vmatprep.subr.mxu0 0.0
  %1023 = vmatpush1.msra.mxu0 0.0
  %1024 = vmatprep.subr.mxu0 0.0
  %1025 = vmatpush1.msra.mxu0 0.0
  %1026 = vmatprep.subr.mxu0 0.0
  %1027 = vmatpush1.msra.mxu0 0.0
  %1028 = vmatprep.subr.mxu0 0.0
  %1029 = vmatpush1.msra.mxu0 0.0
  %1030 = vmatprep.subr.mxu0 0.0
  %1031 = vmatpush1.msra.mxu0 0.0
  %1032 = vmatprep.subr.mxu0 0.0
  %1033 = vmatpush1.msra.mxu0 0.0
  %1034 = vmatprep.subr.mxu0 0.0
  %1035 = vmatpush1.msra.mxu0 0.0
  %1036 = vmatprep.subr.mxu0 0.0
  %1037 = vmatpush1.msra.mxu0 0.0
  %1038 = vmatprep.subr.mxu0 0.0
  %1039 = vmatpush1.msra.mxu0 0.0
  %1040 = vmatprep.subr.mxu0 0.0
  %1041 = vmatpush1.msra.mxu0 0.0
  %1042 = vmatprep.subr.mxu0 0.0
  %1043 = vmatpush1.msra.mxu0 0.0
  %1044 = vmatprep.subr.mxu0 0.0
  %1045 = vmatpush1.msra.mxu0 0.0
  %1046 = vmatprep.mubr.f32.mxu0 0.0
  %1047 = vmatmul.mubr.f32.gmra.mrb[0].mxu0 %v975
  %v1048 = vpop.f32.mrb[0].mxu0
  %v1049 = vadd.f32 0.0, %v1048
  %v1050 = vpop.f32.mrb[0].mxu0
  %v1051 = vadd.f32 0.0, %v1050
  %1052 = vdwg.mxu0
  %1053 = vmatprep.subr.mxu0 %v378
  %1054 = vmatpush1.msra.mxu0 %v377
  %1055 = vmatprep.subr.mxu0 %v382
  %1056 = vmatpush1.msra.mxu0 %v381
  %1057 = vmatprep.subr.mxu0 %v386
  %1058 = vmatpush1.msra.mxu0 %v385
  %1059 = vmatprep.subr.mxu0 %v390
  %1060 = vmatpush1.msra.mxu0 %v389
  %1061 = vmatprep.subr.mxu0 %v394
  %1062 = vmatpush1.msra.mxu0 %v393
  %1063 = vmatprep.subr.mxu0 %v398
  %1064 = vmatpush1.msra.mxu0 %v397
  %1065 = vmatprep.subr.mxu0 %v402
  %1066 = vmatpush1.msra.mxu0 %v401
  %1067 = vmatprep.subr.mxu0 %v406
  %1068 = vmatpush1.msra.mxu0 %v405
  %1069 = vmatprep.subr.mxu0 %v410
  %1070 = vmatpush1.msra.mxu0 %v409
  %1071 = vmatprep.subr.mxu0 %v414
  %1072 = vmatpush1.msra.mxu0 %v413
  %1073 = vmatprep.subr.mxu0 %v418
  %1074 = vmatpush1.msra.mxu0 %v417
  %1075 = vmatprep.subr.mxu0 %v422
  %1076 = vmatpush1.msra.mxu0 %v421
  %1077 = vmatprep.subr.mxu0 %v426
  %1078 = vmatpush1.msra.mxu0 %v425
  %1079 = vmatprep.subr.mxu0 %v430
  %1080 = vmatpush1.msra.mxu0 %v429
  %1081 = vmatprep.subr.mxu0 %v434
  %1082 = vmatpush1.msra.mxu0 %v433
  %1083 = vmatprep.subr.mxu0 %v438
  %1084 = vmatpush1.msra.mxu0 %v437
  %1085 = vmatprep.subr.mxu0 0.0
  %1086 = vmatpush1.msra.mxu0 0.0
  %1087 = vmatprep.subr.mxu0 0.0
  %1088 = vmatpush1.msra.mxu0 0.0
  %1089 = vmatprep.subr.mxu0 0.0
  %1090 = vmatpush1.msra.mxu0 0.0
  %1091 = vmatprep.subr.mxu0 0.0
  %1092 = vmatpush1.msra.mxu0 0.0
  %1093 = vmatprep.subr.mxu0 0.0
  %1094 = vmatpush1.msra.mxu0 0.0
  %1095 = vmatprep.subr.mxu0 0.0
  %1096 = vmatpush1.msra.mxu0 0.0
  %1097 = vmatprep.subr.mxu0 0.0
  %1098 = vmatpush1.msra.mxu0 0.0
  %1099 = vmatprep.subr.mxu0 0.0
  %1100 = vmatpush1.msra.mxu0 0.0
  %1101 = vmatprep.subr.mxu0 0.0
  %1102 = vmatpush1.msra.mxu0 0.0
  %1103 = vmatprep.subr.mxu0 0.0
  %1104 = vmatpush1.msra.mxu0 0.0
  %1105 = vmatprep.subr.mxu0 0.0
  %1106 = vmatpush1.msra.mxu0 0.0
  %1107 = vmatprep.subr.mxu0 0.0
  %1108 = vmatpush1.msra.mxu0 0.0
  %1109 = vmatprep.subr.mxu0 0.0
  %1110 = vmatpush1.msra.mxu0 0.0
  %1111 = vmatprep.subr.mxu0 0.0
  %1112 = vmatpush1.msra.mxu0 0.0
  %1113 = vmatprep.subr.mxu0 0.0
  %1114 = vmatpush1.msra.mxu0 0.0
  %1115 = vmatprep.subr.mxu0 0.0
  %1116 = vmatpush1.msra.mxu0 0.0
  %1117 = vmatprep.mubr.f32.mxu0 0.0
  %1118 = vmatmul.mubr.f32.gmra.mrb[0].mxu0 %v975
  %v1119 = vpop.f32.mrb[0].mxu0
  %v1120 = vadd.f32 0.0, %v1119
  %v1121 = vpop.f32.mrb[0].mxu0
  %v1122 = vadd.f32 0.0, %v1121
  %1123 = vdwg.mxu0
  %v1124 = vadd.f32 %v978, %v1049
  %v1125 = vadd.f32 %v979, %v1051
  %v1126 = vadd.f32 %v980, %v1120
  %v1127 = vadd.f32 %v981, %v1122
  %v1128 = vxor.u32 %v1124, 2147483648
  %v1129 = vxor.u32 %v1125, 2147483648
  %v1130 = vxor.u32 %v1126, 2147483648
  %v1131 = vmul.f32 %v1128, 1.442695
  %v1132 = vpow.pop %v1131
  %v1133 = vmul.f32 %v1129, 1.442695
  %v1134 = vpow.pop %v1133
  %v1135 = vmul.f32 %v1130, 1.442695
  %v1136 = vpow.pop %v1135
  %v1137 = vadd.f32 %v1132, 1.0
  %v1138 = vadd.f32 %v1134, 1.0
  %v1139 = vadd.f32 %v1136, 1.0
  %v1140 = vrcp.pop %v1137
  %v1141 = vmul.f32 1.0, %v1140
  %v1142 = vrcp.pop %v1138
  %v1143 = vmul.f32 1.0, %v1142
  %v1144 = vrcp.pop %v1139
  %v1145 = vmul.f32 1.0, %v1144
  %v1146 = vtanh.pop %v1127
  %v1147 = vmul.f32 %v1143, %v976
  %v1148 = vmul.f32 %v1141, %v1146
  %v1149 = vadd.f32 %v1147, %v1148
  %v1150 = vtanh.pop %v1149
  %v1151 = vmul.f32 %v1145, %v1150
  %1152 = vst [vmem:[#allocation2] sm:$0xff] %v1151
  %1153 = vst [vmem:[#allocation3] sm:$0xff] %v1149
  %v1154 = vld [vmem:[#allocation2] sm:$0xff]
  %v1155 = vld [vmem:[#allocation3] sm:$0xff]
  %s1156 = scalar_lea.vmem [#allocation4], 128
  %v1157 = vld [vmem:[%s1156] sm:$0xff]
  %v1158 = vld [vmem:[%s1156 + $0x8] sm:$0xff]
  %v1159 = vld [vmem:[%s1156 + $0x10] sm:$0xff]
  %v1160 = vld [vmem:[%s1156 + $0x18] sm:$0xff]
  %1161 = vmatprep.subr.mxu0 %v376
  %1162 = vmatpush1.msra.mxu0 %v375
  %1163 = vmatprep.subr.mxu0 %v380
  %1164 = vmatpush1.msra.mxu0 %v379
  %1165 = vmatprep.subr.mxu0 %v384
  %1166 = vmatpush1.msra.mxu0 %v383
  %1167 = vmatprep.subr.mxu0 %v388
  %1168 = vmatpush1.msra.mxu0 %v387
  %1169 = vmatprep.subr.mxu0 %v392
  %1170 = vmatpush1.msra.mxu0 %v391
  %1171 = vmatprep.subr.mxu0 %v396
  %1172 = vmatpush1.msra.mxu0 %v395
  %1173 = vmatprep.subr.mxu0 %v400
  %1174 = vmatpush1.msra.mxu0 %v399
  %1175 = vmatprep.subr.mxu0 %v404
  %1176 = vmatpush1.msra.mxu0 %v403
  %1177 = vmatprep.subr.mxu0 %v408
  %1178 = vmatpush1.msra.mxu0 %v407
  %1179 = vmatprep.subr.mxu0 %v412
  %1180 = vmatpush1.msra.mxu0 %v411
  %1181 = vmatprep.subr.mxu0 %v416
  %1182 = vmatpush1.msra.mxu0 %v415
  %1183 = vmatprep.subr.mxu0 %v420
  %1184 = vmatpush1.msra.mxu0 %v419
  %1185 = vmatprep.subr.mxu0 %v424
  %1186 = vmatpush1.msra.mxu0 %v423
  %1187 = vmatprep.subr.mxu0 %v428
  %1188 = vmatpush1.msra.mxu0 %v427
  %1189 = vmatprep.subr.mxu0 %v432
  %1190 = vmatpush1.msra.mxu0 %v431
  %1191 = vmatprep.subr.mxu0 %v436
  %1192 = vmatpush1.msra.mxu0 %v435
  %1193 = vmatprep.subr.mxu0 0.0
  %1194 = vmatpush1.msra.mxu0 0.0
  %1195 = vmatprep.subr.mxu0 0.0
  %1196 = vmatpush1.msra.mxu0 0.0
  %1197 = vmatprep.subr.mxu0 0.0
  %1198 = vmatpush1.msra.mxu0 0.0
  %1199 = vmatprep.subr.mxu0 0.0
  %1200 = vmatpush1.msra.mxu0 0.0
  %1201 = vmatprep.subr.mxu0 0.0
  %1202 = vmatpush1.msra.mxu0 0.0
  %1203 = vmatprep.subr.mxu0 0.0
  %1204 = vmatpush1.msra.mxu0 0.0
  %1205 = vmatprep.subr.mxu0 0.0
  %1206 = vmatpush1.msra.mxu0 0.0
  %1207 = vmatprep.subr.mxu0 0.0
  %1208 = vmatpush1.msra.mxu0 0.0
  %1209 = vmatprep.subr.mxu0 0.0
  %1210 = vmatpush1.msra.mxu0 0.0
  %1211 = vmatprep.subr.mxu0 0.0
  %1212 = vmatpush1.msra.mxu0 0.0
  %1213 = vmatprep.subr.mxu0 0.0
  %1214 = vmatpush1.msra.mxu0 0.0
  %1215 = vmatprep.subr.mxu0 0.0
  %1216 = vmatpush1.msra.mxu0 0.0
  %1217 = vmatprep.subr.mxu0 0.0
  %1218 = vmatpush1.msra.mxu0 0.0
  %1219 = vmatprep.subr.mxu0 0.0
  %1220 = vmatpush1.msra.mxu0 0.0
  %1221 = vmatprep.subr.mxu0 0.0
  %1222 = vmatpush1.msra.mxu0 0.0
  %1223 = vmatprep.subr.mxu0 0.0
  %1224 = vmatpush1.msra.mxu0 0.0
  %1225 = vmatprep.mubr.f32.mxu0 0.0
  %1226 = vmatmul.mubr.f32.gmra.mrb[0].mxu0 %v1154
  %v1227 = vpop.f32.mrb[0].mxu0
  %v1228 = vadd.f32 0.0, %v1227
  %v1229 = vpop.f32.mrb[0].mxu0
  %v1230 = vadd.f32 0.0, %v1229
  %1231 = vdwg.mxu0
  %1232 = vmatprep.subr.mxu0 %v378
  %1233 = vmatpush1.msra.mxu0 %v377
  %1234 = vmatprep.subr.mxu0 %v382
  %1235 = vmatpush1.msra.mxu0 %v381
  %1236 = vmatprep.subr.mxu0 %v386
  %1237 = vmatpush1.msra.mxu0 %v385
  %1238 = vmatprep.subr.mxu0 %v390
  %1239 = vmatpush1.msra.mxu0 %v389
  %1240 = vmatprep.subr.mxu0 %v394
  %1241 = vmatpush1.msra.mxu0 %v393
  %1242 = vmatprep.subr.mxu0 %v398
  %1243 = vmatpush1.msra.mxu0 %v397
  %1244 = vmatprep.subr.mxu0 %v402
  %1245 = vmatpush1.msra.mxu0 %v401
  %1246 = vmatprep.subr.mxu0 %v406
  %1247 = vmatpush1.msra.mxu0 %v405
  %1248 = vmatprep.subr.mxu0 %v410
  %1249 = vmatpush1.msra.mxu0 %v409
  %1250 = vmatprep.subr.mxu0 %v414
  %1251 = vmatpush1.msra.mxu0 %v413
  %1252 = vmatprep.subr.mxu0 %v418
  %1253 = vmatpush1.msra.mxu0 %v417
  %1254 = vmatprep.subr.mxu0 %v422
  %1255 = vmatpush1.msra.mxu0 %v421
  %1256 = vmatprep.subr.mxu0 %v426
  %1257 = vmatpush1.msra.mxu0 %v425
  %1258 = vmatprep.subr.mxu0 %v430
  %1259 = vmatpush1.msra.mxu0 %v429
  %1260 = vmatprep.subr.mxu0 %v434
  %1261 = vmatpush1.msra.mxu0 %v433
  %1262 = vmatprep.subr.mxu0 %v438
  %1263 = vmatpush1.msra.mxu0 %v437
  %1264 = vmatprep.subr.mxu0 0.0
  %1265 = vmatpush1.msra.mxu0 0.0
  %1266 = vmatprep.subr.mxu0 0.0
  %1267 = vmatpush1.msra.mxu0 0.0
  %1268 = vmatprep.subr.mxu0 0.0
  %1269 = vmatpush1.msra.mxu0 0.0
  %1270 = vmatprep.subr.mxu0 0.0
  %1271 = vmatpush1.msra.mxu0 0.0
  %1272 = vmatprep.subr.mxu0 0.0
  %1273 = vmatpush1.msra.mxu0 0.0
  %1274 = vmatprep.subr.mxu0 0.0
  %1275 = vmatpush1.msra.mxu0 0.0
  %1276 = vmatprep.subr.mxu0 0.0
  %1277 = vmatpush1.msra.mxu0 0.0
  %1278 = vmatprep.subr.mxu0 0.0
  %1279 = vmatpush1.msra.mxu0 0.0
  %1280 = vmatprep.subr.mxu0 0.0
  %1281 = vmatpush1.msra.mxu0 0.0
  %1282 = vmatprep.subr.mxu0 0.0
  %1283 = vmatpush1.msra.mxu0 0.0
  %1284 = vmatprep.subr.mxu0 0.0
  %1285 = vmatpush1.msra.mxu0 0.0
  %1286 = vmatprep.subr.mxu0 0.0
  %1287 = vmatpush1.msra.mxu0 0.0
  %1288 = vmatprep.subr.mxu0 0.0
  %1289 = vmatpush1.msra.mxu0 0.0
  %1290 = vmatprep.subr.mxu0 0.0
  %1291 = vmatpush1.msra.mxu0 0.0
  %1292 = vmatprep.subr.mxu0 0.0
  %1293 = vmatpush1.msra.mxu0 0.0
  %1294 = vmatprep.subr.mxu0 0.0
  %1295 = vmatpush1.msra.mxu0 0.0
  %1296 = vmatprep.mubr.f32.mxu0 0.0
  %1297 = vmatmul.mubr.f32.gmra.mrb[0].mxu0 %v1154
  %v1298 = vpop.f32.mrb[0].mxu0
  %v1299 = vadd.f32 0.0, %v1298
  %v1300 = vpop.f32.mrb[0].mxu0
  %v1301 = vadd.f32 0.0, %v1300
  %1302 = vdwg.mxu0
  %v1303 = vadd.f32 %v1157, %v1228
  %v1304 = vadd.f32 %v1158, %v1230
  %v1305 = vadd.f32 %v1159, %v1299
  %v1306 = vadd.f32 %v1160, %v1301
  %v1307 = vxor.u32 %v1303, 2147483648
  %v1308 = vxor.u32 %v1304, 2147483648
  %v1309 = vxor.u32 %v1305, 2147483648
  %v1310 = vmul.f32 %v1307, 1.442695
  %v1311 = vpow.pop %v1310
  %v1312 = vmul.f32 %v1308, 1.442695
  %v1313 = vpow.pop %v1312
  %v1314 = vmul.f32 %v1309, 1.442695
  %v1315 = vpow.pop %v1314
  %v1316 = vadd.f32 %v1311, 1.0
  %v1317 = vadd.f32 %v1313, 1.0
  %v1318 = vadd.f32 %v1315, 1.0
  %v1319 = vrcp.pop %v1316
  %v1320 = vmul.f32 1.0, %v1319
  %v1321 = vrcp.pop %v1317
  %v1322 = vmul.f32 1.0, %v1321
  %v1323 = vrcp.pop %v1318
  %v1324 = vmul.f32 1.0, %v1323
  %v1325 = vtanh.pop %v1306
  %v1326 = vmul.f32 %v1322, %v1155
  %v1327 = vmul.f32 %v1320, %v1325
  %v1328 = vadd.f32 %v1326, %v1327
  %v1329 = vtanh.pop %v1328
  %v1330 = vmul.f32 %v1324, %v1329
  %1331 = vst [vmem:[#allocation2] sm:$0xff] %v1330
  %1332 = vst [vmem:[#allocation3] sm:$0xff] %v1328
  %v1333 = vld [vmem:[#allocation2] sm:$0xff]
  %v1334 = vld [vmem:[#allocation3] sm:$0xff]
  %s1335 = scalar_lea.vmem [#allocation4], 160
  %v1336 = vld [vmem:[%s1335] sm:$0xff]
  %v1337 = vld [vmem:[%s1335 + $0x8] sm:$0xff]
  %v1338 = vld [vmem:[%s1335 + $0x10] sm:$0xff]
  %v1339 = vld [vmem:[%s1335 + $0x18] sm:$0xff]
  %1340 = vmatprep.subr.mxu0 %v376
  %1341 = vmatpush1.msra.mxu0 %v375
  %1342 = vmatprep.subr.mxu0 %v380
  %1343 = vmatpush1.msra.mxu0 %v379
  %1344 = vmatprep.subr.mxu0 %v384
  %1345 = vmatpush1.msra.mxu0 %v383
  %1346 = vmatprep.subr.mxu0 %v388
  %1347 = vmatpush1.msra.mxu0 %v387
  %1348 = vmatprep.subr.mxu0 %v392
  %1349 = vmatpush1.msra.mxu0 %v391
  %1350 = vmatprep.subr.mxu0 %v396
  %1351 = vmatpush1.msra.mxu0 %v395
  %1352 = vmatprep.subr.mxu0 %v400
  %1353 = vmatpush1.msra.mxu0 %v399
  %1354 = vmatprep.subr.mxu0 %v404
  %1355 = vmatpush1.msra.mxu0 %v403
  %1356 = vmatprep.subr.mxu0 %v408
  %1357 = vmatpush1.msra.mxu0 %v407
  %1358 = vmatprep.subr.mxu0 %v412
  %1359 = vmatpush1.msra.mxu0 %v411
  %1360 = vmatprep.subr.mxu0 %v416
  %1361 = vmatpush1.msra.mxu0 %v415
  %1362 = vmatprep.subr.mxu0 %v420
  %1363 = vmatpush1.msra.mxu0 %v419
  %1364 = vmatprep.subr.mxu0 %v424
  %1365 = vmatpush1.msra.mxu0 %v423
  %1366 = vmatprep.subr.mxu0 %v428
  %1367 = vmatpush1.msra.mxu0 %v427
  %1368 = vmatprep.subr.mxu0 %v432
  %1369 = vmatpush1.msra.mxu0 %v431
  %1370 = vmatprep.subr.mxu0 %v436
  %1371 = vmatpush1.msra.mxu0 %v435
  %1372 = vmatprep.subr.mxu0 0.0
  %1373 = vmatpush1.msra.mxu0 0.0
  %1374 = vmatprep.subr.mxu0 0.0
  %1375 = vmatpush1.msra.mxu0 0.0
  %1376 = vmatprep.subr.mxu0 0.0
  %1377 = vmatpush1.msra.mxu0 0.0
  %1378 = vmatprep.subr.mxu0 0.0
  %1379 = vmatpush1.msra.mxu0 0.0
  %1380 = vmatprep.subr.mxu0 0.0
  %1381 = vmatpush1.msra.mxu0 0.0
  %1382 = vmatprep.subr.mxu0 0.0
  %1383 = vmatpush1.msra.mxu0 0.0
  %1384 = vmatprep.subr.mxu0 0.0
  %1385 = vmatpush1.msra.mxu0 0.0
  %1386 = vmatprep.subr.mxu0 0.0
  %1387 = vmatpush1.msra.mxu0 0.0
  %1388 = vmatprep.subr.mxu0 0.0
  %1389 = vmatpush1.msra.mxu0 0.0
  %1390 = vmatprep.subr.mxu0 0.0
  %1391 = vmatpush1.msra.mxu0 0.0
  %1392 = vmatprep.subr.mxu0 0.0
  %1393 = vmatpush1.msra.mxu0 0.0
  %1394 = vmatprep.subr.mxu0 0.0
  %1395 = vmatpush1.msra.mxu0 0.0
  %1396 = vmatprep.subr.mxu0 0.0
  %1397 = vmatpush1.msra.mxu0 0.0
  %1398 = vmatprep.subr.mxu0 0.0
  %1399 = vmatpush1.msra.mxu0 0.0
  %1400 = vmatprep.subr.mxu0 0.0
  %1401 = vmatpush1.msra.mxu0 0.0
  %1402 = vmatprep.subr.mxu0 0.0
  %1403 = vmatpush1.msra.mxu0 0.0
  %1404 = vmatprep.mubr.f32.mxu0 0.0
  %1405 = vmatmul.mubr.f32.gmra.mrb[0].mxu0 %v1333
  %v1406 = vpop.f32.mrb[0].mxu0
  %v1407 = vadd.f32 0.0, %v1406
  %v1408 = vpop.f32.mrb[0].mxu0
  %v1409 = vadd.f32 0.0, %v1408
  %1410 = vdwg.mxu0
  %1411 = vmatprep.subr.mxu0 %v378
  %1412 = vmatpush1.msra.mxu0 %v377
  %1413 = vmatprep.subr.mxu0 %v382
  %1414 = vmatpush1.msra.mxu0 %v381
  %1415 = vmatprep.subr.mxu0 %v386
  %1416 = vmatpush1.msra.mxu0 %v385
  %1417 = vmatprep.subr.mxu0 %v390
  %1418 = vmatpush1.msra.mxu0 %v389
  %1419 = vmatprep.subr.mxu0 %v394
  %1420 = vmatpush1.msra.mxu0 %v393
  %1421 = vmatprep.subr.mxu0 %v398
  %1422 = vmatpush1.msra.mxu0 %v397
  %1423 = vmatprep.subr.mxu0 %v402
  %1424 = vmatpush1.msra.mxu0 %v401
  %1425 = vmatprep.subr.mxu0 %v406
  %1426 = vmatpush1.msra.mxu0 %v405
  %1427 = vmatprep.subr.mxu0 %v410
  %1428 = vmatpush1.msra.mxu0 %v409
  %1429 = vmatprep.subr.mxu0 %v414
  %1430 = vmatpush1.msra.mxu0 %v413
  %1431 = vmatprep.subr.mxu0 %v418
  %1432 = vmatpush1.msra.mxu0 %v417
  %1433 = vmatprep.subr.mxu0 %v422
  %1434 = vmatpush1.msra.mxu0 %v421
  %1435 = vmatprep.subr.mxu0 %v426
  %1436 = vmatpush1.msra.mxu0 %v425
  %1437 = vmatprep.subr.mxu0 %v430
  %1438 = vmatpush1.msra.mxu0 %v429
  %1439 = vmatprep.subr.mxu0 %v434
  %1440 = vmatpush1.msra.mxu0 %v433
  %1441 = vmatprep.subr.mxu0 %v438
  %1442 = vmatpush1.msra.mxu0 %v437
  %1443 = vmatprep.subr.mxu0 0.0
  %1444 = vmatpush1.msra.mxu0 0.0
  %1445 = vmatprep.subr.mxu0 0.0
  %1446 = vmatpush1.msra.mxu0 0.0
  %1447 = vmatprep.subr.mxu0 0.0
  %1448 = vmatpush1.msra.mxu0 0.0
  %1449 = vmatprep.subr.mxu0 0.0
  %1450 = vmatpush1.msra.mxu0 0.0
  %1451 = vmatprep.subr.mxu0 0.0
  %1452 = vmatpush1.msra.mxu0 0.0
  %1453 = vmatprep.subr.mxu0 0.0
  %1454 = vmatpush1.msra.mxu0 0.0
  %1455 = vmatprep.subr.mxu0 0.0
  %1456 = vmatpush1.msra.mxu0 0.0
  %1457 = vmatprep.subr.mxu0 0.0
  %1458 = vmatpush1.msra.mxu0 0.0
  %1459 = vmatprep.subr.mxu0 0.0
  %1460 = vmatpush1.msra.mxu0 0.0
  %1461 = vmatprep.subr.mxu0 0.0
  %1462 = vmatpush1.msra.mxu0 0.0
  %1463 = vmatprep.subr.mxu0 0.0
  %1464 = vmatpush1.msra.mxu0 0.0
  %1465 = vmatprep.subr.mxu0 0.0
  %1466 = vmatpush1.msra.mxu0 0.0
  %1467 = vmatprep.subr.mxu0 0.0
  %1468 = vmatpush1.msra.mxu0 0.0
  %1469 = vmatprep.subr.mxu0 0.0
  %1470 = vmatpush1.msra.mxu0 0.0
  %1471 = vmatprep.subr.mxu0 0.0
  %1472 = vmatpush1.msra.mxu0 0.0
  %1473 = vmatprep.subr.mxu0 0.0
  %1474 = vmatpush1.msra.mxu0 0.0
  %1475 = vmatprep.mubr.f32.mxu0 0.0
  %1476 = vmatmul.mubr.f32.gmra.mrb[0].mxu0 %v1333
  %v1477 = vpop.f32.mrb[0].mxu0
  %v1478 = vadd.f32 0.0, %v1477
  %v1479 = vpop.f32.mrb[0].mxu0
  %v1480 = vadd.f32 0.0, %v1479
  %1481 = vdwg.mxu0
  %v1482 = vadd.f32 %v1336, %v1407
  %v1483 = vadd.f32 %v1337, %v1409
  %v1484 = vadd.f32 %v1338, %v1478
  %v1485 = vadd.f32 %v1339, %v1480
  %v1486 = vxor.u32 %v1482, 2147483648
  %v1487 = vxor.u32 %v1483, 2147483648
  %v1488 = vxor.u32 %v1484, 2147483648
  %v1489 = vmul.f32 %v1486, 1.442695
  %v1490 = vpow.pop %v1489
  %v1491 = vmul.f32 %v1487, 1.442695
  %v1492 = vpow.pop %v1491
  %v1493 = vmul.f32 %v1488, 1.442695
  %v1494 = vpow.pop %v1493
  %v1495 = vadd.f32 %v1490, 1.0
  %v1496 = vadd.f32 %v1492, 1.0
  %v1497 = vadd.f32 %v1494, 1.0
  %v1498 = vrcp.pop %v1495
  %v1499 = vmul.f32 1.0, %v1498
  %v1500 = vrcp.pop %v1496
  %v1501 = vmul.f32 1.0, %v1500
  %v1502 = vrcp.pop %v1497
  %v1503 = vmul.f32 1.0, %v1502
  %v1504 = vtanh.pop %v1485
  %v1505 = vmul.f32 %v1501, %v1334
  %v1506 = vmul.f32 %v1499, %v1504
  %v1507 = vadd.f32 %v1505, %v1506
  %v1508 = vtanh.pop %v1507
  %v1509 = vmul.f32 %v1503, %v1508
  %1510 = vst [vmem:[#allocation2] sm:$0xff] %v1509
  %1511 = vst [vmem:[#allocation3] sm:$0xff] %v1507
  %v1512 = vld [vmem:[#allocation2] sm:$0xff]
  %v1513 = vld [vmem:[#allocation3] sm:$0xff]
  %s1514 = scalar_lea.vmem [#allocation4], 192
  %v1515 = vld [vmem:[%s1514] sm:$0xff]
  %v1516 = vld [vmem:[%s1514 + $0x8] sm:$0xff]
  %v1517 = vld [vmem:[%s1514 + $0x10] sm:$0xff]
  %v1518 = vld [vmem:[%s1514 + $0x18] sm:$0xff]
  %1519 = vmatprep.subr.mxu0 %v376
  %1520 = vmatpush1.msra.mxu0 %v375
  %1521 = vmatprep.subr.mxu0 %v380
  %1522 = vmatpush1.msra.mxu0 %v379
  %1523 = vmatprep.subr.mxu0 %v384
  %1524 = vmatpush1.msra.mxu0 %v383
  %1525 = vmatprep.subr.mxu0 %v388
  %1526 = vmatpush1.msra.mxu0 %v387
  %1527 = vmatprep.subr.mxu0 %v392
  %1528 = vmatpush1.msra.mxu0 %v391
  %1529 = vmatprep.subr.mxu0 %v396
  %1530 = vmatpush1.msra.mxu0 %v395
  %1531 = vmatprep.subr.mxu0 %v400
  %1532 = vmatpush1.msra.mxu0 %v399
  %1533 = vmatprep.subr.mxu0 %v404
  %1534 = vmatpush1.msra.mxu0 %v403
  %1535 = vmatprep.subr.mxu0 %v408
  %1536 = vmatpush1.msra.mxu0 %v407
  %1537 = vmatprep.subr.mxu0 %v412
  %1538 = vmatpush1.msra.mxu0 %v411
  %1539 = vmatprep.subr.mxu0 %v416
  %1540 = vmatpush1.msra.mxu0 %v415
  %1541 = vmatprep.subr.mxu0 %v420
  %1542 = vmatpush1.msra.mxu0 %v419
  %1543 = vmatprep.subr.mxu0 %v424
  %1544 = vmatpush1.msra.mxu0 %v423
  %1545 = vmatprep.subr.mxu0 %v428
  %1546 = vmatpush1.msra.mxu0 %v427
  %1547 = vmatprep.subr.mxu0 %v432
  %1548 = vmatpush1.msra.mxu0 %v431
  %1549 = vmatprep.subr.mxu0 %v436
  %1550 = vmatpush1.msra.mxu0 %v435
  %1551 = vmatprep.subr.mxu0 0.0
  %1552 = vmatpush1.msra.mxu0 0.0
  %1553 = vmatprep.subr.mxu0 0.0
  %1554 = vmatpush1.msra.mxu0 0.0
  %1555 = vmatprep.subr.mxu0 0.0
  %1556 = vmatpush1.msra.mxu0 0.0
  %1557 = vmatprep.subr.mxu0 0.0
  %1558 = vmatpush1.msra.mxu0 0.0
  %1559 = vmatprep.subr.mxu0 0.0
  %1560 = vmatpush1.msra.mxu0 0.0
  %1561 = vmatprep.subr.mxu0 0.0
  %1562 = vmatpush1.msra.mxu0 0.0
  %1563 = vmatprep.subr.mxu0 0.0
  %1564 = vmatpush1.msra.mxu0 0.0
  %1565 = vmatprep.subr.mxu0 0.0
  %1566 = vmatpush1.msra.mxu0 0.0
  %1567 = vmatprep.subr.mxu0 0.0
  %1568 = vmatpush1.msra.mxu0 0.0
  %1569 = vmatprep.subr.mxu0 0.0
  %1570 = vmatpush1.msra.mxu0 0.0
  %1571 = vmatprep.subr.mxu0 0.0
  %1572 = vmatpush1.msra.mxu0 0.0
  %1573 = vmatprep.subr.mxu0 0.0
  %1574 = vmatpush1.msra.mxu0 0.0
  %1575 = vmatprep.subr.mxu0 0.0
  %1576 = vmatpush1.msra.mxu0 0.0
  %1577 = vmatprep.subr.mxu0 0.0
  %1578 = vmatpush1.msra.mxu0 0.0
  %1579 = vmatprep.subr.mxu0 0.0
  %1580 = vmatpush1.msra.mxu0 0.0
  %1581 = vmatprep.subr.mxu0 0.0
  %1582 = vmatpush1.msra.mxu0 0.0
  %1583 = vmatprep.mubr.f32.mxu0 0.0
  %1584 = vmatmul.mubr.f32.gmra.mrb[0].mxu0 %v1512
  %v1585 = vpop.f32.mrb[0].mxu0
  %v1586 = vadd.f32 0.0, %v1585
  %v1587 = vpop.f32.mrb[0].mxu0
  %v1588 = vadd.f32 0.0, %v1587
  %1589 = vdwg.mxu0
  %1590 = vmatprep.subr.mxu0 %v378
  %1591 = vmatpush1.msra.mxu0 %v377
  %1592 = vmatprep.subr.mxu0 %v382
  %1593 = vmatpush1.msra.mxu0 %v381
  %1594 = vmatprep.subr.mxu0 %v386
  %1595 = vmatpush1.msra.mxu0 %v385
  %1596 = vmatprep.subr.mxu0 %v390
  %1597 = vmatpush1.msra.mxu0 %v389
  %1598 = vmatprep.subr.mxu0 %v394
  %1599 = vmatpush1.msra.mxu0 %v393
  %1600 = vmatprep.subr.mxu0 %v398
  %1601 = vmatpush1.msra.mxu0 %v397
  %1602 = vmatprep.subr.mxu0 %v402
  %1603 = vmatpush1.msra.mxu0 %v401
  %1604 = vmatprep.subr.mxu0 %v406
  %1605 = vmatpush1.msra.mxu0 %v405
  %1606 = vmatprep.subr.mxu0 %v410
  %1607 = vmatpush1.msra.mxu0 %v409
  %1608 = vmatprep.subr.mxu0 %v414
  %1609 = vmatpush1.msra.mxu0 %v413
  %1610 = vmatprep.subr.mxu0 %v418
  %1611 = vmatpush1.msra.mxu0 %v417
  %1612 = vmatprep.subr.mxu0 %v422
  %1613 = vmatpush1.msra.mxu0 %v421
  %1614 = vmatprep.subr.mxu0 %v426
  %1615 = vmatpush1.msra.mxu0 %v425
  %1616 = vmatprep.subr.mxu0 %v430
  %1617 = vmatpush1.msra.mxu0 %v429
  %1618 = vmatprep.subr.mxu0 %v434
  %1619 = vmatpush1.msra.mxu0 %v433
  %1620 = vmatprep.subr.mxu0 %v438
  %1621 = vmatpush1.msra.mxu0 %v437
  %1622 = vmatprep.subr.mxu0 0.0
  %1623 = vmatpush1.msra.mxu0 0.0
  %1624 = vmatprep.subr.mxu0 0.0
  %1625 = vmatpush1.msra.mxu0 0.0
  %1626 = vmatprep.subr.mxu0 0.0
  %1627 = vmatpush1.msra.mxu0 0.0
  %1628 = vmatprep.subr.mxu0 0.0
  %1629 = vmatpush1.msra.mxu0 0.0
  %1630 = vmatprep.subr.mxu0 0.0
  %1631 = vmatpush1.msra.mxu0 0.0
  %1632 = vmatprep.subr.mxu0 0.0
  %1633 = vmatpush1.msra.mxu0 0.0
  %1634 = vmatprep.subr.mxu0 0.0
  %1635 = vmatpush1.msra.mxu0 0.0
  %1636 = vmatprep.subr.mxu0 0.0
  %1637 = vmatpush1.msra.mxu0 0.0
  %1638 = vmatprep.subr.mxu0 0.0
  %1639 = vmatpush1.msra.mxu0 0.0
  %1640 = vmatprep.subr.mxu0 0.0
  %1641 = vmatpush1.msra.mxu0 0.0
  %1642 = vmatprep.subr.mxu0 0.0
  %1643 = vmatpush1.msra.mxu0 0.0
  %1644 = vmatprep.subr.mxu0 0.0
  %1645 = vmatpush1.msra.mxu0 0.0
  %1646 = vmatprep.subr.mxu0 0.0
  %1647 = vmatpush1.msra.mxu0 0.0
  %1648 = vmatprep.subr.mxu0 0.0
  %1649 = vmatpush1.msra.mxu0 0.0
  %1650 = vmatprep.subr.mxu0 0.0
  %1651 = vmatpush1.msra.mxu0 0.0
  %1652 = vmatprep.subr.mxu0 0.0
  %1653 = vmatpush1.msra.mxu0 0.0
  %1654 = vmatprep.mubr.f32.mxu0 0.0
  %1655 = vmatmul.mubr.f32.gmra.mrb[0].mxu0 %v1512
  %v1656 = vpop.f32.mrb[0].mxu0
  %v1657 = vadd.f32 0.0, %v1656
  %v1658 = vpop.f32.mrb[0].mxu0
  %v1659 = vadd.f32 0.0, %v1658
  %1660 = vdwg.mxu0
  %v1661 = vadd.f32 %v1515, %v1586
  %v1662 = vadd.f32 %v1516, %v1588
  %v1663 = vadd.f32 %v1517, %v1657
  %v1664 = vadd.f32 %v1518, %v1659
  %v1665 = vxor.u32 %v1661, 2147483648
  %v1666 = vxor.u32 %v1662, 2147483648
  %v1667 = vxor.u32 %v1663, 2147483648
  %v1668 = vmul.f32 %v1665, 1.442695
  %v1669 = vpow.pop %v1668
  %v1670 = vmul.f32 %v1666, 1.442695
  %v1671 = vpow.pop %v1670
  %v1672 = vmul.f32 %v1667, 1.442695
  %v1673 = vpow.pop %v1672
  %v1674 = vadd.f32 %v1669, 1.0
  %v1675 = vadd.f32 %v1671, 1.0
  %v1676 = vadd.f32 %v1673, 1.0
  %v1677 = vrcp.pop %v1674
  %v1678 = vmul.f32 1.0, %v1677
  %v1679 = vrcp.pop %v1675
  %v1680 = vmul.f32 1.0, %v1679
  %v1681 = vrcp.pop %v1676
  %v1682 = vmul.f32 1.0, %v1681
  %v1683 = vtanh.pop %v1664
  %v1684 = vmul.f32 %v1680, %v1513
  %v1685 = vmul.f32 %v1678, %v1683
  %v1686 = vadd.f32 %v1684, %v1685
  %v1687 = vtanh.pop %v1686
  %v1688 = vmul.f32 %v1682, %v1687
  %1689 = vst [vmem:[#allocation2] sm:$0xff] %v1688
  %1690 = vst [vmem:[#allocation3] sm:$0xff] %v1686
  %v1691 = vld [vmem:[#allocation2] sm:$0xff]
  %v1692 = vld [vmem:[#allocation3] sm:$0xff]
  %s1693 = scalar_lea.vmem [#allocation4], 224
  %v1694 = vld [vmem:[%s1693] sm:$0xff]
  %v1695 = vld [vmem:[%s1693 + $0x8] sm:$0xff]
  %v1696 = vld [vmem:[%s1693 + $0x10] sm:$0xff]
  %v1697 = vld [vmem:[%s1693 + $0x18] sm:$0xff]
  %1698 = vmatprep.subr.mxu0 %v376
  %1699 = vmatpush1.msra.mxu0 %v375
  %1700 = vmatprep.subr.mxu0 %v380
  %1701 = vmatpush1.msra.mxu0 %v379
  %1702 = vmatprep.subr.mxu0 %v384
  %1703 = vmatpush1.msra.mxu0 %v383
  %1704 = vmatprep.subr.mxu0 %v388
  %1705 = vmatpush1.msra.mxu0 %v387
  %1706 = vmatprep.subr.mxu0 %v392
  %1707 = vmatpush1.msra.mxu0 %v391
  %1708 = vmatprep.subr.mxu0 %v396
  %1709 = vmatpush1.msra.mxu0 %v395
  %1710 = vmatprep.subr.mxu0 %v400
  %1711 = vmatpush1.msra.mxu0 %v399
  %1712 = vmatprep.subr.mxu0 %v404
  %1713 = vmatpush1.msra.mxu0 %v403
  %1714 = vmatprep.subr.mxu0 %v408
  %1715 = vmatpush1.msra.mxu0 %v407
  %1716 = vmatprep.subr.mxu0 %v412
  %1717 = vmatpush1.msra.mxu0 %v411
  %1718 = vmatprep.subr.mxu0 %v416
  %1719 = vmatpush1.msra.mxu0 %v415
  %1720 = vmatprep.subr.mxu0 %v420
  %1721 = vmatpush1.msra.mxu0 %v419
  %1722 = vmatprep.subr.mxu0 %v424
  %1723 = vmatpush1.msra.mxu0 %v423
  %1724 = vmatprep.subr.mxu0 %v428
  %1725 = vmatpush1.msra.mxu0 %v427
  %1726 = vmatprep.subr.mxu0 %v432
  %1727 = vmatpush1.msra.mxu0 %v431
  %1728 = vmatprep.subr.mxu0 %v436
  %1729 = vmatpush1.msra.mxu0 %v435
  %1730 = vmatprep.subr.mxu0 0.0
  %1731 = vmatpush1.msra.mxu0 0.0
  %1732 = vmatprep.subr.mxu0 0.0
  %1733 = vmatpush1.msra.mxu0 0.0
  %1734 = vmatprep.subr.mxu0 0.0
  %1735 = vmatpush1.msra.mxu0 0.0
  %1736 = vmatprep.subr.mxu0 0.0
  %1737 = vmatpush1.msra.mxu0 0.0
  %1738 = vmatprep.subr.mxu0 0.0
  %1739 = vmatpush1.msra.mxu0 0.0
  %1740 = vmatprep.subr.mxu0 0.0
  %1741 = vmatpush1.msra.mxu0 0.0
  %1742 = vmatprep.subr.mxu0 0.0
  %1743 = vmatpush1.msra.mxu0 0.0
  %1744 = vmatprep.subr.mxu0 0.0
  %1745 = vmatpush1.msra.mxu0 0.0
  %1746 = vmatprep.subr.mxu0 0.0
  %1747 = vmatpush1.msra.mxu0 0.0
  %1748 = vmatprep.subr.mxu0 0.0
  %1749 = vmatpush1.msra.mxu0 0.0
  %1750 = vmatprep.subr.mxu0 0.0
  %1751 = vmatpush1.msra.mxu0 0.0
  %1752 = vmatprep.subr.mxu0 0.0
  %1753 = vmatpush1.msra.mxu0 0.0
  %1754 = vmatprep.subr.mxu0 0.0
  %1755 = vmatpush1.msra.mxu0 0.0
  %1756 = vmatprep.subr.mxu0 0.0
  %1757 = vmatpush1.msra.mxu0 0.0
  %1758 = vmatprep.subr.mxu0 0.0
  %1759 = vmatpush1.msra.mxu0 0.0
  %1760 = vmatprep.subr.mxu0 0.0
  %1761 = vmatpush1.msra.mxu0 0.0
  %1762 = vmatprep.mubr.f32.mxu0 0.0
  %1763 = vmatmul.mubr.f32.gmra.mrb[0].mxu0 %v1691
  %v1764 = vpop.f32.mrb[0].mxu0
  %v1765 = vadd.f32 0.0, %v1764
  %v1766 = vpop.f32.mrb[0].mxu0
  %v1767 = vadd.f32 0.0, %v1766
  %1768 = vdwg.mxu0
  %1769 = vmatprep.subr.mxu0 %v378
  %1770 = vmatpush1.msra.mxu0 %v377
  %1771 = vmatprep.subr.mxu0 %v382
  %1772 = vmatpush1.msra.mxu0 %v381
  %1773 = vmatprep.subr.mxu0 %v386
  %1774 = vmatpush1.msra.mxu0 %v385
  %1775 = vmatprep.subr.mxu0 %v390
  %1776 = vmatpush1.msra.mxu0 %v389
  %1777 = vmatprep.subr.mxu0 %v394
  %1778 = vmatpush1.msra.mxu0 %v393
  %1779 = vmatprep.subr.mxu0 %v398
  %1780 = vmatpush1.msra.mxu0 %v397
  %1781 = vmatprep.subr.mxu0 %v402
  %1782 = vmatpush1.msra.mxu0 %v401
  %1783 = vmatprep.subr.mxu0 %v406
  %1784 = vmatpush1.msra.mxu0 %v405
  %1785 = vmatprep.subr.mxu0 %v410
  %1786 = vmatpush1.msra.mxu0 %v409
  %1787 = vmatprep.subr.mxu0 %v414
  %1788 = vmatpush1.msra.mxu0 %v413
  %1789 = vmatprep.subr.mxu0 %v418
  %1790 = vmatpush1.msra.mxu0 %v417
  %1791 = vmatprep.subr.mxu0 %v422
  %1792 = vmatpush1.msra.mxu0 %v421
  %1793 = vmatprep.subr.mxu0 %v426
  %1794 = vmatpush1.msra.mxu0 %v425
  %1795 = vmatprep.subr.mxu0 %v430
  %1796 = vmatpush1.msra.mxu0 %v429
  %1797 = vmatprep.subr.mxu0 %v434
  %1798 = vmatpush1.msra.mxu0 %v433
  %1799 = vmatprep.subr.mxu0 %v438
  %1800 = vmatpush1.msra.mxu0 %v437
  %1801 = vmatprep.subr.mxu0 0.0
  %1802 = vmatpush1.msra.mxu0 0.0
  %1803 = vmatprep.subr.mxu0 0.0
  %1804 = vmatpush1.msra.mxu0 0.0
  %1805 = vmatprep.subr.mxu0 0.0
  %1806 = vmatpush1.msra.mxu0 0.0
  %1807 = vmatprep.subr.mxu0 0.0
  %1808 = vmatpush1.msra.mxu0 0.0
  %1809 = vmatprep.subr.mxu0 0.0
  %1810 = vmatpush1.msra.mxu0 0.0
  %1811 = vmatprep.subr.mxu0 0.0
  %1812 = vmatpush1.msra.mxu0 0.0
  %1813 = vmatprep.subr.mxu0 0.0
  %1814 = vmatpush1.msra.mxu0 0.0
  %1815 = vmatprep.subr.mxu0 0.0
  %1816 = vmatpush1.msra.mxu0 0.0
  %1817 = vmatprep.subr.mxu0 0.0
  %1818 = vmatpush1.msra.mxu0 0.0
  %1819 = vmatprep.subr.mxu0 0.0
  %1820 = vmatpush1.msra.mxu0 0.0
  %1821 = vmatprep.subr.mxu0 0.0
  %1822 = vmatpush1.msra.mxu0 0.0
  %1823 = vmatprep.subr.mxu0 0.0
  %1824 = vmatpush1.msra.mxu0 0.0
  %1825 = vmatprep.subr.mxu0 0.0
  %1826 = vmatpush1.msra.mxu0 0.0
  %1827 = vmatprep.subr.mxu0 0.0
  %1828 = vmatpush1.msra.mxu0 0.0
  %1829 = vmatprep.subr.mxu0 0.0
  %1830 = vmatpush1.msra.mxu0 0.0
  %1831 = vmatprep.subr.mxu0 0.0
  %1832 = vmatpush1.msra.mxu0 0.0
  %1833 = vmatprep.mubr.f32.mxu0 0.0
  %1834 = vmatmul.mubr.f32.gmra.mrb[0].mxu0 %v1691
  %v1835 = vpop.f32.mrb[0].mxu0
  %v1836 = vadd.f32 0.0, %v1835
  %v1837 = vpop.f32.mrb[0].mxu0
  %v1838 = vadd.f32 0.0, %v1837
  %1839 = vdwg.mxu0
  %v1840 = vadd.f32 %v1694, %v1765
  %v1841 = vadd.f32 %v1695, %v1767
  %v1842 = vadd.f32 %v1696, %v1836
  %v1843 = vadd.f32 %v1697, %v1838
  %v1844 = vxor.u32 %v1840, 2147483648
  %v1845 = vxor.u32 %v1841, 2147483648
  %v1846 = vxor.u32 %v1842, 2147483648
  %v1847 = vmul.f32 %v1844, 1.442695
  %v1848 = vpow.pop %v1847
  %v1849 = vmul.f32 %v1845, 1.442695
  %v1850 = vpow.pop %v1849
  %v1851 = vmul.f32 %v1846, 1.442695
  %v1852 = vpow.pop %v1851
  %v1853 = vadd.f32 %v1848, 1.0
  %v1854 = vadd.f32 %v1850, 1.0
  %v1855 = vadd.f32 %v1852, 1.0
  %v1856 = vrcp.pop %v1853
  %v1857 = vmul.f32 1.0, %v1856
  %v1858 = vrcp.pop %v1854
  %v1859 = vmul.f32 1.0, %v1858
  %v1860 = vrcp.pop %v1855
  %v1861 = vmul.f32 1.0, %v1860
  %v1862 = vtanh.pop %v1843
  %v1863 = vmul.f32 %v1859, %v1692
  %v1864 = vmul.f32 %v1857, %v1862
  %v1865 = vadd.f32 %v1863, %v1864
  %v1866 = vtanh.pop %v1865
  %v1867 = vmul.f32 %v1861, %v1866
  %1868 = vst [vmem:[#allocation2] sm:$0xff] %v1867
  %1869 = vst [vmem:[#allocation3] sm:$0xff] %v1865
  // Predicated region
  $region22: #{encoder_forward.3} parent=0 // pred_check
    %p1870 = pneg %p17
  $region23: #{encoder_forward.3} parent=0 // pred_check_branch
    %1872 = sbr.rel (%p1870) target = $region25
  $region24: #{encoder_forward.3} parent=0 // pred_region
    %v1873 = vld [vmem:[#allocation2] sm:$0xff]
    %v1874 = vmax.f32 %v1873, 0.0
    %1875 = vst [vmem:[%s4] sm:$0xff] %v1874
  $region25: #{encoder_forward.3} parent=0 // pred_fallthru
    _
  // Predicated region
  $region26: #{encoder_forward.3} parent=0 // pred_check
    _
  $region27: #{encoder_forward.3} parent=0 // pred_check_branch
    %1877 = sbr.rel (0) target = $region29
  $region28: #{encoder_forward.3} parent=0 // pred_region
    _
  $region29: #{encoder_forward.3} parent=0 // pred_fallthru
    _
  // Predicated region
  $region30: #{encoder_forward.3} parent=0 // pred_check
    _
  $region31: #{encoder_forward.3} parent=0 // pred_check_branch
    %1879 = sbr.rel (0) target = $region33
  $region32: #{encoder_forward.3} parent=0 // pred_region
    _
  $region33: #{encoder_forward.3} parent=0 // pred_fallthru
    _

</llo_original>
